<compile_context>
chip_gen: v5e
topology: v5e:2x2
jax: 0.10.0
libtpu: 0.0.40
codegen_flags: <defaults>
</compile_context>

<pallas_src>
import functools
from typing import NamedTuple

import jax
import jax.numpy as jnp
import numpy as np
from jax.experimental import pallas as pl
from jax.experimental.pallas import tpu as pltpu

LANE = 128
CHUNK_TARGET = 128          # ~flat rows per in-kernel M-chunk (<= ~16 f32 vregs)


def _round_up(x, m):
    return (x + m - 1) // m * m


@functools.lru_cache(maxsize=None)
def _vmem_capacity_bytes():
    try:
        info = pltpu.get_tpu_info()
        cap = getattr(info, "vmem_capacity_bytes", None)
        if cap:
            return int(cap)
    except Exception:
        pass
    return 64 * 1024 * 1024          # conservative fallback (v7x per-TC VMEM)


class _Plan(NamedTuple):
    N: int
    Cin: int
    Cout: int
    H: int
    W: int
    Cip: int
    Cop: int
    Wpad: int
    TH: int
    NB: int
    CH: int
    n1: int
    n2: int
    M1: int
    M2: int
    Rx: int
    Lx: int
    Rm: int
    Lmc: int
    vmem_limit: int


def _band_sizes(W, TH):
    """Static flat-slab sizes for one (TH output rows) band."""
    Wpad = _round_up(W + 3, 16)               # >= W+3 keeps tap wrap in masked cols;
    ch_rows = max(1, CHUNK_TARGET // Wpad)    # multiple of 16 keeps bf16 slices aligned
    CH = ch_rows * Wpad                       # flat rows per chunk
    n1 = -(-(TH + 2) // ch_rows)              # conv1 chunks (mid rows: TH + 2)
    n2 = -(-TH // ch_rows)                    # conv2 chunks (out rows: TH)
    M1 = n1 * CH                              # conv1 (mid) coverage, flat rows
    M2 = n2 * CH                              # conv2 (out) coverage, flat rows
    Rx = M1 + 2 * Wpad                        # rows of the input cat slab
    Lx = Rx + Wpad                            # input band rows fetched from HBM
    Rm = M2 + 2 * Wpad                        # rows of midcat blocks 1/2 to build
    Lmc = max(M1, Rm) + 16                    # allocated midcat rows (read margin)
    return Wpad, CH, n1, n2, M1, M2, Rx, Lx, Rm, Lmc


def _band_vmem_bytes(Cip, Cop, sizes):
    Wpad, CH, n1, n2, M1, M2, Rx, Lx, Rm, Lmc = sizes
    b = 2 * Lx * Cip * 2                      # double-buffered bf16 input band
    b += 2 * M2 * Cop * 2                     # double-buffered bf16 output band
    b += 2 * M1 * 4                           # validity mask (f32)
    b += 2 * (9 * Cip * Cop + 9 * Cop * Cop) * 2 + 2 * 2 * Cop * 4   # weights/shifts
    b += Rx * 3 * Cip * 2 + Lmc * 3 * Cop * 2  # cat scratch slabs
    return b + (1 << 20)                      # slack for compiler scratch


def _plan(x_shape, cout):
    N, Cin, H, W = x_shape
    Cip = _round_up(max(Cin, 1), LANE)
    Cop = _round_up(max(cout, 1), LANE)
    cap = _vmem_capacity_bytes()
    budget = cap // 2                         # headroom, esp. for v7x's 64 MiB/TC

    cands = [t for t in range(H, 0, -1) if H % t == 0]   # prefer NB == 1
    chosen = None
    for TH in cands:
        sizes = _band_sizes(W, TH)
        if _band_vmem_bytes(Cip, Cop, sizes) <= budget:
            chosen = (TH, sizes)
            break
    if chosen is None:                        # TODO(synk): add W tiling instead
        TH = cands[-1]
        chosen = (TH, _band_sizes(W, TH))
    TH, sizes = chosen
    Wpad, CH, n1, n2, M1, M2, Rx, Lx, Rm, Lmc = sizes
    NB = H // TH
    need = _band_vmem_bytes(Cip, Cop, sizes)
    vmem_limit = max(32 << 20, min(int(cap * 0.7), int(need * 1.5)))
    return _Plan(N, Cin, cout, H, W, Cip, Cop, Wpad, TH, NB, CH, n1, n2,
                 M1, M2, Rx, Lx, Rm, Lmc, int(vmem_limit))


def _successive_conv_kernel(xb_ref, mask_ref, w1_ref, sh1_ref, w2_ref, sh2_ref,
                            o_ref, xcat_ref, midcat_ref,
                            *, Wpad, CH, n1, n2, Rx, Rm):
    """One (batch, row-band) tile.

    xb_ref    : (Lx, Cip)       bf16 flattened (rows*Wpad, Cip) padded input band
    mask_ref  : (M1, 1)         f32  conv1-output validity mask (= conv2 zero pad)
    w1_ref    : (3, 3*Cip, Cop) bf16 conv1 weights, dx taps fused along K, BN1 folded
    sh1_ref   : (1, Cop)        f32  folded BN1 shift
    w2_ref    : (3, 3*Cop, Cop) bf16 conv2 weights, dx taps fused along K, BN2 folded
    sh2_ref   : (1, Cop)        f32  folded BN2 shift
    o_ref     : (M2, Cop)       bf16 flattened output band (garbage cols dropped later)
    xcat_ref  : (Rx, 3*Cip)     bf16 scratch: input with dx=0,1,2 shifts along lanes
    midcat_ref: (Lmc, 3*Cop)    bf16 scratch: conv1 activations, same expansion
    """
    Cip = xb_ref.shape[-1]
    Cop = o_ref.shape[-1]

    # ---- fuse the three dx taps into K: xcat[q] = (x[q], x[q+1], x[q+2]) --------
    # (the +1 / +2 shifted copies are the only misaligned accesses in the kernel)
    xcat_ref[:, 0:Cip] = xb_ref[0:Rx, :]
    xcat_ref[:, Cip:2 * Cip] = xb_ref[1:Rx + 1, :]
    xcat_ref[:, 2 * Cip:3 * Cip] = xb_ref[2:Rx + 2, :]

    # ---- conv1 + BN1 shift + ReLU + validity mask, in M-chunks -----------------
    def conv1_chunk(i, carry):
        c0 = pl.multiple_of(i * CH, CH)
        acc = jnp.dot(xcat_ref[pl.ds(c0, CH), :], w1_ref[0],
                      preferred_element_type=jnp.float32)
        for dy in (1, 2):                       # dy offsets are multiples of Wpad
            acc = acc + jnp.dot(xcat_ref[pl.ds(c0 + dy * Wpad, CH), :], w1_ref[dy],
                                preferred_element_type=jnp.float32)
        h = jnp.maximum(acc + sh1_ref[...], 0.0) * mask_ref[pl.ds(c0, CH), :]
        midcat_ref[pl.ds(c0, CH), 0:Cop] = h.astype(midcat_ref.dtype)
        return carry

    jax.lax.fori_loop(0, n1, conv1_chunk, 0)

    # ---- expand conv1 activations the same way: midcat[q] = (m[q], m[q+1], m[q+2])
    midcat_ref[0:Rm, Cop:2 * Cop] = midcat_ref[1:Rm + 1, 0:Cop]
    midcat_ref[0:Rm, 2 * Cop:3 * Cop] = midcat_ref[2:Rm + 2, 0:Cop]

    # ---- conv2 + BN2 shift + ReLU, in M-chunks, lane-dense bf16 stores ----------
    def conv2_chunk(i, carry):
        c0 = pl.multiple_of(i * CH, CH)
        acc = jnp.dot(midcat_ref[pl.ds(c0, CH), :], w2_ref[0],
                      preferred_element_type=jnp.float32)
        for dy in (1, 2):
            acc = acc + jnp.dot(midcat_ref[pl.ds(c0 + dy * Wpad, CH), :], w2_ref[dy],
                                preferred_element_type=jnp.float32)
        o_ref[pl.ds(c0, CH), :] = jnp.maximum(acc + sh2_ref[...], 0.0).astype(o_ref.dtype)
        return carry

    jax.lax.fori_loop(0, n2, conv2_chunk, 0)


def _fold_bn(gamma, beta, mean, var, eps=1e-5):
    scale = gamma / jnp.sqrt(var + eps)
    shift = beta - mean * scale
    return scale, shift


@functools.partial(jax.jit, static_argnums=(0,))
def _successive_conv_impl(p, x_nchw, w1_oihw, g1, b1, m1, v1,
                          w2_oihw, g2, b2, m2, v2):
    N, Cin, Cout, H, W = p.N, p.Cin, p.Cout, p.H, p.W
    Cip, Cop, Wpad, TH, NB = p.Cip, p.Cop, p.Wpad, p.TH, p.NB

    # ---- fold BN scale into the conv weights; only a per-channel shift remains --
    s1, sh1 = _fold_bn(g1, b1, m1, v1)
    s2, sh2 = _fold_bn(g2, b2, m2, v2)
    w1 = jnp.transpose(w1_oihw, (2, 3, 1, 0)) * s1            # (3, 3, Cin, Cout)
    w2 = jnp.transpose(w2_oihw, (2, 3, 1, 0)) * s2            # (3, 3, Cout, Cout)
    w1 = jnp.pad(w1, ((0, 0), (0, 0), (0, Cip - Cin), (0, Cop - Cout)))
    w2 = jnp.pad(w2, ((0, 0), (0, 0), (0, Cop - Cout), (0, Cop - Cout)))
    # dx taps fused along K: (3, 3*C, Cop) with lanes ordered (dx, channel).
    w1 = w1.reshape(3, 3 * Cip, Cop).astype(jnp.bfloat16)
    w2 = w2.reshape(3, 3 * Cop, Cop).astype(jnp.bfloat16)
    sh1 = jnp.pad(sh1, (0, Cop - Cout)).reshape(1, Cop).astype(jnp.float32)
    sh2 = jnp.pad(sh2, (0, Cop - Cout)).reshape(1, Cop).astype(jnp.float32)

    # ---- single padded NHWC slab in HBM (no per-band copies / stacking) ---------
    lx_rows = p.Lx // Wpad
    total_rows = (NB - 1) * TH + lx_rows
    bot = total_rows - 2 - H
    x = jnp.transpose(x_nchw, (0, 2, 3, 1)).astype(jnp.bfloat16)
    x = jnp.pad(x, ((0, 0), (2, bot), (2, Wpad - W - 2), (0, Cip - Cin)))
    x = x.reshape(N, total_rows * Wpad, Cip)

    # ---- precomputed conv1-output validity mask (acts as conv2's zero padding) --
    pos = np.arange(p.M1)
    row, col = pos // Wpad, pos % Wpad
    mask = np.empty((NB, p.M1, 1), np.float32)
    for r in range(NB):
        gy = r * TH + row - 1
        gx = col - 1
        mask[r, :, 0] = (gy >= 0) & (gy < H) & (gx >= 0) & (gx < W)
    mask = jnp.asarray(mask)

    kernel = functools.partial(_successive_conv_kernel, Wpad=Wpad, CH=p.CH,
                               n1=p.n1, n2=p.n2, Rx=p.Rx, Rm=p.Rm)

    if NB == 1:
        x_spec = pl.BlockSpec((None, p.Lx, Cip), lambda n, r: (n, 0, 0))
    else:
        # Overlapping row-band windows fetched directly from the single HBM slab
        # (element offset on the flattened-rows axis; offsets are multiples of 16).
        x_spec = pl.BlockSpec((None, pl.Element(p.Lx), Cip),
                              lambda n, r: (n, r * TH * Wpad, 0))

    flops = 2 * N * NB * 9 * (p.M1 * Cip + p.M2 * Cop) * Cop
    bytes_accessed = int(x.size * 2 + mask.size * 4 + w1.size * 2 + w2.size * 2
                         + (sh1.size + sh2.size) * 4 + N * NB * p.M2 * Cop * 2)

    out = pl.pallas_call(
        kernel,
        out_shape=jax.ShapeDtypeStruct((N, NB, p.M2, Cop), jnp.bfloat16),
        grid_spec=pltpu.PrefetchScalarGridSpec(
            num_scalar_prefetch=0,
            grid=(N, NB),
            in_specs=[
                x_spec,
                pl.BlockSpec((None, p.M1, 1), lambda n, r: (r, 0, 0)),
                # Weights / shifts: constant index_map, fetched once per call.
                # (pipeline_mode=pl.Buffered(1) would free their second VMEM
                #  buffer; left at the default to stay maximally portable.)
                pl.BlockSpec((3, 3 * Cip, Cop), lambda n, r: (0, 0, 0)),
                pl.BlockSpec((1, Cop), lambda n, r: (0, 0)),
                pl.BlockSpec((3, 3 * Cop, Cop), lambda n, r: (0, 0, 0)),
                pl.BlockSpec((1, Cop), lambda n, r: (0, 0)),
            ],
            out_specs=pl.BlockSpec((None, None, p.M2, Cop),
                                   lambda n, r: (n, r, 0, 0)),
            scratch_shapes=[
                pltpu.VMEM((p.Rx, 3 * Cip), jnp.bfloat16),
                pltpu.VMEM((p.Lmc, 3 * Cop), jnp.bfloat16),
            ],
        ),
        compiler_params=pltpu.CompilerParams(
            dimension_semantics=("parallel", "parallel"),
            vmem_limit_bytes=p.vmem_limit,
        ),
        cost_estimate=pl.CostEstimate(flops=flops, transcendentals=0,
                                      bytes_accessed=bytes_accessed),
    )(x, mask, w1, sh1, w2, sh2)

    # Drop chunk-overflow rows, border columns and channel padding; back to NCHW.
    out = out.reshape(N, NB, p.M2 // Wpad, Wpad, Cop)[:, :, :TH, :W, :Cout]
    out = out.reshape(N, H, W, Cout).astype(jnp.float32)
    # TODO(synk): emit NHWC/bf16 directly if the consumer can take it; this final
    #             transpose is pure layout plumbing for NCHW parity.
    return jnp.transpose(out, (0, 3, 1, 2))


def successive_conv(x, w1, g1, b1, m1, v1, w2, g2, b2, m2, v2):
    plan = _plan(tuple(x.shape), int(w1.shape[0]))
    return _successive_conv_impl(plan, x, w1, g1, b1, m1, v1, w2, g2, b2, m2, v2)


def reference(x, w1, g1, b1, m1, v1, w2, g2, b2, m2, v2, eps=1e-5):
    def conv(x, w):
        return jax.lax.conv_general_dilated(
            x, w, window_strides=(1, 1), padding=((1, 1), (1, 1)),
            dimension_numbers=("NCHW", "OIHW", "NCHW"))

    def bn(x, g, b, m, v):
        g = g[None, :, None, None]
        b = b[None, :, None, None]
        m = m[None, :, None, None]
        v = v[None, :, None, None]
        return (x - m) / jnp.sqrt(v + eps) * g + b

    h = jnp.maximum(bn(conv(x, w1), g1, b1, m1, v1), 0.0)
    return jnp.maximum(bn(conv(h, w2), g2, b2, m2, v2), 0.0)


if __name__ == "__main__":
    N, Cin, Cout, H, W = 2, 4, 8, 16, 16
    key = jax.random.PRNGKey(0)
    ks = jax.random.split(key, 11)

    x = jax.random.normal(ks[0], (N, Cin, H, W), jnp.float32)

    # Conv weights in PyTorch OIHW layout, bias=False.
    w1 = jax.random.normal(ks[1], (Cout, Cin, 3, 3), jnp.float32) * 0.2
    w2 = jax.random.normal(ks[2], (Cout, Cout, 3, 3), jnp.float32) * 0.2

    # BatchNorm2d params (affine + running stats), deterministic.
    g1 = jax.random.uniform(ks[3], (Cout,), jnp.float32, 0.5, 1.5)
    b1 = jax.random.normal(ks[4], (Cout,), jnp.float32) * 0.1
    m1 = jax.random.normal(ks[5], (Cout,), jnp.float32) * 0.1
    v1 = jax.random.uniform(ks[6], (Cout,), jnp.float32, 0.5, 1.5)
    g2 = jax.random.uniform(ks[7], (Cout,), jnp.float32, 0.5, 1.5)
    b2 = jax.random.normal(ks[8], (Cout,), jnp.float32) * 0.1
    m2 = jax.random.normal(ks[9], (Cout,), jnp.float32) * 0.1
    v2 = jax.random.uniform(ks[10], (Cout,), jnp.float32, 0.5, 1.5)

    out = jax.block_until_ready(
        successive_conv(x, w1, g1, b1, m1, v1, w2, g2, b2, m2, v2))
    ref = jax.block_until_ready(
        reference(x, w1, g1, b1, m1, v1, w2, g2, b2, m2, v2))

    assert out.shape == (N, Cout, H, W), out.shape
    # Matmul inputs and the stored output band are bf16 (f32 accumulation), so
    # compare at bf16-appropriate tolerances against the f32 reference.
    np.testing.assert_allclose(np.asarray(out), np.asarray(ref),
                               rtol=2e-2, atol=5e-2)
    print("KERNEL_OK")
</pallas_src>

<mosaic_0001>
module attributes {stable_mosaic.version = 11 : i64} {
  func.func @_successive_conv_kernel(%arg0: i32, %arg1: i32, %arg2: memref<1x736x128xbf16, #tpu.memory_space<vmem>>, %arg3: memref<1x640x1xf32, #tpu.memory_space<vmem>>, %arg4: memref<3x384x128xbf16, #tpu.memory_space<vmem>>, %arg5: memref<1x128xf32, #tpu.memory_space<vmem>>, %arg6: memref<3x384x128xbf16, #tpu.memory_space<vmem>>, %arg7: memref<1x128xf32, #tpu.memory_space<vmem>>, %arg8: memref<1x1x512x128xbf16, #tpu.memory_space<vmem>>, %arg9: memref<704x384xbf16, #tpu.memory_space<vmem>>, %arg10: memref<656x384xbf16, #tpu.memory_space<vmem>>) attributes {dimension_semantics = [#tpu.dimension_semantics<parallel>, #tpu.dimension_semantics<parallel>], iteration_bounds = array<i64: 2, 1>, scalar_prefetch = 0 : i64, scratch_operands = 2 : i64, tpu.core_type = #tpu.core_type<tc>, window_params = [{transform_indices = @transform_0, window_bounds = array<i64: 1, 736, 128>}, {transform_indices = @transform_1, window_bounds = array<i64: 1, 640, 1>}, {pipeline_mode = #tpu.pipeline_mode<synchronous>, transform_indices = @transform_2, window_bounds = array<i64: 3, 384, 128>}, {pipeline_mode = #tpu.pipeline_mode<synchronous>, transform_indices = @transform_3, window_bounds = array<i64: 1, 128>}, {pipeline_mode = #tpu.pipeline_mode<synchronous>, transform_indices = @transform_4, window_bounds = array<i64: 3, 384, 128>}, {pipeline_mode = #tpu.pipeline_mode<synchronous>, transform_indices = @transform_5, window_bounds = array<i64: 1, 128>}, {transform_indices = @transform_6, window_bounds = array<i64: 1, 1, 512, 128>}]} {
    %c0 = arith.constant 0 : index
    %c0_0 = arith.constant 0 : index
    %c0_1 = arith.constant 0 : index
    %0 = vector.load %arg2[%c0, %c0_0, %c0_1] : memref<1x736x128xbf16, #tpu.memory_space<vmem>>, vector<1x704x128xbf16>
    %1 = vector.shape_cast %0 : vector<1x704x128xbf16> to vector<704x128xbf16>
    %c0_2 = arith.constant 0 : index
    %c0_3 = arith.constant 0 : index
    %2 = vector.load %arg9[%c0_2, %c0_3] : memref<704x384xbf16, #tpu.memory_space<vmem>>, vector<704x128xbf16>
    tpu.vector_store %arg9[%c0_2, %c0_3], %1 {strides = array<i32>} : memref<704x384xbf16, #tpu.memory_space<vmem>>, vector<704x128xbf16>,
    %c0_4 = arith.constant 0 : index
    %c1 = arith.constant 1 : index
    %c0_5 = arith.constant 0 : index
    %3 = vector.load %arg2[%c0_4, %c1, %c0_5] : memref<1x736x128xbf16, #tpu.memory_space<vmem>>, vector<1x704x128xbf16>
    %4 = vector.shape_cast %3 : vector<1x704x128xbf16> to vector<704x128xbf16>
    %c0_6 = arith.constant 0 : index
    %c128 = arith.constant 128 : index
    %5 = vector.load %arg9[%c0_6, %c128] : memref<704x384xbf16, #tpu.memory_space<vmem>>, vector<704x128xbf16>
    tpu.vector_store %arg9[%c0_6, %c128], %4 {strides = array<i32>} : memref<704x384xbf16, #tpu.memory_space<vmem>>, vector<704x128xbf16>,
    %c0_7 = arith.constant 0 : index
    %c2 = arith.constant 2 : index
    %c0_8 = arith.constant 0 : index
    %6 = vector.load %arg2[%c0_7, %c2, %c0_8] : memref<1x736x128xbf16, #tpu.memory_space<vmem>>, vector<1x704x128xbf16>
    %7 = vector.shape_cast %6 : vector<1x704x128xbf16> to vector<704x128xbf16>
    %c0_9 = arith.constant 0 : index
    %c256 = arith.constant 256 : index
    %8 = vector.load %arg9[%c0_9, %c256] : memref<704x384xbf16, #tpu.memory_space<vmem>>, vector<704x128xbf16>
    tpu.vector_store %arg9[%c0_9, %c256], %7 {strides = array<i32>} : memref<704x384xbf16, #tpu.memory_space<vmem>>, vector<704x128xbf16>,
    %c0_i32 = arith.constant 0 : i32
    %c5_i32 = arith.constant 5 : i32
    %9 = arith.addi %c0_i32, %c5_i32 : i32
    %c1_i32 = arith.constant 1 : i32
    scf.for %arg11 = %c0_i32 to %9 step %c1_i32  : i32 {
      %c128_i32 = arith.constant 128 : i32
      %15 = arith.muli %arg11, %c128_i32 : i32
      %16 = tpu.assume_multiple %15, 128 : i32
      %17 = arith.index_cast %16 : i32 to index
      %c0_22 = arith.constant 0 : index
      %18 = vector.load %arg9[%17, %c0_22] : memref<704x384xbf16, #tpu.memory_space<vmem>>, vector<128x384xbf16>
      %c0_23 = arith.constant 0 : index
      %c0_24 = arith.constant 0 : index
      %c0_25 = arith.constant 0 : index
      %19 = vector.load %arg4[%c0_23, %c0_24, %c0_25] : memref<3x384x128xbf16, #tpu.memory_space<vmem>>, vector<1x384x128xbf16>
      %20 = vector.shape_cast %19 : vector<1x384x128xbf16> to vector<384x128xbf16>
      %cst = arith.constant dense<0.000000e+00> : vector<128x128xf32>
      %21 = tpu.matmul %18, %20, %cst {dimension_numbers = #tpu.dot_dimension_numbers<[1], [0], [0], [1], [0, 0, 1, 1], [], []>} : vector<128x384xbf16>, vector<384x128xbf16>, vector<128x128xf32> -> vector<128x128xf32>
      %c32_i32 = arith.constant 32 : i32
      %22 = arith.addi %16, %c32_i32 : i32
      %23 = arith.index_cast %22 : i32 to index
      %c0_26 = arith.constant 0 : index
      %24 = vector.load %arg9[%23, %c0_26] : memref<704x384xbf16, #tpu.memory_space<vmem>>, vector<128x384xbf16>
      %c1_27 = arith.constant 1 : index
      %c0_28 = arith.constant 0 : index
      %c0_29 = arith.constant 0 : index
      %25 = vector.load %arg4[%c1_27, %c0_28, %c0_29] : memref<3x384x128xbf16, #tpu.memory_space<vmem>>, vector<1x384x128xbf16>
      %26 = vector.shape_cast %25 : vector<1x384x128xbf16> to vector<384x128xbf16>
      %cst_30 = arith.constant dense<0.000000e+00> : vector<128x128xf32>
      %27 = tpu.matmul %24, %26, %cst_30 {dimension_numbers = #tpu.dot_dimension_numbers<[1], [0], [0], [1], [0, 0, 1, 1], [], []>} : vector<128x384xbf16>, vector<384x128xbf16>, vector<128x128xf32> -> vector<128x128xf32>
      %28 = arith.addf %21, %27 : vector<128x128xf32>
      %c64_i32 = arith.constant 64 : i32
      %29 = arith.addi %16, %c64_i32 : i32
      %30 = arith.index_cast %29 : i32 to index
      %c0_31 = arith.constant 0 : index
      %31 = vector.load %arg9[%30, %c0_31] : memref<704x384xbf16, #tpu.memory_space<vmem>>, vector<128x384xbf16>
      %c2_32 = arith.constant 2 : index
      %c0_33 = arith.constant 0 : index
      %c0_34 = arith.constant 0 : index
      %32 = vector.load %arg4[%c2_32, %c0_33, %c0_34] : memref<3x384x128xbf16, #tpu.memory_space<vmem>>, vector<1x384x128xbf16>
      %33 = vector.shape_cast %32 : vector<1x384x128xbf16> to vector<384x128xbf16>
      %cst_35 = arith.constant dense<0.000000e+00> : vector<128x128xf32>
      %34 = tpu.matmul %31, %33, %cst_35 {dimension_numbers = #tpu.dot_dimension_numbers<[1], [0], [0], [1], [0, 0, 1, 1], [], []>} : vector<128x384xbf16>, vector<384x128xbf16>, vector<128x128xf32> -> vector<128x128xf32>
      %35 = arith.addf %28, %34 : vector<128x128xf32>
      %c0_36 = arith.constant 0 : index
      %c0_37 = arith.constant 0 : index
      %36 = vector.load %arg5[%c0_36, %c0_37] : memref<1x128xf32, #tpu.memory_space<vmem>>, vector<1x128xf32>
      %37 = vector.broadcast %36 : vector<1x128xf32> to vector<128x128xf32>
      %38 = arith.addf %35, %37 : vector<128x128xf32>
      %cst_38 = arith.constant 0.000000e+00 : f32
      %39 = vector.broadcast %cst_38 : f32 to vector<128x128xf32>
      %40 = arith.maximumf %38, %39 : vector<128x128xf32>
      %c0_39 = arith.constant 0 : index
      %41 = arith.index_cast %16 : i32 to index
      %c0_40 = arith.constant 0 : index
      %42 = vector.load %arg3[%c0_39, %41, %c0_40] : memref<1x640x1xf32, #tpu.memory_space<vmem>>, vector<1x128x1xf32>
      %43 = vector.shape_cast %42 : vector<1x128x1xf32> to vector<128x1xf32>
      %44 = vector.broadcast %43 : vector<128x1xf32> to vector<128x128xf32>
      %45 = arith.mulf %40, %44 : vector<128x128xf32>
      %46 = arith.truncf %45 : vector<128x128xf32> to vector<128x128xbf16>
      %47 = arith.index_cast %16 : i32 to index
      %c0_41 = arith.constant 0 : index
      %48 = vector.load %arg10[%47, %c0_41] : memref<656x384xbf16, #tpu.memory_space<vmem>>, vector<128x128xbf16>
      tpu.vector_store %arg10[%47, %c0_41], %46 {strides = array<i32>} : memref<656x384xbf16, #tpu.memory_space<vmem>>, vector<128x128xbf16>,
    }
    %c5_i32_10 = arith.constant 5 : i32
    %c1_11 = arith.constant 1 : index
    %c0_12 = arith.constant 0 : index
    %10 = vector.load %arg10[%c1_11, %c0_12] : memref<656x384xbf16, #tpu.memory_space<vmem>>, vector<576x128xbf16>
    %c0_13 = arith.constant 0 : index
    %c128_14 = arith.constant 128 : index
    %11 = vector.load %arg10[%c0_13, %c128_14] : memref<656x384xbf16, #tpu.memory_space<vmem>>, vector<576x128xbf16>
    tpu.vector_store %arg10[%c0_13, %c128_14], %10 {strides = array<i32>} : memref<656x384xbf16, #tpu.memory_space<vmem>>, vector<576x128xbf16>,
    %c2_15 = arith.constant 2 : index
    %c0_16 = arith.constant 0 : index
    %12 = vector.load %arg10[%c2_15, %c0_16] : memref<656x384xbf16, #tpu.memory_space<vmem>>, vector<576x128xbf16>
    %c0_17 = arith.constant 0 : index
    %c256_18 = arith.constant 256 : index
    %13 = vector.load %arg10[%c0_17, %c256_18] : memref<656x384xbf16, #tpu.memory_space<vmem>>, vector<576x128xbf16>
    tpu.vector_store %arg10[%c0_17, %c256_18], %12 {strides = array<i32>} : memref<656x384xbf16, #tpu.memory_space<vmem>>, vector<576x128xbf16>,
    %c0_i32_19 = arith.constant 0 : i32
    %c4_i32 = arith.constant 4 : i32
    %14 = arith.addi %c0_i32_19, %c4_i32 : i32
    %c1_i32_20 = arith.constant 1 : i32
    scf.for %arg11 = %c0_i32_19 to %14 step %c1_i32_20  : i32 {
      %c128_i32 = arith.constant 128 : i32
      %15 = arith.muli %arg11, %c128_i32 : i32
      %16 = tpu.assume_multiple %15, 128 : i32
      %17 = arith.index_cast %16 : i32 to index
      %c0_22 = arith.constant 0 : index
      %18 = vector.load %arg10[%17, %c0_22] : memref<656x384xbf16, #tpu.memory_space<vmem>>, vector<128x384xbf16>
      %c0_23 = arith.constant 0 : index
      %c0_24 = arith.constant 0 : index
      %c0_25 = arith.constant 0 : index
      %19 = vector.load %arg6[%c0_23, %c0_24, %c0_25] : memref<3x384x128xbf16, #tpu.memory_space<vmem>>, vector<1x384x128xbf16>
      %20 = vector.shape_cast %19 : vector<1x384x128xbf16> to vector<384x128xbf16>
      %cst = arith.constant dense<0.000000e+00> : vector<128x128xf32>
      %21 = tpu.matmul %18, %20, %cst {dimension_numbers = #tpu.dot_dimension_numbers<[1], [0], [0], [1], [0, 0, 1, 1], [], []>} : vector<128x384xbf16>, vector<384x128xbf16>, vector<128x128xf32> -> vector<128x128xf32>
      %c32_i32 = arith.constant 32 : i32
      %22 = arith.addi %16, %c32_i32 : i32
      %23 = arith.index_cast %22 : i32 to index
      %c0_26 = arith.constant 0 : index
      %24 = vector.load %arg10[%23, %c0_26] : memref<656x384xbf16, #tpu.memory_space<vmem>>, vector<128x384xbf16>
      %c1_27 = arith.constant 1 : index
      %c0_28 = arith.constant 0 : index
      %c0_29 = arith.constant 0 : index
      %25 = vector.load %arg6[%c1_27, %c0_28, %c0_29] : memref<3x384x128xbf16, #tpu.memory_space<vmem>>, vector<1x384x128xbf16>
      %26 = vector.shape_cast %25 : vector<1x384x128xbf16> to vector<384x128xbf16>
      %cst_30 = arith.constant dense<0.000000e+00> : vector<128x128xf32>
      %27 = tpu.matmul %24, %26, %cst_30 {dimension_numbers = #tpu.dot_dimension_numbers<[1], [0], [0], [1], [0, 0, 1, 1], [], []>} : vector<128x384xbf16>, vector<384x128xbf16>, vector<128x128xf32> -> vector<128x128xf32>
      %28 = arith.addf %21, %27 : vector<128x128xf32>
      %c64_i32 = arith.constant 64 : i32
      %29 = arith.addi %16, %c64_i32 : i32
      %30 = arith.index_cast %29 : i32 to index
      %c0_31 = arith.constant 0 : index
      %31 = vector.load %arg10[%30, %c0_31] : memref<656x384xbf16, #tpu.memory_space<vmem>>, vector<128x384xbf16>
      %c2_32 = arith.constant 2 : index
      %c0_33 = arith.constant 0 : index
      %c0_34 = arith.constant 0 : index
      %32 = vector.load %arg6[%c2_32, %c0_33, %c0_34] : memref<3x384x128xbf16, #tpu.memory_space<vmem>>, vector<1x384x128xbf16>
      %33 = vector.shape_cast %32 : vector<1x384x128xbf16> to vector<384x128xbf16>
      %cst_35 = arith.constant dense<0.000000e+00> : vector<128x128xf32>
      %34 = tpu.matmul %31, %33, %cst_35 {dimension_numbers = #tpu.dot_dimension_numbers<[1], [0], [0], [1], [0, 0, 1, 1], [], []>} : vector<128x384xbf16>, vector<384x128xbf16>, vector<128x128xf32> -> vector<128x128xf32>
      %35 = arith.addf %28, %34 : vector<128x128xf32>
      %c0_36 = arith.constant 0 : index
      %c0_37 = arith.constant 0 : index
      %36 = vector.load %arg7[%c0_36, %c0_37] : memref<1x128xf32, #tpu.memory_space<vmem>>, vector<1x128xf32>
      %37 = vector.broadcast %36 : vector<1x128xf32> to vector<128x128xf32>
      %38 = arith.addf %35, %37 : vector<128x128xf32>
      %cst_38 = arith.constant 0.000000e+00 : f32
      %39 = vector.broadcast %cst_38 : f32 to vector<128x128xf32>
      %40 = arith.maximumf %38, %39 : vector<128x128xf32>
      %41 = arith.truncf %40 : vector<128x128xf32> to vector<128x128xbf16>
      %c0_39 = arith.constant 0 : index
      %c0_40 = arith.constant 0 : index
      %42 = arith.index_cast %16 : i32 to index
      %c0_41 = arith.constant 0 : index
      %43 = vector.load %arg8[%c0_39, %c0_40, %42, %c0_41] : memref<1x1x512x128xbf16, #tpu.memory_space<vmem>>, vector<1x1x128x128xbf16>
      %44 = vector.shape_cast %43 : vector<1x1x128x128xbf16> to vector<128x128xbf16>
      %45 = vector.shape_cast %41 : vector<128x128xbf16> to vector<1x1x128x128xbf16>
      tpu.vector_store %arg8[%c0_39, %c0_40, %42, %c0_41], %45 {strides = array<i32>} : memref<1x1x512x128xbf16, #tpu.memory_space<vmem>>, vector<1x1x128x128xbf16>,
    }
    %c4_i32_21 = arith.constant 4 : i32
    return
  }
  func.func @transform_0(%arg0: i32, %arg1: i32) -> (i32, i32, i32) {
    %c0_i32 = arith.constant 0 : i32
    %c0_i32_0 = arith.constant 0 : i32
    %c0_i32_1 = arith.constant 0 : i32
    return %arg0, %c0_i32, %c0_i32_0 : i32, i32, i32
  }
  func.func @transform_1(%arg0: i32, %arg1: i32) -> (i32, i32, i32) {
    %c0_i32 = arith.constant 0 : i32
    %c0_i32_0 = arith.constant 0 : i32
    %c0_i32_1 = arith.constant 0 : i32
    return %arg1, %c0_i32, %c0_i32_0 : i32, i32, i32
  }
  func.func @transform_2(%arg0: i32, %arg1: i32) -> (i32, i32, i32) {
    %c0_i32 = arith.constant 0 : i32
    %c0_i32_0 = arith.constant 0 : i32
    %c0_i32_1 = arith.constant 0 : i32
    %c0_i32_2 = arith.constant 0 : i32
    return %c0_i32, %c0_i32_0, %c0_i32_1 : i32, i32, i32
  }
  func.func @transform_3(%arg0: i32, %arg1: i32) -> (i32, i32) {
    %c0_i32 = arith.constant 0 : i32
    %c0_i32_0 = arith.constant 0 : i32
    %c0_i32_1 = arith.constant 0 : i32
    return %c0_i32, %c0_i32_0 : i32, i32
  }
  func.func @transform_4(%arg0: i32, %arg1: i32) -> (i32, i32, i32) {
    %c0_i32 = arith.constant 0 : i32
    %c0_i32_0 = arith.constant 0 : i32
    %c0_i32_1 = arith.constant 0 : i32
    %c0_i32_2 = arith.constant 0 : i32
    return %c0_i32, %c0_i32_0, %c0_i32_1 : i32, i32, i32
  }
  func.func @transform_5(%arg0: i32, %arg1: i32) -> (i32, i32) {
    %c0_i32 = arith.constant 0 : i32
    %c0_i32_0 = arith.constant 0 : i32
    %c0_i32_1 = arith.constant 0 : i32
    return %c0_i32, %c0_i32_0 : i32, i32
  }
  func.func @transform_6(%arg0: i32, %arg1: i32) -> (i32, i32, i32, i32) {
    %c0_i32 = arith.constant 0 : i32
    %c0_i32_0 = arith.constant 0 : i32
    %c0_i32_1 = arith.constant 0 : i32
    return %arg0, %arg1, %c0_i32, %c0_i32_0 : i32, i32, i32, i32
  }
}

</mosaic_0001>

<llo_original>
// kernel: _successive_conv_impl.1
$region0: #{_successive_conv_impl.1}
  #allocation0 [shape = 'u32[]', space=smem, size = 0x4, offset = 0x4, fixed_abs, tag = 'smem constant byte address 0x4 - core index']
  #allocation1 [shape = 'u32[72,128]{1,0:T(1,128)}', space=vmem, size = 0x9000, scoped, tag = 'internal scratch']
  #allocation2 [shape = 'bf16[704,384]{1,0:T(8,128)(2,1)}', space=vmem, size = 0x84000, scoped, tag = 'scratch operand']
  #allocation3 [shape = 'bf16[656,384]{1,0:T(8,128)(2,1)}', space=vmem, size = 0x7b000, scoped, tag = 'scratch operand']
  %s0 = inlined_call_operand.vmem [shape: bf16[2,736,128], index: 0, kind: input, shape index: {}]
  %s1 = inlined_call_operand.vmem [shape: f32[1,640,1], index: 1, kind: input, shape index: {}]
  %s2 = inlined_call_operand.vmem [shape: bf16[3,384,128], index: 2, kind: input, shape index: {}]
  %s3 = inlined_call_operand.vmem [shape: f32[1,128], index: 3, kind: input, shape index: {}]
  %s4 = inlined_call_operand.vmem [shape: bf16[3,384,128], index: 4, kind: input, shape index: {}]
  %s5 = inlined_call_operand.vmem [shape: f32[1,128], index: 5, kind: input, shape index: {}]
  %s6 = inlined_call_operand.vmem [shape: bf16[2,1,512,128], index: 6, kind: output, shape index: {}]
  %s7 = sld [smem:[#allocation0]]
  $region71: #{_successive_conv_impl.1} parent=0
    _
  %s9 = ssub.s32 1, %s7
  %s10 = scalar_select 0, %s9, %s7
  loop: start=0, step=1, limit=4
  $region2: #{_successive_conv_impl.1} parent=0 // loop_pre_header
    _
  $region3: #{_successive_conv_impl.1} parent=0 // loop_header
    %s12 = sphi 0, %s16
    %p13 = scmp.ge.s32.totalorder %s12, 4
    %s19 = sphi 0, %s31
    %s20 = sphi 0, %s27
    %s21 = sphi 0, %s19
    %s22 = sphi 0, %s20
    %s23 = sphi 0, %s21
    %s24 = sphi 0, %s22
    %s34 = sphi 0, %s36
    %s37 = sphi 0, %s34
    %s38 = sphi 0, %s37
    %s54 = sphi 0, %s38
    %s60 = sphi 0, %s62
    %s63 = sphi 0, %s60
    %s64 = sphi 0, %s63
    %s80 = sphi 0, %s64
    %s84 = sphi 0, %s84
    %s86 = sphi 0, %s84
    %s87 = sphi 0, %s86
    %s101 = sphi 0, %s87
    %s105 = sphi 0, %s105
    %s107 = sphi 0, %s105
    %s108 = sphi 0, %s107
    %s122 = sphi 0, %s108
    %s126 = sphi 0, %s126
    %s128 = sphi 0, %s126
    %s129 = sphi 0, %s128
    %s143 = sphi 0, %s129
    %s147 = sphi 0, %s147
    %s149 = sphi 0, %s147
    %s150 = sphi 0, %s149
    %s164 = sphi 0, %s150
    %s172 = sphi 0, %s174
    %s175 = sphi 0, %s172
    %s176 = sphi 0, %s175
    %s192 = sphi 0, %s176
  $region4: #{_successive_conv_impl.1} parent=0 // loop_header_branch
    %15 = sbr.rel (%p13) target = $region8
  $region5: #{_successive_conv_impl.1} parent=0 // loop_body
    %s17 = ssub.s32 %s12, 1
    %s18 = ssub.s32 %s12, 2
    %s25 = sadd.s32 1, %s20
    %p26 = scmp.ge.s32.totalorder %s25, 1
    %s27 = scalar_select %p26, 0, %s25
    %s28 = sadd.s32 1, %s19
    %s29 = scalar_select %p26, %s28, %s19
    %p30 = scmp.ge.s32.totalorder %s29, 2
    %s31 = scalar_select %p30, 0, %s29
    %s32 = ssub.s32 %s19, %s31
    %p33 = scmp.eq.s32.totalorder %s32, 0
    %s35 = sadd.s32 %s34, 1
    %s36 = scalar_select %p33, %s34, %s35
    %p39 = pneg %p33
    %p40 = scmp.eq.s32.totalorder %s12, 1
    %p41 = por %p39, %p40
    %p42 = scmp.ne.s32.totalorder %s34, %s37
    %p43 = scmp.eq.s32.totalorder %s12, 0
    %p44 = por %p42, %p43
    %p45 = scmp.ne.s32.totalorder %s34, %s37
    %p46 = scmp.eq.s32.totalorder %s17, 1
    %p47 = por %p45, %p46
    %p48 = scmp.ne.s32.totalorder %s37, %s38
    %p49 = scmp.eq.s32.totalorder %s17, 0
    %p50 = por %p48, %p49
    %p51 = scmp.ne.s32.totalorder %s37, %s38
    %p52 = scmp.eq.s32.totalorder %s18, 1
    %p53 = por %p51, %p52
    %p55 = scmp.ne.s32.totalorder %s38, %s54
    %p56 = scmp.eq.s32.totalorder %s18, 0
    %p57 = por %p55, %p56
    %s58 = ssub.s32 %s20, %s27
    %p59 = scmp.eq.s32.totalorder %s58, 0
    %s61 = sadd.s32 %s60, 1
    %s62 = scalar_select %p59, %s60, %s61
    %p65 = pneg %p59
    %p66 = scmp.eq.s32.totalorder %s12, 1
    %p67 = por %p65, %p66
    %p68 = scmp.ne.s32.totalorder %s60, %s63
    %p69 = scmp.eq.s32.totalorder %s12, 0
    %p70 = por %p68, %p69
    %p71 = scmp.ne.s32.totalorder %s60, %s63
    %p72 = scmp.eq.s32.totalorder %s17, 1
    %p73 = por %p71, %p72
    %p74 = scmp.ne.s32.totalorder %s63, %s64
    %p75 = scmp.eq.s32.totalorder %s17, 0
    %p76 = por %p74, %p75
    %p77 = scmp.ne.s32.totalorder %s63, %s64
    %p78 = scmp.eq.s32.totalorder %s18, 1
    %p79 = por %p77, %p78
    %p81 = scmp.ne.s32.totalorder %s64, %s80
    %p82 = scmp.eq.s32.totalorder %s18, 0
    %p83 = por %p81, %p82
    %s85 = sadd.s32 %s84, 1
    %p88 = scmp.eq.s32.totalorder %s12, 1
    %p89 = scmp.ne.s32.totalorder %s84, %s86
    %p90 = scmp.eq.s32.totalorder %s12, 0
    %p91 = por %p89, %p90
    %p92 = scmp.ne.s32.totalorder %s84, %s86
    %p93 = scmp.eq.s32.totalorder %s17, 1
    %p94 = por %p92, %p93
    %p95 = scmp.ne.s32.totalorder %s86, %s87
    %p96 = scmp.eq.s32.totalorder %s17, 0
    %p97 = por %p95, %p96
    %p98 = scmp.ne.s32.totalorder %s86, %s87
    %p99 = scmp.eq.s32.totalorder %s18, 1
    %p100 = por %p98, %p99
    %p102 = scmp.ne.s32.totalorder %s87, %s101
    %p103 = scmp.eq.s32.totalorder %s18, 0
    %p104 = por %p102, %p103
    %s106 = sadd.s32 %s105, 1
    %p109 = scmp.eq.s32.totalorder %s12, 1
    %p110 = scmp.ne.s32.totalorder %s105, %s107
    %p111 = scmp.eq.s32.totalorder %s12, 0
    %p112 = por %p110, %p111
    %p113 = scmp.ne.s32.totalorder %s105, %s107
    %p114 = scmp.eq.s32.totalorder %s17, 1
    %p115 = por %p113, %p114
    %p116 = scmp.ne.s32.totalorder %s107, %s108
    %p117 = scmp.eq.s32.totalorder %s17, 0
    %p118 = por %p116, %p117
    %p119 = scmp.ne.s32.totalorder %s107, %s108
    %p120 = scmp.eq.s32.totalorder %s18, 1
    %p121 = por %p119, %p120
    %p123 = scmp.ne.s32.totalorder %s108, %s122
    %p124 = scmp.eq.s32.totalorder %s18, 0
    %p125 = por %p123, %p124
    %s127 = sadd.s32 %s126, 1
    %p130 = scmp.eq.s32.totalorder %s12, 1
    %p131 = scmp.ne.s32.totalorder %s126, %s128
    %p132 = scmp.eq.s32.totalorder %s12, 0
    %p133 = por %p131, %p132
    %p134 = scmp.ne.s32.totalorder %s126, %s128
    %p135 = scmp.eq.s32.totalorder %s17, 1
    %p136 = por %p134, %p135
    %p137 = scmp.ne.s32.totalorder %s128, %s129
    %p138 = scmp.eq.s32.totalorder %s17, 0
    %p139 = por %p137, %p138
    %p140 = scmp.ne.s32.totalorder %s128, %s129
    %p141 = scmp.eq.s32.totalorder %s18, 1
    %p142 = por %p140, %p141
    %p144 = scmp.ne.s32.totalorder %s129, %s143
    %p145 = scmp.eq.s32.totalorder %s18, 0
    %p146 = por %p144, %p145
    %s148 = sadd.s32 %s147, 1
    %p151 = scmp.eq.s32.totalorder %s12, 1
    %p152 = scmp.ne.s32.totalorder %s147, %s149
    %p153 = scmp.eq.s32.totalorder %s12, 0
    %p154 = por %p152, %p153
    %p155 = scmp.ne.s32.totalorder %s147, %s149
    %p156 = scmp.eq.s32.totalorder %s17, 1
    %p157 = por %p155, %p156
    %p158 = scmp.ne.s32.totalorder %s149, %s150
    %p159 = scmp.eq.s32.totalorder %s17, 0
    %p160 = por %p158, %p159
    %p161 = scmp.ne.s32.totalorder %s149, %s150
    %p162 = scmp.eq.s32.totalorder %s18, 1
    %p163 = por %p161, %p162
    %p165 = scmp.ne.s32.totalorder %s150, %s164
    %p166 = scmp.eq.s32.totalorder %s18, 0
    %p167 = por %p165, %p166
    %s168 = ssub.s32 %s19, %s31
    %s169 = ssub.s32 %s20, %s27
    %s170 = sor.u32 %s168, %s169
    %p171 = scmp.eq.s32.totalorder %s170, 0
    %s173 = sadd.s32 %s172, 1
    %s174 = scalar_select %p171, %s172, %s173
    %p177 = pneg %p171
    %p178 = scmp.eq.s32.totalorder %s12, 1
    %p179 = por %p177, %p178
    %p180 = scmp.ne.s32.totalorder %s172, %s175
    %p181 = scmp.eq.s32.totalorder %s12, 0
    %p182 = por %p180, %p181
    %p183 = scmp.ne.s32.totalorder %s172, %s175
    %p184 = scmp.eq.s32.totalorder %s17, 1
    %p185 = por %p183, %p184
    %p186 = scmp.ne.s32.totalorder %s175, %s176
    %p187 = scmp.eq.s32.totalorder %s17, 0
    %p188 = por %p186, %p187
    %p189 = scmp.ne.s32.totalorder %s175, %s176
    %p190 = scmp.eq.s32.totalorder %s18, 1
    %p191 = por %p189, %p190
    %p193 = scmp.ne.s32.totalorder %s176, %s192
    %p194 = scmp.eq.s32.totalorder %s18, 0
    %p195 = por %p193, %p194
    %p196 = scmp.le.s32.totalorder 1, %s12
    %p197 = scmp.lt.s32.totalorder %s12, 3
    %p198 = pnand %p196, %p197
    %p199 = pneg %p198
    // Predicated region
    $region9: #{_successive_conv_impl.1} parent=5 // pred_check
      _
    $region10: #{_successive_conv_impl.1} parent=5 // pred_check_branch
      %201 = sbr.rel (%p198) target = $region12
    $region11: #{_successive_conv_impl.1} parent=5 // pred_region
      %s202 = ssub.s32 %s12, 1
      // Predicated region
      $region13: #{_successive_conv_impl.1} parent=11 // pred_check
        %p203 = pneg %p76
      $region14: #{_successive_conv_impl.1} parent=11 // pred_check_branch
        %205 = sbr.rel (%p203) target = $region16
      $region15: #{_successive_conv_impl.1} parent=11 // pred_region
        %p206 = scmp.lt.s32.totalorder %s22, 0
        %s207 = scalar_select %p206, %s22, 0
        %s208 = smul.addr %s207, 80
        %s209 = smul.addr %s208, 8
        %s210 = scalar_lea.vmem %s1, %s209
      $region16: #{_successive_conv_impl.1} parent=11 // pred_fallthru
        _
      // Predicated region
      $region17: #{_successive_conv_impl.1} parent=11 // pred_check
        %p211 = pneg %p97
      $region18: #{_successive_conv_impl.1} parent=11 // pred_check_branch
        %213 = sbr.rel (%p211) target = $region20
      $region19: #{_successive_conv_impl.1} parent=11 // pred_region
        _
      $region20: #{_successive_conv_impl.1} parent=11 // pred_fallthru
        _
      // Predicated region
      $region21: #{_successive_conv_impl.1} parent=11 // pred_check
        %p214 = pneg %p118
      $region22: #{_successive_conv_impl.1} parent=11 // pred_check_branch
        %216 = sbr.rel (%p214) target = $region24
      $region23: #{_successive_conv_impl.1} parent=11 // pred_region
        _
      $region24: #{_successive_conv_impl.1} parent=11 // pred_fallthru
        _
      // Predicated region
      $region25: #{_successive_conv_impl.1} parent=11 // pred_check
        %p217 = pneg %p139
      $region26: #{_successive_conv_impl.1} parent=11 // pred_check_branch
        %219 = sbr.rel (%p217) target = $region28
      $region27: #{_successive_conv_impl.1} parent=11 // pred_region
        _
      $region28: #{_successive_conv_impl.1} parent=11 // pred_fallthru
        _
      // Predicated region
      $region29: #{_successive_conv_impl.1} parent=11 // pred_check
        %p220 = pneg %p160
      $region30: #{_successive_conv_impl.1} parent=11 // pred_check_branch
        %222 = sbr.rel (%p220) target = $region32
      $region31: #{_successive_conv_impl.1} parent=11 // pred_region
        _
      $region32: #{_successive_conv_impl.1} parent=11 // pred_fallthru
        _
    $region12: #{_successive_conv_impl.1} parent=5 // pred_fallthru
      _
    %p223 = scmp.lt.s32.totalorder %s12, 2
    // Predicated region
    $region33: #{_successive_conv_impl.1} parent=5 // pred_check
      %p224 = pneg %p223
    $region34: #{_successive_conv_impl.1} parent=5 // pred_check_branch
      %226 = sbr.rel (%p224) target = $region36
    $region35: #{_successive_conv_impl.1} parent=5 // pred_region
      // Predicated region
      $region37: #{_successive_conv_impl.1} parent=35 // pred_check
        %p227 = pneg %p44
      $region38: #{_successive_conv_impl.1} parent=35 // pred_check_branch
        %229 = sbr.rel (%p227) target = $region40
      $region39: #{_successive_conv_impl.1} parent=35 // pred_region
        %p230 = scmp.lt.s32.totalorder %s19, 1
        %s231 = scalar_select %p230, %s19, 1
        %s232 = smul.addr %s231, 92
        %s233 = smul.addr %s232, 4
        %s234 = scalar_lea.vmem %s0, %s233
      $region40: #{_successive_conv_impl.1} parent=35 // pred_fallthru
        _
    $region36: #{_successive_conv_impl.1} parent=5 // pred_fallthru
      _
    %p235 = scmp.le.s32.totalorder 1, %s12
    %p236 = scmp.lt.s32.totalorder %s12, 3
    %p237 = pnand %p235, %p236
    %p238 = pneg %p237
    // Predicated region
    $region41: #{_successive_conv_impl.1} parent=5 // pred_check
      _
    $region42: #{_successive_conv_impl.1} parent=5 // pred_check_branch
      %240 = sbr.rel (%p237) target = $region44
    $region43: #{_successive_conv_impl.1} parent=5 // pred_region
      %s241 = ssub.s32 %s12, 1
      %p242 = scmp.lt.s32.totalorder %s21, 1
      %s243 = scalar_select %p242, %s21, 1
      %s244 = smul.addr %s243, 92
      %s245 = smul.addr %s244, 4
      %s246 = scalar_lea.vmem %s0, %s245
      %p247 = pneg %p50
      %p248 = pneg %p47
      %p249 = scmp.lt.s32.totalorder %s22, 0
      %s250 = scalar_select %p249, %s22, 0
      %s251 = smul.addr %s250, 80
      %s252 = smul.addr %s251, 8
      %s253 = scalar_lea.vmem %s1, %s252
      %p254 = pneg %p76
      %p255 = pneg %p73
      %p256 = pneg %p97
      %p257 = pneg %p94
      %p258 = pneg %p118
      %p259 = pneg %p115
      %p260 = pneg %p139
      %p261 = pneg %p136
      %p262 = pneg %p160
      %p263 = pneg %p157
      %p264 = pneg %p188
      %p265 = pneg %p185
      %p266 = scmp.lt.s32.totalorder %s21, 1
      %s267 = scalar_select %p266, %s21, 1
      %p268 = scmp.lt.s32.totalorder %s22, 0
      %s269 = scalar_select %p268, %s22, 0
      %s270 = smul.addr %s269, 64
      %s271 = smul.addr %s267, 64
      %s272 = sadd.s32 %s270, %s271
      %s273 = smul.addr %s272, 4
      %s274 = scalar_lea.vmem %s6, %s273
      %p275 = scmp.lt.s32.totalorder %s21, 1
      %s276 = scalar_select %p275, %s21, 1
      %s277 = smul.addr %s276, 92
      %s278 = smul.addr %s277, 4
      %s279 = scalar_lea.vmem %s0, %s278
      %p280 = scmp.lt.s32.totalorder %s22, 0
      %s281 = scalar_select %p280, %s22, 0
      %s282 = smul.addr %s281, 80
      %s283 = smul.addr %s282, 8
      %s284 = scalar_lea.vmem %s1, %s283
      %p285 = scmp.lt.s32.totalorder %s21, 1
      %s286 = scalar_select %p285, %s21, 1
      %p287 = scmp.lt.s32.totalorder %s22, 0
      %s288 = scalar_select %p287, %s22, 0
      %s289 = smul.addr %s288, 64
      %s290 = smul.addr %s286, 64
      %s291 = sadd.s32 %s289, %s290
      %s292 = smul.addr %s291, 4
      %s293 = scalar_lea.vmem %s6, %s292
      %v294 = vld [vmem:[%s279] sm:$0xf]
      %v295 = vld [vmem:[%s279 + $0x4] sm:$0xf]
      %v296 = vld [vmem:[%s279 + $0x8] sm:$0xf]
      %v297 = vld [vmem:[%s279 + $0xc] sm:$0xf]
      %v298 = vld [vmem:[%s279 + $0x10] sm:$0xf]
      %v299 = vld [vmem:[%s279 + $0x14] sm:$0xf]
      %v300 = vld [vmem:[%s279 + $0x18] sm:$0xf]
      %v301 = vld [vmem:[%s279 + $0x1c] sm:$0xf]
      %v302 = vld [vmem:[%s279 + $0x20] sm:$0xf]
      %v303 = vld [vmem:[%s279 + $0x24] sm:$0xf]
      %v304 = vld [vmem:[%s279 + $0x28] sm:$0xf]
      %v305 = vld [vmem:[%s279 + $0x2c] sm:$0xf]
      %v306 = vld [vmem:[%s279 + $0x30] sm:$0xf]
      %v307 = vld [vmem:[%s279 + $0x34] sm:$0xf]
      %v308 = vld [vmem:[%s279 + $0x38] sm:$0xf]
      %v309 = vld [vmem:[%s279 + $0x3c] sm:$0xf]
      %v310 = vld [vmem:[%s279 + $0x40] sm:$0xf]
      %v311 = vld [vmem:[%s279 + $0x44] sm:$0xf]
      %v312 = vld [vmem:[%s279 + $0x48] sm:$0xf]
      %v313 = vld [vmem:[%s279 + $0x4c] sm:$0xf]
      %v314 = vld [vmem:[%s279 + $0x50] sm:$0xf]
      %v315 = vld [vmem:[%s279 + $0x54] sm:$0xf]
      %v316 = vld [vmem:[%s279 + $0x58] sm:$0xf]
      %v317 = vld [vmem:[%s279 + $0x5c] sm:$0xf]
      %v318 = vld [vmem:[%s279 + $0x60] sm:$0xf]
      %v319 = vld [vmem:[%s279 + $0x64] sm:$0xf]
      %v320 = vld [vmem:[%s279 + $0x68] sm:$0xf]
      %v321 = vld [vmem:[%s279 + $0x6c] sm:$0xf]
      %v322 = vld [vmem:[%s279 + $0x70] sm:$0xf]
      %v323 = vld [vmem:[%s279 + $0x74] sm:$0xf]
      %v324 = vld [vmem:[%s279 + $0x78] sm:$0xf]
      %v325 = vld [vmem:[%s279 + $0x7c] sm:$0xf]
      %v326 = vld [vmem:[%s279 + $0x80] sm:$0xf]
      %v327 = vld [vmem:[%s279 + $0x84] sm:$0xf]
      %v328 = vld [vmem:[%s279 + $0x88] sm:$0xf]
      %v329 = vld [vmem:[%s279 + $0x8c] sm:$0xf]
      %v330 = vld [vmem:[%s279 + $0x90] sm:$0xf]
      %v331 = vld [vmem:[%s279 + $0x94] sm:$0xf]
      %v332 = vld [vmem:[%s279 + $0x98] sm:$0xf]
      %v333 = vld [vmem:[%s279 + $0x9c] sm:$0xf]
      %v334 = vld [vmem:[%s279 + $0xa0] sm:$0xf]
      %v335 = vld [vmem:[%s279 + $0xa4] sm:$0xf]
      %v336 = vld [vmem:[%s279 + $0xa8] sm:$0xf]
      %v337 = vld [vmem:[%s279 + $0xac] sm:$0xf]
      %v338 = vld [vmem:[%s279 + $0xb0] sm:$0xf]
      %v339 = vld [vmem:[%s279 + $0xb4] sm:$0xf]
      %v340 = vld [vmem:[%s279 + $0xb8] sm:$0xf]
      %v341 = vld [vmem:[%s279 + $0xbc] sm:$0xf]
      %v342 = vld [vmem:[%s279 + $0xc0] sm:$0xf]
      %v343 = vld [vmem:[%s279 + $0xc4] sm:$0xf]
      %v344 = vld [vmem:[%s279 + $0xc8] sm:$0xf]
      %v345 = vld [vmem:[%s279 + $0xcc] sm:$0xf]
      %v346 = vld [vmem:[%s279 + $0xd0] sm:$0xf]
      %v347 = vld [vmem:[%s279 + $0xd4] sm:$0xf]
      %v348 = vld [vmem:[%s279 + $0xd8] sm:$0xf]
      %v349 = vld [vmem:[%s279 + $0xdc] sm:$0xf]
      %v350 = vld [vmem:[%s279 + $0xe0] sm:$0xf]
      %v351 = vld [vmem:[%s279 + $0xe4] sm:$0xf]
      %v352 = vld [vmem:[%s279 + $0xe8] sm:$0xf]
      %v353 = vld [vmem:[%s279 + $0xec] sm:$0xf]
      %v354 = vld [vmem:[%s279 + $0xf0] sm:$0xf]
      %v355 = vld [vmem:[%s279 + $0xf4] sm:$0xf]
      %v356 = vld [vmem:[%s279 + $0xf8] sm:$0xf]
      %v357 = vld [vmem:[%s279 + $0xfc] sm:$0xf]
      %v358 = vld [vmem:[%s279 + $0x100] sm:$0xf]
      %v359 = vld [vmem:[%s279 + $0x104] sm:$0xf]
      %v360 = vld [vmem:[%s279 + $0x108] sm:$0xf]
      %v361 = vld [vmem:[%s279 + $0x10c] sm:$0xf]
      %v362 = vld [vmem:[%s279 + $0x110] sm:$0xf]
      %v363 = vld [vmem:[%s279 + $0x114] sm:$0xf]
      %v364 = vld [vmem:[%s279 + $0x118] sm:$0xf]
      %v365 = vld [vmem:[%s279 + $0x11c] sm:$0xf]
      %v366 = vld [vmem:[%s279 + $0x120] sm:$0xf]
      %v367 = vld [vmem:[%s279 + $0x124] sm:$0xf]
      %v368 = vld [vmem:[%s279 + $0x128] sm:$0xf]
      %v369 = vld [vmem:[%s279 + $0x12c] sm:$0xf]
      %v370 = vld [vmem:[%s279 + $0x130] sm:$0xf]
      %v371 = vld [vmem:[%s279 + $0x134] sm:$0xf]
      %v372 = vld [vmem:[%s279 + $0x138] sm:$0xf]
      %v373 = vld [vmem:[%s279 + $0x13c] sm:$0xf]
      %v374 = vld [vmem:[%s279 + $0x140] sm:$0xf]
      %v375 = vld [vmem:[%s279 + $0x144] sm:$0xf]
      %v376 = vld [vmem:[%s279 + $0x148] sm:$0xf]
      %v377 = vld [vmem:[%s279 + $0x14c] sm:$0xf]
      %v378 = vld [vmem:[%s279 + $0x150] sm:$0xf]
      %v379 = vld [vmem:[%s279 + $0x154] sm:$0xf]
      %v380 = vld [vmem:[%s279 + $0x158] sm:$0xf]
      %v381 = vld [vmem:[%s279 + $0x15c] sm:$0xf]
      %382 = vst [vmem:[#allocation2] sm:$0xf] %v294
      %383 = vst [vmem:[#allocation2 + $0xc] sm:$0xf] %v295
      %384 = vst [vmem:[#allocation2 + $0x18] sm:$0xf] %v296
      %385 = vst [vmem:[#allocation2 + $0x24] sm:$0xf] %v297
      %386 = vst [vmem:[#allocation2 + $0x30] sm:$0xf] %v298
      %387 = vst [vmem:[#allocation2 + $0x3c] sm:$0xf] %v299
      %388 = vst [vmem:[#allocation2 + $0x48] sm:$0xf] %v300
      %389 = vst [vmem:[#allocation2 + $0x54] sm:$0xf] %v301
      %390 = vst [vmem:[#allocation2 + $0x60] sm:$0xf] %v302
      %391 = vst [vmem:[#allocation2 + $0x6c] sm:$0xf] %v303
      %392 = vst [vmem:[#allocation2 + $0x78] sm:$0xf] %v304
      %393 = vst [vmem:[#allocation2 + $0x84] sm:$0xf] %v305
      %394 = vst [vmem:[#allocation2 + $0x90] sm:$0xf] %v306
      %395 = vst [vmem:[#allocation2 + $0x9c] sm:$0xf] %v307
      %396 = vst [vmem:[#allocation2 + $0xa8] sm:$0xf] %v308
      %397 = vst [vmem:[#allocation2 + $0xb4] sm:$0xf] %v309
      %398 = vst [vmem:[#allocation2 + $0xc0] sm:$0xf] %v310
      %399 = vst [vmem:[#allocation2 + $0xcc] sm:$0xf] %v311
      %400 = vst [vmem:[#allocation2 + $0xd8] sm:$0xf] %v312
      %401 = vst [vmem:[#allocation2 + $0xe4] sm:$0xf] %v313
      %402 = vst [vmem:[#allocation2 + $0xf0] sm:$0xf] %v314
      %403 = vst [vmem:[#allocation2 + $0xfc] sm:$0xf] %v315
      %404 = vst [vmem:[#allocation2 + $0x108] sm:$0xf] %v316
      %405 = vst [vmem:[#allocation2 + $0x114] sm:$0xf] %v317
      %406 = vst [vmem:[#allocation2 + $0x120] sm:$0xf] %v318
      %407 = vst [vmem:[#allocation2 + $0x12c] sm:$0xf] %v319
      %408 = vst [vmem:[#allocation2 + $0x138] sm:$0xf] %v320
      %409 = vst [vmem:[#allocation2 + $0x144] sm:$0xf] %v321
      %410 = vst [vmem:[#allocation2 + $0x150] sm:$0xf] %v322
      %411 = vst [vmem:[#allocation2 + $0x15c] sm:$0xf] %v323
      %412 = vst [vmem:[#allocation2 + $0x168] sm:$0xf] %v324
      %413 = vst [vmem:[#allocation2 + $0x174] sm:$0xf] %v325
      %414 = vst [vmem:[#allocation2 + $0x180] sm:$0xf] %v326
      %415 = vst [vmem:[#allocation2 + $0x18c] sm:$0xf] %v327
      %416 = vst [vmem:[#allocation2 + $0x198] sm:$0xf] %v328
      %417 = vst [vmem:[#allocation2 + $0x1a4] sm:$0xf] %v329
      %418 = vst [vmem:[#allocation2 + $0x1b0] sm:$0xf] %v330
      %419 = vst [vmem:[#allocation2 + $0x1bc] sm:$0xf] %v331
      %420 = vst [vmem:[#allocation2 + $0x1c8] sm:$0xf] %v332
      %421 = vst [vmem:[#allocation2 + $0x1d4] sm:$0xf] %v333
      %422 = vst [vmem:[#allocation2 + $0x1e0] sm:$0xf] %v334
      %423 = vst [vmem:[#allocation2 + $0x1ec] sm:$0xf] %v335
      %424 = vst [vmem:[#allocation2 + $0x1f8] sm:$0xf] %v336
      %425 = vst [vmem:[#allocation2 + $0x204] sm:$0xf] %v337
      %426 = vst [vmem:[#allocation2 + $0x210] sm:$0xf] %v338
      %427 = vst [vmem:[#allocation2 + $0x21c] sm:$0xf] %v339
      %428 = vst [vmem:[#allocation2 + $0x228] sm:$0xf] %v340
      %429 = vst [vmem:[#allocation2 + $0x234] sm:$0xf] %v341
      %430 = vst [vmem:[#allocation2 + $0x240] sm:$0xf] %v342
      %431 = vst [vmem:[#allocation2 + $0x24c] sm:$0xf] %v343
      %432 = vst [vmem:[#allocation2 + $0x258] sm:$0xf] %v344
      %433 = vst [vmem:[#allocation2 + $0x264] sm:$0xf] %v345
      %434 = vst [vmem:[#allocation2 + $0x270] sm:$0xf] %v346
      %435 = vst [vmem:[#allocation2 + $0x27c] sm:$0xf] %v347
      %436 = vst [vmem:[#allocation2 + $0x288] sm:$0xf] %v348
      %437 = vst [vmem:[#allocation2 + $0x294] sm:$0xf] %v349
      %438 = vst [vmem:[#allocation2 + $0x2a0] sm:$0xf] %v350
      %439 = vst [vmem:[#allocation2 + $0x2ac] sm:$0xf] %v351
      %440 = vst [vmem:[#allocation2 + $0x2b8] sm:$0xf] %v352
      %441 = vst [vmem:[#allocation2 + $0x2c4] sm:$0xf] %v353
      %442 = vst [vmem:[#allocation2 + $0x2d0] sm:$0xf] %v354
      %443 = vst [vmem:[#allocation2 + $0x2dc] sm:$0xf] %v355
      %444 = vst [vmem:[#allocation2 + $0x2e8] sm:$0xf] %v356
      %445 = vst [vmem:[#allocation2 + $0x2f4] sm:$0xf] %v357
      %446 = vst [vmem:[#allocation2 + $0x300] sm:$0xf] %v358
      %447 = vst [vmem:[#allocation2 + $0x30c] sm:$0xf] %v359
      %448 = vst [vmem:[#allocation2 + $0x318] sm:$0xf] %v360
      %449 = vst [vmem:[#allocation2 + $0x324] sm:$0xf] %v361
      %450 = vst [vmem:[#allocation2 + $0x330] sm:$0xf] %v362
      %451 = vst [vmem:[#allocation2 + $0x33c] sm:$0xf] %v363
      %452 = vst [vmem:[#allocation2 + $0x348] sm:$0xf] %v364
      %453 = vst [vmem:[#allocation2 + $0x354] sm:$0xf] %v365
      %454 = vst [vmem:[#allocation2 + $0x360] sm:$0xf] %v366
      %455 = vst [vmem:[#allocation2 + $0x36c] sm:$0xf] %v367
      %456 = vst [vmem:[#allocation2 + $0x378] sm:$0xf] %v368
      %457 = vst [vmem:[#allocation2 + $0x384] sm:$0xf] %v369
      %458 = vst [vmem:[#allocation2 + $0x390] sm:$0xf] %v370
      %459 = vst [vmem:[#allocation2 + $0x39c] sm:$0xf] %v371
      %460 = vst [vmem:[#allocation2 + $0x3a8] sm:$0xf] %v372
      %461 = vst [vmem:[#allocation2 + $0x3b4] sm:$0xf] %v373
      %462 = vst [vmem:[#allocation2 + $0x3c0] sm:$0xf] %v374
      %463 = vst [vmem:[#allocation2 + $0x3cc] sm:$0xf] %v375
      %464 = vst [vmem:[#allocation2 + $0x3d8] sm:$0xf] %v376
      %465 = vst [vmem:[#allocation2 + $0x3e4] sm:$0xf] %v377
      %466 = vst [vmem:[#allocation2 + $0x3f0] sm:$0xf] %v378
      %467 = vst [vmem:[#allocation2 + $0x3fc] sm:$0xf] %v379
      %468 = vst [vmem:[#allocation2 + $0x408] sm:$0xf] %v380
      %469 = vst [vmem:[#allocation2 + $0x414] sm:$0xf] %v381
      %v470 = vld [vmem:[%s279] sm:$0xf]
      %v471 = vld [vmem:[%s279 + $0x4] sm:$0xf]
      %v472 = vld [vmem:[%s279 + $0x8] sm:$0xf]
      %v473 = vld [vmem:[%s279 + $0xc] sm:$0xf]
      %v474 = vld [vmem:[%s279 + $0x10] sm:$0xf]
      %v475 = vld [vmem:[%s279 + $0x14] sm:$0xf]
      %v476 = vld [vmem:[%s279 + $0x18] sm:$0xf]
      %v477 = vld [vmem:[%s279 + $0x1c] sm:$0xf]
      %v478 = vld [vmem:[%s279 + $0x20] sm:$0xf]
      %v479 = vld [vmem:[%s279 + $0x24] sm:$0xf]
      %v480 = vld [vmem:[%s279 + $0x28] sm:$0xf]
      %v481 = vld [vmem:[%s279 + $0x2c] sm:$0xf]
      %v482 = vld [vmem:[%s279 + $0x30] sm:$0xf]
      %v483 = vld [vmem:[%s279 + $0x34] sm:$0xf]
      %v484 = vld [vmem:[%s279 + $0x38] sm:$0xf]
      %v485 = vld [vmem:[%s279 + $0x3c] sm:$0xf]
      %v486 = vld [vmem:[%s279 + $0x40] sm:$0xf]
      %v487 = vld [vmem:[%s279 + $0x44] sm:$0xf]
      %v488 = vld [vmem:[%s279 + $0x48] sm:$0xf]
      %v489 = vld [vmem:[%s279 + $0x4c] sm:$0xf]
      %v490 = vld [vmem:[%s279 + $0x50] sm:$0xf]
      %v491 = vld [vmem:[%s279 + $0x54] sm:$0xf]
      %v492 = vld [vmem:[%s279 + $0x58] sm:$0xf]
      %v493 = vld [vmem:[%s279 + $0x5c] sm:$0xf]
      %v494 = vld [vmem:[%s279 + $0x60] sm:$0xf]
      %v495 = vld [vmem:[%s279 + $0x64] sm:$0xf]
      %v496 = vld [vmem:[%s279 + $0x68] sm:$0xf]
      %v497 = vld [vmem:[%s279 + $0x6c] sm:$0xf]
      %v498 = vld [vmem:[%s279 + $0x70] sm:$0xf]
      %v499 = vld [vmem:[%s279 + $0x74] sm:$0xf]
      %v500 = vld [vmem:[%s279 + $0x78] sm:$0xf]
      %v501 = vld [vmem:[%s279 + $0x7c] sm:$0xf]
      %v502 = vld [vmem:[%s279 + $0x80] sm:$0xf]
      %v503 = vld [vmem:[%s279 + $0x84] sm:$0xf]
      %v504 = vld [vmem:[%s279 + $0x88] sm:$0xf]
      %v505 = vld [vmem:[%s279 + $0x8c] sm:$0xf]
      %v506 = vld [vmem:[%s279 + $0x90] sm:$0xf]
      %v507 = vld [vmem:[%s279 + $0x94] sm:$0xf]
      %v508 = vld [vmem:[%s279 + $0x98] sm:$0xf]
      %v509 = vld [vmem:[%s279 + $0x9c] sm:$0xf]
      %v510 = vld [vmem:[%s279 + $0xa0] sm:$0xf]
      %v511 = vld [vmem:[%s279 + $0xa4] sm:$0xf]
      %v512 = vld [vmem:[%s279 + $0xa8] sm:$0xf]
      %v513 = vld [vmem:[%s279 + $0xac] sm:$0xf]
      %v514 = vld [vmem:[%s279 + $0xb0] sm:$0xf]
      %v515 = vld [vmem:[%s279 + $0xb4] sm:$0xf]
      %v516 = vld [vmem:[%s279 + $0xb8] sm:$0xf]
      %v517 = vld [vmem:[%s279 + $0xbc] sm:$0xf]
      %v518 = vld [vmem:[%s279 + $0xc0] sm:$0xf]
      %v519 = vld [vmem:[%s279 + $0xc4] sm:$0xf]
      %v520 = vld [vmem:[%s279 + $0xc8] sm:$0xf]
      %v521 = vld [vmem:[%s279 + $0xcc] sm:$0xf]
      %v522 = vld [vmem:[%s279 + $0xd0] sm:$0xf]
      %v523 = vld [vmem:[%s279 + $0xd4] sm:$0xf]
      %v524 = vld [vmem:[%s279 + $0xd8] sm:$0xf]
      %v525 = vld [vmem:[%s279 + $0xdc] sm:$0xf]
      %v526 = vld [vmem:[%s279 + $0xe0] sm:$0xf]
      %v527 = vld [vmem:[%s279 + $0xe4] sm:$0xf]
      %v528 = vld [vmem:[%s279 + $0xe8] sm:$0xf]
      %v529 = vld [vmem:[%s279 + $0xec] sm:$0xf]
      %v530 = vld [vmem:[%s279 + $0xf0] sm:$0xf]
      %v531 = vld [vmem:[%s279 + $0xf4] sm:$0xf]
      %v532 = vld [vmem:[%s279 + $0xf8] sm:$0xf]
      %v533 = vld [vmem:[%s279 + $0xfc] sm:$0xf]
      %v534 = vld [vmem:[%s279 + $0x100] sm:$0xf]
      %v535 = vld [vmem:[%s279 + $0x104] sm:$0xf]
      %v536 = vld [vmem:[%s279 + $0x108] sm:$0xf]
      %v537 = vld [vmem:[%s279 + $0x10c] sm:$0xf]
      %v538 = vld [vmem:[%s279 + $0x110] sm:$0xf]
      %v539 = vld [vmem:[%s279 + $0x114] sm:$0xf]
      %v540 = vld [vmem:[%s279 + $0x118] sm:$0xf]
      %v541 = vld [vmem:[%s279 + $0x11c] sm:$0xf]
      %v542 = vld [vmem:[%s279 + $0x120] sm:$0xf]
      %v543 = vld [vmem:[%s279 + $0x124] sm:$0xf]
      %v544 = vld [vmem:[%s279 + $0x128] sm:$0xf]
      %v545 = vld [vmem:[%s279 + $0x12c] sm:$0xf]
      %v546 = vld [vmem:[%s279 + $0x130] sm:$0xf]
      %v547 = vld [vmem:[%s279 + $0x134] sm:$0xf]
      %v548 = vld [vmem:[%s279 + $0x138] sm:$0xf]
      %v549 = vld [vmem:[%s279 + $0x13c] sm:$0xf]
      %v550 = vld [vmem:[%s279 + $0x140] sm:$0xf]
      %v551 = vld [vmem:[%s279 + $0x144] sm:$0xf]
      %v552 = vld [vmem:[%s279 + $0x148] sm:$0xf]
      %v553 = vld [vmem:[%s279 + $0x14c] sm:$0xf]
      %v554 = vld [vmem:[%s279 + $0x150] sm:$0xf]
      %v555 = vld [vmem:[%s279 + $0x154] sm:$0xf]
      %v556 = vld [vmem:[%s279 + $0x158] sm:$0xf]
      %v557 = vld [vmem:[%s279 + $0x15c] sm:$0xf]
      %v558 = vld [vmem:[%s279 + $0x160] sm:$0x1]
      %vm559 = vsmask.f32 3328
      %vm560 = vsmask.f32 7440
      %vm561 = vmor %vm559, %vm560
      %v563 = vshrl.u32 %v470, 16
      %v565 = vrot.slane %v563, 4
      %v566 = vshll.u32 %v470, 16
      %v568 = vrot.slane %v566, 5
      %v569 = vor.u32 %v565, %v568
      %v570 = vrot.slane %v569, 4
      %v572 = vshll.u32 %v471, 16
      %v574 = vrot.slane %v572, 5
      %v575 = vsel %vm561, %v570, %v574
      %v576 = vshrl.u32 %v471, 16
      %v578 = vrot.slane %v576, 4
      %v579 = vor.u32 %v578, %v574
      %v580 = vrot.slane %v579, 4
      %v582 = vshll.u32 %v472, 16
      %v584 = vrot.slane %v582, 5
      %v585 = vsel %vm561, %v580, %v584
      %v586 = vshrl.u32 %v472, 16
      %v588 = vrot.slane %v586, 4
      %v589 = vor.u32 %v588, %v584
      %v590 = vrot.slane %v589, 4
      %v592 = vshll.u32 %v473, 16
      %v594 = vrot.slane %v592, 5
      %v595 = vsel %vm561, %v590, %v594
      %v596 = vshrl.u32 %v473, 16
      %v598 = vrot.slane %v596, 4
      %v599 = vor.u32 %v598, %v594
      %v600 = vrot.slane %v599, 4
      %v602 = vshll.u32 %v474, 16
      %v604 = vrot.slane %v602, 5
      %v605 = vsel %vm561, %v600, %v604
      %v606 = vshrl.u32 %v474, 16
      %v608 = vrot.slane %v606, 4
      %v609 = vor.u32 %v608, %v604
      %v610 = vrot.slane %v609, 4
      %v612 = vshll.u32 %v475, 16
      %v614 = vrot.slane %v612, 5
      %v615 = vsel %vm561, %v610, %v614
      %v616 = vshrl.u32 %v475, 16
      %v618 = vrot.slane %v616, 4
      %v619 = vor.u32 %v618, %v614
      %v620 = vrot.slane %v619, 4
      %v622 = vshll.u32 %v476, 16
      %v624 = vrot.slane %v622, 5
      %v625 = vsel %vm561, %v620, %v624
      %v626 = vshrl.u32 %v476, 16
      %v628 = vrot.slane %v626, 4
      %v629 = vor.u32 %v628, %v624
      %v630 = vrot.slane %v629, 4
      %v632 = vshll.u32 %v477, 16
      %v634 = vrot.slane %v632, 5
      %v635 = vsel %vm561, %v630, %v634
      %v636 = vshrl.u32 %v477, 16
      %v638 = vrot.slane %v636, 4
      %v639 = vor.u32 %v638, %v634
      %v640 = vrot.slane %v639, 4
      %v642 = vshll.u32 %v478, 16
      %v644 = vrot.slane %v642, 5
      %v645 = vsel %vm561, %v640, %v644
      %v646 = vshrl.u32 %v478, 16
      %v648 = vrot.slane %v646, 4
      %v649 = vor.u32 %v648, %v644
      %v650 = vrot.slane %v649, 4
      %v652 = vshll.u32 %v479, 16
      %v654 = vrot.slane %v652, 5
      %v655 = vsel %vm561, %v650, %v654
      %v656 = vshrl.u32 %v479, 16
      %v658 = vrot.slane %v656, 4
      %v659 = vor.u32 %v658, %v654
      %v660 = vrot.slane %v659, 4
      %v662 = vshll.u32 %v480, 16
      %v664 = vrot.slane %v662, 5
      %v665 = vsel %vm561, %v660, %v664
      %v666 = vshrl.u32 %v480, 16
      %v668 = vrot.slane %v666, 4
      %v669 = vor.u32 %v668, %v664
      %v670 = vrot.slane %v669, 4
      %v672 = vshll.u32 %v481, 16
      %v674 = vrot.slane %v672, 5
      %v675 = vsel %vm561, %v670, %v674
      %v676 = vshrl.u32 %v481, 16
      %v678 = vrot.slane %v676, 4
      %v679 = vor.u32 %v678, %v674
      %v680 = vrot.slane %v679, 4
      %v682 = vshll.u32 %v482, 16
      %v684 = vrot.slane %v682, 5
      %v685 = vsel %vm561, %v680, %v684
      %v686 = vshrl.u32 %v482, 16
      %v688 = vrot.slane %v686, 4
      %v689 = vor.u32 %v688, %v684
      %v690 = vrot.slane %v689, 4
      %v692 = vshll.u32 %v483, 16
      %v694 = vrot.slane %v692, 5
      %v695 = vsel %vm561, %v690, %v694
      %v696 = vshrl.u32 %v483, 16
      %v698 = vrot.slane %v696, 4
      %v699 = vor.u32 %v698, %v694
      %v700 = vrot.slane %v699, 4
      %v702 = vshll.u32 %v484, 16
      %v704 = vrot.slane %v702, 5
      %v705 = vsel %vm561, %v700, %v704
      %v706 = vshrl.u32 %v484, 16
      %v708 = vrot.slane %v706, 4
      %v709 = vor.u32 %v708, %v704
      %v710 = vrot.slane %v709, 4
      %v712 = vshll.u32 %v485, 16
      %v714 = vrot.slane %v712, 5
      %v715 = vsel %vm561, %v710, %v714
      %v716 = vshrl.u32 %v485, 16
      %v718 = vrot.slane %v716, 4
      %v719 = vor.u32 %v718, %v714
      %v720 = vrot.slane %v719, 4
      %v722 = vshll.u32 %v486, 16
      %v724 = vrot.slane %v722, 5
      %v725 = vsel %vm561, %v720, %v724
      %v726 = vshrl.u32 %v486, 16
      %v728 = vrot.slane %v726, 4
      %v729 = vor.u32 %v728, %v724
      %v730 = vrot.slane %v729, 4
      %v732 = vshll.u32 %v487, 16
      %v734 = vrot.slane %v732, 5
      %v735 = vsel %vm561, %v730, %v734
      %v736 = vshrl.u32 %v487, 16
      %v738 = vrot.slane %v736, 4
      %v739 = vor.u32 %v738, %v734
      %v740 = vrot.slane %v739, 4
      %v742 = vshll.u32 %v488, 16
      %v744 = vrot.slane %v742, 5
      %v745 = vsel %vm561, %v740, %v744
      %v746 = vshrl.u32 %v488, 16
      %v748 = vrot.slane %v746, 4
      %v749 = vor.u32 %v748, %v744
      %v750 = vrot.slane %v749, 4
      %v752 = vshll.u32 %v489, 16
      %v754 = vrot.slane %v752, 5
      %v755 = vsel %vm561, %v750, %v754
      %v756 = vshrl.u32 %v489, 16
      %v758 = vrot.slane %v756, 4
      %v759 = vor.u32 %v758, %v754
      %v760 = vrot.slane %v759, 4
      %v762 = vshll.u32 %v490, 16
      %v764 = vrot.slane %v762, 5
      %v765 = vsel %vm561, %v760, %v764
      %v766 = vshrl.u32 %v490, 16
      %v768 = vrot.slane %v766, 4
      %v769 = vor.u32 %v768, %v764
      %v770 = vrot.slane %v769, 4
      %v772 = vshll.u32 %v491, 16
      %v774 = vrot.slane %v772, 5
      %v775 = vsel %vm561, %v770, %v774
      %v776 = vshrl.u32 %v491, 16
      %v778 = vrot.slane %v776, 4
      %v779 = vor.u32 %v778, %v774
      %v780 = vrot.slane %v779, 4
      %v782 = vshll.u32 %v492, 16
      %v784 = vrot.slane %v782, 5
      %v785 = vsel %vm561, %v780, %v784
      %v786 = vshrl.u32 %v492, 16
      %v788 = vrot.slane %v786, 4
      %v789 = vor.u32 %v788, %v784
      %v790 = vrot.slane %v789, 4
      %v792 = vshll.u32 %v493, 16
      %v794 = vrot.slane %v792, 5
      %v795 = vsel %vm561, %v790, %v794
      %v796 = vshrl.u32 %v493, 16
      %v798 = vrot.slane %v796, 4
      %v799 = vor.u32 %v798, %v794
      %v800 = vrot.slane %v799, 4
      %v802 = vshll.u32 %v494, 16
      %v804 = vrot.slane %v802, 5
      %v805 = vsel %vm561, %v800, %v804
      %v806 = vshrl.u32 %v494, 16
      %v808 = vrot.slane %v806, 4
      %v809 = vor.u32 %v808, %v804
      %v810 = vrot.slane %v809, 4
      %v812 = vshll.u32 %v495, 16
      %v814 = vrot.slane %v812, 5
      %v815 = vsel %vm561, %v810, %v814
      %v816 = vshrl.u32 %v495, 16
      %v818 = vrot.slane %v816, 4
      %v819 = vor.u32 %v818, %v814
      %v820 = vrot.slane %v819, 4
      %v822 = vshll.u32 %v496, 16
      %v824 = vrot.slane %v822, 5
      %v825 = vsel %vm561, %v820, %v824
      %v826 = vshrl.u32 %v496, 16
      %v828 = vrot.slane %v826, 4
      %v829 = vor.u32 %v828, %v824
      %v830 = vrot.slane %v829, 4
      %v832 = vshll.u32 %v497, 16
      %v834 = vrot.slane %v832, 5
      %v835 = vsel %vm561, %v830, %v834
      %v836 = vshrl.u32 %v497, 16
      %v838 = vrot.slane %v836, 4
      %v839 = vor.u32 %v838, %v834
      %v840 = vrot.slane %v839, 4
      %v842 = vshll.u32 %v498, 16
      %v844 = vrot.slane %v842, 5
      %v845 = vsel %vm561, %v840, %v844
      %v846 = vshrl.u32 %v498, 16
      %v848 = vrot.slane %v846, 4
      %v849 = vor.u32 %v848, %v844
      %v850 = vrot.slane %v849, 4
      %v852 = vshll.u32 %v499, 16
      %v854 = vrot.slane %v852, 5
      %v855 = vsel %vm561, %v850, %v854
      %v856 = vshrl.u32 %v499, 16
      %v858 = vrot.slane %v856, 4
      %v859 = vor.u32 %v858, %v854
      %v860 = vrot.slane %v859, 4
      %v862 = vshll.u32 %v500, 16
      %v864 = vrot.slane %v862, 5
      %v865 = vsel %vm561, %v860, %v864
      %v866 = vshrl.u32 %v500, 16
      %v868 = vrot.slane %v866, 4
      %v869 = vor.u32 %v868, %v864
      %v870 = vrot.slane %v869, 4
      %v872 = vshll.u32 %v501, 16
      %v874 = vrot.slane %v872, 5
      %v875 = vsel %vm561, %v870, %v874
      %v876 = vshrl.u32 %v501, 16
      %v878 = vrot.slane %v876, 4
      %v879 = vor.u32 %v878, %v874
      %v880 = vrot.slane %v879, 4
      %v882 = vshll.u32 %v502, 16
      %v884 = vrot.slane %v882, 5
      %v885 = vsel %vm561, %v880, %v884
      %v886 = vshrl.u32 %v502, 16
      %v888 = vrot.slane %v886, 4
      %v889 = vor.u32 %v888, %v884
      %v890 = vrot.slane %v889, 4
      %v892 = vshll.u32 %v503, 16
      %v894 = vrot.slane %v892, 5
      %v895 = vsel %vm561, %v890, %v894
      %v896 = vshrl.u32 %v503, 16
      %v898 = vrot.slane %v896, 4
      %v899 = vor.u32 %v898, %v894
      %v900 = vrot.slane %v899, 4
      %v902 = vshll.u32 %v504, 16
      %v904 = vrot.slane %v902, 5
      %v905 = vsel %vm561, %v900, %v904
      %v906 = vshrl.u32 %v504, 16
      %v908 = vrot.slane %v906, 4
      %v909 = vor.u32 %v908, %v904
      %v910 = vrot.slane %v909, 4
      %v912 = vshll.u32 %v505, 16
      %v914 = vrot.slane %v912, 5
      %v915 = vsel %vm561, %v910, %v914
      %v916 = vshrl.u32 %v505, 16
      %v918 = vrot.slane %v916, 4
      %v919 = vor.u32 %v918, %v914
      %v920 = vrot.slane %v919, 4
      %v922 = vshll.u32 %v506, 16
      %v924 = vrot.slane %v922, 5
      %v925 = vsel %vm561, %v920, %v924
      %v926 = vshrl.u32 %v506, 16
      %v928 = vrot.slane %v926, 4
      %v929 = vor.u32 %v928, %v924
      %v930 = vrot.slane %v929, 4
      %v932 = vshll.u32 %v507, 16
      %v934 = vrot.slane %v932, 5
      %v935 = vsel %vm561, %v930, %v934
      %v936 = vshrl.u32 %v507, 16
      %v938 = vrot.slane %v936, 4
      %v939 = vor.u32 %v938, %v934
      %v940 = vrot.slane %v939, 4
      %v942 = vshll.u32 %v508, 16
      %v944 = vrot.slane %v942, 5
      %v945 = vsel %vm561, %v940, %v944
      %v946 = vshrl.u32 %v508, 16
      %v948 = vrot.slane %v946, 4
      %v949 = vor.u32 %v948, %v944
      %v950 = vrot.slane %v949, 4
      %v952 = vshll.u32 %v509, 16
      %v954 = vrot.slane %v952, 5
      %v955 = vsel %vm561, %v950, %v954
      %v956 = vshrl.u32 %v509, 16
      %v958 = vrot.slane %v956, 4
      %v959 = vor.u32 %v958, %v954
      %v960 = vrot.slane %v959, 4
      %v962 = vshll.u32 %v510, 16
      %v964 = vrot.slane %v962, 5
      %v965 = vsel %vm561, %v960, %v964
      %v966 = vshrl.u32 %v510, 16
      %v968 = vrot.slane %v966, 4
      %v969 = vor.u32 %v968, %v964
      %v970 = vrot.slane %v969, 4
      %v972 = vshll.u32 %v511, 16
      %v974 = vrot.slane %v972, 5
      %v975 = vsel %vm561, %v970, %v974
      %v976 = vshrl.u32 %v511, 16
      %v978 = vrot.slane %v976, 4
      %v979 = vor.u32 %v978, %v974
      %v980 = vrot.slane %v979, 4
      %v982 = vshll.u32 %v512, 16
      %v984 = vrot.slane %v982, 5
      %v985 = vsel %vm561, %v980, %v984
      %v986 = vshrl.u32 %v512, 16
      %v988 = vrot.slane %v986, 4
      %v989 = vor.u32 %v988, %v984
      %v990 = vrot.slane %v989, 4
      %v992 = vshll.u32 %v513, 16
      %v994 = vrot.slane %v992, 5
      %v995 = vsel %vm561, %v990, %v994
      %v996 = vshrl.u32 %v513, 16
      %v998 = vrot.slane %v996, 4
      %v999 = vor.u32 %v998, %v994
      %v1000 = vrot.slane %v999, 4
      %v1002 = vshll.u32 %v514, 16
      %v1004 = vrot.slane %v1002, 5
      %v1005 = vsel %vm561, %v1000, %v1004
      %v1006 = vshrl.u32 %v514, 16
      %v1008 = vrot.slane %v1006, 4
      %v1009 = vor.u32 %v1008, %v1004
      %v1010 = vrot.slane %v1009, 4
      %v1012 = vshll.u32 %v515, 16
      %v1014 = vrot.slane %v1012, 5
      %v1015 = vsel %vm561, %v1010, %v1014
      %v1016 = vshrl.u32 %v515, 16
      %v1018 = vrot.slane %v1016, 4
      %v1019 = vor.u32 %v1018, %v1014
      %v1020 = vrot.slane %v1019, 4
      %v1022 = vshll.u32 %v516, 16
      %v1024 = vrot.slane %v1022, 5
      %v1025 = vsel %vm561, %v1020, %v1024
      %v1026 = vshrl.u32 %v516, 16
      %v1028 = vrot.slane %v1026, 4
      %v1029 = vor.u32 %v1028, %v1024
      %v1030 = vrot.slane %v1029, 4
      %v1032 = vshll.u32 %v517, 16
      %v1034 = vrot.slane %v1032, 5
      %v1035 = vsel %vm561, %v1030, %v1034
      %v1036 = vshrl.u32 %v517, 16
      %v1038 = vrot.slane %v1036, 4
      %v1039 = vor.u32 %v1038, %v1034
      %v1040 = vrot.slane %v1039, 4
      %v1042 = vshll.u32 %v518, 16
      %v1044 = vrot.slane %v1042, 5
      %v1045 = vsel %vm561, %v1040, %v1044
      %v1046 = vshrl.u32 %v518, 16
      %v1048 = vrot.slane %v1046, 4
      %v1049 = vor.u32 %v1048, %v1044
      %v1050 = vrot.slane %v1049, 4
      %v1052 = vshll.u32 %v519, 16
      %v1054 = vrot.slane %v1052, 5
      %v1055 = vsel %vm561, %v1050, %v1054
      %v1056 = vshrl.u32 %v519, 16
      %v1058 = vrot.slane %v1056, 4
      %v1059 = vor.u32 %v1058, %v1054
      %v1060 = vrot.slane %v1059, 4
      %v1062 = vshll.u32 %v520, 16
      %v1064 = vrot.slane %v1062, 5
      %v1065 = vsel %vm561, %v1060, %v1064
      %v1066 = vshrl.u32 %v520, 16
      %v1068 = vrot.slane %v1066, 4
      %v1069 = vor.u32 %v1068, %v1064
      %v1070 = vrot.slane %v1069, 4
      %v1072 = vshll.u32 %v521, 16
      %v1074 = vrot.slane %v1072, 5
      %v1075 = vsel %vm561, %v1070, %v1074
      %v1076 = vshrl.u32 %v521, 16
      %v1078 = vrot.slane %v1076, 4
      %v1079 = vor.u32 %v1078, %v1074
      %v1080 = vrot.slane %v1079, 4
      %v1082 = vshll.u32 %v522, 16
      %v1084 = vrot.slane %v1082, 5
      %v1085 = vsel %vm561, %v1080, %v1084
      %v1086 = vshrl.u32 %v522, 16
      %v1088 = vrot.slane %v1086, 4
      %v1089 = vor.u32 %v1088, %v1084
      %v1090 = vrot.slane %v1089, 4
      %v1092 = vshll.u32 %v523, 16
      %v1094 = vrot.slane %v1092, 5
      %v1095 = vsel %vm561, %v1090, %v1094
      %v1096 = vshrl.u32 %v523, 16
      %v1098 = vrot.slane %v1096, 4
      %v1099 = vor.u32 %v1098, %v1094
      %v1100 = vrot.slane %v1099, 4
      %v1102 = vshll.u32 %v524, 16
      %v1104 = vrot.slane %v1102, 5
      %v1105 = vsel %vm561, %v1100, %v1104
      %v1106 = vshrl.u32 %v524, 16
      %v1108 = vrot.slane %v1106, 4
      %v1109 = vor.u32 %v1108, %v1104
      %v1110 = vrot.slane %v1109, 4
      %v1112 = vshll.u32 %v525, 16
      %v1114 = vrot.slane %v1112, 5
      %v1115 = vsel %vm561, %v1110, %v1114
      %v1116 = vshrl.u32 %v525, 16
      %v1118 = vrot.slane %v1116, 4
      %v1119 = vor.u32 %v1118, %v1114
      %v1120 = vrot.slane %v1119, 4
      %v1122 = vshll.u32 %v526, 16
      %v1124 = vrot.slane %v1122, 5
      %v1125 = vsel %vm561, %v1120, %v1124
      %v1126 = vshrl.u32 %v526, 16
      %v1128 = vrot.slane %v1126, 4
      %v1129 = vor.u32 %v1128, %v1124
      %v1130 = vrot.slane %v1129, 4
      %v1132 = vshll.u32 %v527, 16
      %v1134 = vrot.slane %v1132, 5
      %v1135 = vsel %vm561, %v1130, %v1134
      %v1136 = vshrl.u32 %v527, 16
      %v1138 = vrot.slane %v1136, 4
      %v1139 = vor.u32 %v1138, %v1134
      %v1140 = vrot.slane %v1139, 4
      %v1142 = vshll.u32 %v528, 16
      %v1144 = vrot.slane %v1142, 5
      %v1145 = vsel %vm561, %v1140, %v1144
      %v1146 = vshrl.u32 %v528, 16
      %v1148 = vrot.slane %v1146, 4
      %v1149 = vor.u32 %v1148, %v1144
      %v1150 = vrot.slane %v1149, 4
      %v1152 = vshll.u32 %v529, 16
      %v1154 = vrot.slane %v1152, 5
      %v1155 = vsel %vm561, %v1150, %v1154
      %v1156 = vshrl.u32 %v529, 16
      %v1158 = vrot.slane %v1156, 4
      %v1159 = vor.u32 %v1158, %v1154
      %v1160 = vrot.slane %v1159, 4
      %v1162 = vshll.u32 %v530, 16
      %v1164 = vrot.slane %v1162, 5
      %v1165 = vsel %vm561, %v1160, %v1164
      %v1166 = vshrl.u32 %v530, 16
      %v1168 = vrot.slane %v1166, 4
      %v1169 = vor.u32 %v1168, %v1164
      %v1170 = vrot.slane %v1169, 4
      %v1172 = vshll.u32 %v531, 16
      %v1174 = vrot.slane %v1172, 5
      %v1175 = vsel %vm561, %v1170, %v1174
      %v1176 = vshrl.u32 %v531, 16
      %v1178 = vrot.slane %v1176, 4
      %v1179 = vor.u32 %v1178, %v1174
      %v1180 = vrot.slane %v1179, 4
      %v1182 = vshll.u32 %v532, 16
      %v1184 = vrot.slane %v1182, 5
      %v1185 = vsel %vm561, %v1180, %v1184
      %v1186 = vshrl.u32 %v532, 16
      %v1188 = vrot.slane %v1186, 4
      %v1189 = vor.u32 %v1188, %v1184
      %v1190 = vrot.slane %v1189, 4
      %v1192 = vshll.u32 %v533, 16
      %v1194 = vrot.slane %v1192, 5
      %v1195 = vsel %vm561, %v1190, %v1194
      %v1196 = vshrl.u32 %v533, 16
      %v1198 = vrot.slane %v1196, 4
      %v1199 = vor.u32 %v1198, %v1194
      %v1200 = vrot.slane %v1199, 4
      %v1202 = vshll.u32 %v534, 16
      %v1204 = vrot.slane %v1202, 5
      %v1205 = vsel %vm561, %v1200, %v1204
      %v1206 = vshrl.u32 %v534, 16
      %v1208 = vrot.slane %v1206, 4
      %v1209 = vor.u32 %v1208, %v1204
      %v1210 = vrot.slane %v1209, 4
      %v1212 = vshll.u32 %v535, 16
      %v1214 = vrot.slane %v1212, 5
      %v1215 = vsel %vm561, %v1210, %v1214
      %v1216 = vshrl.u32 %v535, 16
      %v1218 = vrot.slane %v1216, 4
      %v1219 = vor.u32 %v1218, %v1214
      %v1220 = vrot.slane %v1219, 4
      %v1222 = vshll.u32 %v536, 16
      %v1224 = vrot.slane %v1222, 5
      %v1225 = vsel %vm561, %v1220, %v1224
      %v1226 = vshrl.u32 %v536, 16
      %v1228 = vrot.slane %v1226, 4
      %v1229 = vor.u32 %v1228, %v1224
      %v1230 = vrot.slane %v1229, 4
      %v1232 = vshll.u32 %v537, 16
      %v1234 = vrot.slane %v1232, 5
      %v1235 = vsel %vm561, %v1230, %v1234
      %v1236 = vshrl.u32 %v537, 16
      %v1238 = vrot.slane %v1236, 4
      %v1239 = vor.u32 %v1238, %v1234
      %v1240 = vrot.slane %v1239, 4
      %v1242 = vshll.u32 %v538, 16
      %v1244 = vrot.slane %v1242, 5
      %v1245 = vsel %vm561, %v1240, %v1244
      %v1246 = vshrl.u32 %v538, 16
      %v1248 = vrot.slane %v1246, 4
      %v1249 = vor.u32 %v1248, %v1244
      %v1250 = vrot.slane %v1249, 4
      %v1252 = vshll.u32 %v539, 16
      %v1254 = vrot.slane %v1252, 5
      %v1255 = vsel %vm561, %v1250, %v1254
      %v1256 = vshrl.u32 %v539, 16
      %v1258 = vrot.slane %v1256, 4
      %v1259 = vor.u32 %v1258, %v1254
      %v1260 = vrot.slane %v1259, 4
      %v1262 = vshll.u32 %v540, 16
      %v1264 = vrot.slane %v1262, 5
      %v1265 = vsel %vm561, %v1260, %v1264
      %v1266 = vshrl.u32 %v540, 16
      %v1268 = vrot.slane %v1266, 4
      %v1269 = vor.u32 %v1268, %v1264
      %v1270 = vrot.slane %v1269, 4
      %v1272 = vshll.u32 %v541, 16
      %v1274 = vrot.slane %v1272, 5
      %v1275 = vsel %vm561, %v1270, %v1274
      %v1276 = vshrl.u32 %v541, 16
      %v1278 = vrot.slane %v1276, 4
      %v1279 = vor.u32 %v1278, %v1274
      %v1280 = vrot.slane %v1279, 4
      %v1282 = vshll.u32 %v542, 16
      %v1284 = vrot.slane %v1282, 5
      %v1285 = vsel %vm561, %v1280, %v1284
      %v1286 = vshrl.u32 %v542, 16
      %v1288 = vrot.slane %v1286, 4
      %v1289 = vor.u32 %v1288, %v1284
      %v1290 = vrot.slane %v1289, 4
      %v1292 = vshll.u32 %v543, 16
      %v1294 = vrot.slane %v1292, 5
      %v1295 = vsel %vm561, %v1290, %v1294
      %v1296 = vshrl.u32 %v543, 16
      %v1298 = vrot.slane %v1296, 4
      %v1299 = vor.u32 %v1298, %v1294
      %v1300 = vrot.slane %v1299, 4
      %v1302 = vshll.u32 %v544, 16
      %v1304 = vrot.slane %v1302, 5
      %v1305 = vsel %vm561, %v1300, %v1304
      %v1306 = vshrl.u32 %v544, 16
      %v1308 = vrot.slane %v1306, 4
      %v1309 = vor.u32 %v1308, %v1304
      %v1310 = vrot.slane %v1309, 4
      %v1312 = vshll.u32 %v545, 16
      %v1314 = vrot.slane %v1312, 5
      %v1315 = vsel %vm561, %v1310, %v1314
      %v1316 = vshrl.u32 %v545, 16
      %v1318 = vrot.slane %v1316, 4
      %v1319 = vor.u32 %v1318, %v1314
      %v1320 = vrot.slane %v1319, 4
      %v1322 = vshll.u32 %v546, 16
      %v1324 = vrot.slane %v1322, 5
      %v1325 = vsel %vm561, %v1320, %v1324
      %v1326 = vshrl.u32 %v546, 16
      %v1328 = vrot.slane %v1326, 4
      %v1329 = vor.u32 %v1328, %v1324
      %v1330 = vrot.slane %v1329, 4
      %v1332 = vshll.u32 %v547, 16
      %v1334 = vrot.slane %v1332, 5
      %v1335 = vsel %vm561, %v1330, %v1334
      %v1336 = vshrl.u32 %v547, 16
      %v1338 = vrot.slane %v1336, 4
      %v1339 = vor.u32 %v1338, %v1334
      %v1340 = vrot.slane %v1339, 4
      %v1342 = vshll.u32 %v548, 16
      %v1344 = vrot.slane %v1342, 5
      %v1345 = vsel %vm561, %v1340, %v1344
      %v1346 = vshrl.u32 %v548, 16
      %v1348 = vrot.slane %v1346, 4
      %v1349 = vor.u32 %v1348, %v1344
      %v1350 = vrot.slane %v1349, 4
      %v1352 = vshll.u32 %v549, 16
      %v1354 = vrot.slane %v1352, 5
      %v1355 = vsel %vm561, %v1350, %v1354
      %v1356 = vshrl.u32 %v549, 16
      %v1358 = vrot.slane %v1356, 4
      %v1359 = vor.u32 %v1358, %v1354
      %v1360 = vrot.slane %v1359, 4
      %v1362 = vshll.u32 %v550, 16
      %v1364 = vrot.slane %v1362, 5
      %v1365 = vsel %vm561, %v1360, %v1364
      %v1366 = vshrl.u32 %v550, 16
      %v1368 = vrot.slane %v1366, 4
      %v1369 = vor.u32 %v1368, %v1364
      %v1370 = vrot.slane %v1369, 4
      %v1372 = vshll.u32 %v551, 16
      %v1374 = vrot.slane %v1372, 5
      %v1375 = vsel %vm561, %v1370, %v1374
      %v1376 = vshrl.u32 %v551, 16
      %v1378 = vrot.slane %v1376, 4
      %v1379 = vor.u32 %v1378, %v1374
      %v1380 = vrot.slane %v1379, 4
      %v1382 = vshll.u32 %v552, 16
      %v1384 = vrot.slane %v1382, 5
      %v1385 = vsel %vm561, %v1380, %v1384
      %v1386 = vshrl.u32 %v552, 16
      %v1388 = vrot.slane %v1386, 4
      %v1389 = vor.u32 %v1388, %v1384
      %v1390 = vrot.slane %v1389, 4
      %v1392 = vshll.u32 %v553, 16
      %v1394 = vrot.slane %v1392, 5
      %v1395 = vsel %vm561, %v1390, %v1394
      %v1396 = vshrl.u32 %v553, 16
      %v1398 = vrot.slane %v1396, 4
      %v1399 = vor.u32 %v1398, %v1394
      %v1400 = vrot.slane %v1399, 4
      %v1402 = vshll.u32 %v554, 16
      %v1404 = vrot.slane %v1402, 5
      %v1405 = vsel %vm561, %v1400, %v1404
      %v1406 = vshrl.u32 %v554, 16
      %v1408 = vrot.slane %v1406, 4
      %v1409 = vor.u32 %v1408, %v1404
      %v1410 = vrot.slane %v1409, 4
      %v1412 = vshll.u32 %v555, 16
      %v1414 = vrot.slane %v1412, 5
      %v1415 = vsel %vm561, %v1410, %v1414
      %v1416 = vshrl.u32 %v555, 16
      %v1418 = vrot.slane %v1416, 4
      %v1419 = vor.u32 %v1418, %v1414
      %v1420 = vrot.slane %v1419, 4
      %v1422 = vshll.u32 %v556, 16
      %v1424 = vrot.slane %v1422, 5
      %v1425 = vsel %vm561, %v1420, %v1424
      %v1426 = vshrl.u32 %v556, 16
      %v1428 = vrot.slane %v1426, 4
      %v1429 = vor.u32 %v1428, %v1424
      %v1430 = vrot.slane %v1429, 4
      %v1432 = vshll.u32 %v557, 16
      %v1434 = vrot.slane %v1432, 5
      %v1435 = vsel %vm561, %v1430, %v1434
      %v1436 = vshrl.u32 %v557, 16
      %v1438 = vrot.slane %v1436, 4
      %v1439 = vor.u32 %v1438, %v1434
      %v1440 = vrot.slane %v1439, 4
      %v1442 = vshll.u32 %v558, 16
      %v1444 = vrot.slane %v1442, 5
      %v1445 = vsel %vm561, %v1440, %v1444
      %1534 = vst [vmem:[#allocation2 + $0x4] sm:$0xf] %v575
      %1535 = vst [vmem:[#allocation2 + $0x10] sm:$0xf] %v585
      %1536 = vst [vmem:[#allocation2 + $0x1c] sm:$0xf] %v595
      %1537 = vst [vmem:[#allocation2 + $0x28] sm:$0xf] %v605
      %1538 = vst [vmem:[#allocation2 + $0x34] sm:$0xf] %v615
      %1539 = vst [vmem:[#allocation2 + $0x40] sm:$0xf] %v625
      %1540 = vst [vmem:[#allocation2 + $0x4c] sm:$0xf] %v635
      %1541 = vst [vmem:[#allocation2 + $0x58] sm:$0xf] %v645
      %1542 = vst [vmem:[#allocation2 + $0x64] sm:$0xf] %v655
      %1543 = vst [vmem:[#allocation2 + $0x70] sm:$0xf] %v665
      %1544 = vst [vmem:[#allocation2 + $0x7c] sm:$0xf] %v675
      %1545 = vst [vmem:[#allocation2 + $0x88] sm:$0xf] %v685
      %1546 = vst [vmem:[#allocation2 + $0x94] sm:$0xf] %v695
      %1547 = vst [vmem:[#allocation2 + $0xa0] sm:$0xf] %v705
      %1548 = vst [vmem:[#allocation2 + $0xac] sm:$0xf] %v715
      %1549 = vst [vmem:[#allocation2 + $0xb8] sm:$0xf] %v725
      %1550 = vst [vmem:[#allocation2 + $0xc4] sm:$0xf] %v735
      %1551 = vst [vmem:[#allocation2 + $0xd0] sm:$0xf] %v745
      %1552 = vst [vmem:[#allocation2 + $0xdc] sm:$0xf] %v755
      %1553 = vst [vmem:[#allocation2 + $0xe8] sm:$0xf] %v765
      %1554 = vst [vmem:[#allocation2 + $0xf4] sm:$0xf] %v775
      %1555 = vst [vmem:[#allocation2 + $0x100] sm:$0xf] %v785
      %1556 = vst [vmem:[#allocation2 + $0x10c] sm:$0xf] %v795
      %1557 = vst [vmem:[#allocation2 + $0x118] sm:$0xf] %v805
      %1558 = vst [vmem:[#allocation2 + $0x124] sm:$0xf] %v815
      %1559 = vst [vmem:[#allocation2 + $0x130] sm:$0xf] %v825
      %1560 = vst [vmem:[#allocation2 + $0x13c] sm:$0xf] %v835
      %1561 = vst [vmem:[#allocation2 + $0x148] sm:$0xf] %v845
      %1562 = vst [vmem:[#allocation2 + $0x154] sm:$0xf] %v855
      %1563 = vst [vmem:[#allocation2 + $0x160] sm:$0xf] %v865
      %1564 = vst [vmem:[#allocation2 + $0x16c] sm:$0xf] %v875
      %1565 = vst [vmem:[#allocation2 + $0x178] sm:$0xf] %v885
      %1566 = vst [vmem:[#allocation2 + $0x184] sm:$0xf] %v895
      %1567 = vst [vmem:[#allocation2 + $0x190] sm:$0xf] %v905
      %1568 = vst [vmem:[#allocation2 + $0x19c] sm:$0xf] %v915
      %1569 = vst [vmem:[#allocation2 + $0x1a8] sm:$0xf] %v925
      %1570 = vst [vmem:[#allocation2 + $0x1b4] sm:$0xf] %v935
      %1571 = vst [vmem:[#allocation2 + $0x1c0] sm:$0xf] %v945
      %1572 = vst [vmem:[#allocation2 + $0x1cc] sm:$0xf] %v955
      %1573 = vst [vmem:[#allocation2 + $0x1d8] sm:$0xf] %v965
      %1574 = vst [vmem:[#allocation2 + $0x1e4] sm:$0xf] %v975
      %1575 = vst [vmem:[#allocation2 + $0x1f0] sm:$0xf] %v985
      %1576 = vst [vmem:[#allocation2 + $0x1fc] sm:$0xf] %v995
      %1577 = vst [vmem:[#allocation2 + $0x208] sm:$0xf] %v1005
      %1578 = vst [vmem:[#allocation2 + $0x214] sm:$0xf] %v1015
      %1579 = vst [vmem:[#allocation2 + $0x220] sm:$0xf] %v1025
      %1580 = vst [vmem:[#allocation2 + $0x22c] sm:$0xf] %v1035
      %1581 = vst [vmem:[#allocation2 + $0x238] sm:$0xf] %v1045
      %1582 = vst [vmem:[#allocation2 + $0x244] sm:$0xf] %v1055
      %1583 = vst [vmem:[#allocation2 + $0x250] sm:$0xf] %v1065
      %1584 = vst [vmem:[#allocation2 + $0x25c] sm:$0xf] %v1075
      %1585 = vst [vmem:[#allocation2 + $0x268] sm:$0xf] %v1085
      %1586 = vst [vmem:[#allocation2 + $0x274] sm:$0xf] %v1095
      %1587 = vst [vmem:[#allocation2 + $0x280] sm:$0xf] %v1105
      %1588 = vst [vmem:[#allocation2 + $0x28c] sm:$0xf] %v1115
      %1589 = vst [vmem:[#allocation2 + $0x298] sm:$0xf] %v1125
      %1590 = vst [vmem:[#allocation2 + $0x2a4] sm:$0xf] %v1135
      %1591 = vst [vmem:[#allocation2 + $0x2b0] sm:$0xf] %v1145
      %1592 = vst [vmem:[#allocation2 + $0x2bc] sm:$0xf] %v1155
      %1593 = vst [vmem:[#allocation2 + $0x2c8] sm:$0xf] %v1165
      %1594 = vst [vmem:[#allocation2 + $0x2d4] sm:$0xf] %v1175
      %1595 = vst [vmem:[#allocation2 + $0x2e0] sm:$0xf] %v1185
      %1596 = vst [vmem:[#allocation2 + $0x2ec] sm:$0xf] %v1195
      %1597 = vst [vmem:[#allocation2 + $0x2f8] sm:$0xf] %v1205
      %1598 = vst [vmem:[#allocation2 + $0x304] sm:$0xf] %v1215
      %1599 = vst [vmem:[#allocation2 + $0x310] sm:$0xf] %v1225
      %1600 = vst [vmem:[#allocation2 + $0x31c] sm:$0xf] %v1235
      %1601 = vst [vmem:[#allocation2 + $0x328] sm:$0xf] %v1245
      %1602 = vst [vmem:[#allocation2 + $0x334] sm:$0xf] %v1255
      %1603 = vst [vmem:[#allocation2 + $0x340] sm:$0xf] %v1265
      %1604 = vst [vmem:[#allocation2 + $0x34c] sm:$0xf] %v1275
      %1605 = vst [vmem:[#allocation2 + $0x358] sm:$0xf] %v1285
      %1606 = vst [vmem:[#allocation2 + $0x364] sm:$0xf] %v1295
      %1607 = vst [vmem:[#allocation2 + $0x370] sm:$0xf] %v1305
      %1608 = vst [vmem:[#allocation2 + $0x37c] sm:$0xf] %v1315
      %1609 = vst [vmem:[#allocation2 + $0x388] sm:$0xf] %v1325
      %1610 = vst [vmem:[#allocation2 + $0x394] sm:$0xf] %v1335
      %1611 = vst [vmem:[#allocation2 + $0x3a0] sm:$0xf] %v1345
      %1612 = vst [vmem:[#allocation2 + $0x3ac] sm:$0xf] %v1355
      %1613 = vst [vmem:[#allocation2 + $0x3b8] sm:$0xf] %v1365
      %1614 = vst [vmem:[#allocation2 + $0x3c4] sm:$0xf] %v1375
      %1615 = vst [vmem:[#allocation2 + $0x3d0] sm:$0xf] %v1385
      %1616 = vst [vmem:[#allocation2 + $0x3dc] sm:$0xf] %v1395
      %1617 = vst [vmem:[#allocation2 + $0x3e8] sm:$0xf] %v1405
      %1618 = vst [vmem:[#allocation2 + $0x3f4] sm:$0xf] %v1415
      %1619 = vst [vmem:[#allocation2 + $0x400] sm:$0xf] %v1425
      %1620 = vst [vmem:[#allocation2 + $0x40c] sm:$0xf] %v1435
      %1621 = vst [vmem:[#allocation2 + $0x418] sm:$0xf] %v1445
      %v1622 = vld [vmem:[%s279] sm:$0xe]
      %v1623 = vld [vmem:[%s279 + $0x4] sm:$0xf]
      %v1624 = vld [vmem:[%s279 + $0x8] sm:$0xf]
      %v1625 = vld [vmem:[%s279 + $0xc] sm:$0xf]
      %v1626 = vld [vmem:[%s279 + $0x10] sm:$0xf]
      %v1627 = vld [vmem:[%s279 + $0x14] sm:$0xf]
      %v1628 = vld [vmem:[%s279 + $0x18] sm:$0xf]
      %v1629 = vld [vmem:[%s279 + $0x1c] sm:$0xf]
      %v1630 = vld [vmem:[%s279 + $0x20] sm:$0xf]
      %v1631 = vld [vmem:[%s279 + $0x24] sm:$0xf]
      %v1632 = vld [vmem:[%s279 + $0x28] sm:$0xf]
      %v1633 = vld [vmem:[%s279 + $0x2c] sm:$0xf]
      %v1634 = vld [vmem:[%s279 + $0x30] sm:$0xf]
      %v1635 = vld [vmem:[%s279 + $0x34] sm:$0xf]
      %v1636 = vld [vmem:[%s279 + $0x38] sm:$0xf]
      %v1637 = vld [vmem:[%s279 + $0x3c] sm:$0xf]
      %v1638 = vld [vmem:[%s279 + $0x40] sm:$0xf]
      %v1639 = vld [vmem:[%s279 + $0x44] sm:$0xf]
      %v1640 = vld [vmem:[%s279 + $0x48] sm:$0xf]
      %v1641 = vld [vmem:[%s279 + $0x4c] sm:$0xf]
      %v1642 = vld [vmem:[%s279 + $0x50] sm:$0xf]
      %v1643 = vld [vmem:[%s279 + $0x54] sm:$0xf]
      %v1644 = vld [vmem:[%s279 + $0x58] sm:$0xf]
      %v1645 = vld [vmem:[%s279 + $0x5c] sm:$0xf]
      %v1646 = vld [vmem:[%s279 + $0x60] sm:$0xf]
      %v1647 = vld [vmem:[%s279 + $0x64] sm:$0xf]
      %v1648 = vld [vmem:[%s279 + $0x68] sm:$0xf]
      %v1649 = vld [vmem:[%s279 + $0x6c] sm:$0xf]
      %v1650 = vld [vmem:[%s279 + $0x70] sm:$0xf]
      %v1651 = vld [vmem:[%s279 + $0x74] sm:$0xf]
      %v1652 = vld [vmem:[%s279 + $0x78] sm:$0xf]
      %v1653 = vld [vmem:[%s279 + $0x7c] sm:$0xf]
      %v1654 = vld [vmem:[%s279 + $0x80] sm:$0xf]
      %v1655 = vld [vmem:[%s279 + $0x84] sm:$0xf]
      %v1656 = vld [vmem:[%s279 + $0x88] sm:$0xf]
      %v1657 = vld [vmem:[%s279 + $0x8c] sm:$0xf]
      %v1658 = vld [vmem:[%s279 + $0x90] sm:$0xf]
      %v1659 = vld [vmem:[%s279 + $0x94] sm:$0xf]
      %v1660 = vld [vmem:[%s279 + $0x98] sm:$0xf]
      %v1661 = vld [vmem:[%s279 + $0x9c] sm:$0xf]
      %v1662 = vld [vmem:[%s279 + $0xa0] sm:$0xf]
      %v1663 = vld [vmem:[%s279 + $0xa4] sm:$0xf]
      %v1664 = vld [vmem:[%s279 + $0xa8] sm:$0xf]
      %v1665 = vld [vmem:[%s279 + $0xac] sm:$0xf]
      %v1666 = vld [vmem:[%s279 + $0xb0] sm:$0xf]
      %v1667 = vld [vmem:[%s279 + $0xb4] sm:$0xf]
      %v1668 = vld [vmem:[%s279 + $0xb8] sm:$0xf]
      %v1669 = vld [vmem:[%s279 + $0xbc] sm:$0xf]
      %v1670 = vld [vmem:[%s279 + $0xc0] sm:$0xf]
      %v1671 = vld [vmem:[%s279 + $0xc4] sm:$0xf]
      %v1672 = vld [vmem:[%s279 + $0xc8] sm:$0xf]
      %v1673 = vld [vmem:[%s279 + $0xcc] sm:$0xf]
      %v1674 = vld [vmem:[%s279 + $0xd0] sm:$0xf]
      %v1675 = vld [vmem:[%s279 + $0xd4] sm:$0xf]
      %v1676 = vld [vmem:[%s279 + $0xd8] sm:$0xf]
      %v1677 = vld [vmem:[%s279 + $0xdc] sm:$0xf]
      %v1678 = vld [vmem:[%s279 + $0xe0] sm:$0xf]
      %v1679 = vld [vmem:[%s279 + $0xe4] sm:$0xf]
      %v1680 = vld [vmem:[%s279 + $0xe8] sm:$0xf]
      %v1681 = vld [vmem:[%s279 + $0xec] sm:$0xf]
      %v1682 = vld [vmem:[%s279 + $0xf0] sm:$0xf]
      %v1683 = vld [vmem:[%s279 + $0xf4] sm:$0xf]
      %v1684 = vld [vmem:[%s279 + $0xf8] sm:$0xf]
      %v1685 = vld [vmem:[%s279 + $0xfc] sm:$0xf]
      %v1686 = vld [vmem:[%s279 + $0x100] sm:$0xf]
      %v1687 = vld [vmem:[%s279 + $0x104] sm:$0xf]
      %v1688 = vld [vmem:[%s279 + $0x108] sm:$0xf]
      %v1689 = vld [vmem:[%s279 + $0x10c] sm:$0xf]
      %v1690 = vld [vmem:[%s279 + $0x110] sm:$0xf]
      %v1691 = vld [vmem:[%s279 + $0x114] sm:$0xf]
      %v1692 = vld [vmem:[%s279 + $0x118] sm:$0xf]
      %v1693 = vld [vmem:[%s279 + $0x11c] sm:$0xf]
      %v1694 = vld [vmem:[%s279 + $0x120] sm:$0xf]
      %v1695 = vld [vmem:[%s279 + $0x124] sm:$0xf]
      %v1696 = vld [vmem:[%s279 + $0x128] sm:$0xf]
      %v1697 = vld [vmem:[%s279 + $0x12c] sm:$0xf]
      %v1698 = vld [vmem:[%s279 + $0x130] sm:$0xf]
      %v1699 = vld [vmem:[%s279 + $0x134] sm:$0xf]
      %v1700 = vld [vmem:[%s279 + $0x138] sm:$0xf]
      %v1701 = vld [vmem:[%s279 + $0x13c] sm:$0xf]
      %v1702 = vld [vmem:[%s279 + $0x140] sm:$0xf]
      %v1703 = vld [vmem:[%s279 + $0x144] sm:$0xf]
      %v1704 = vld [vmem:[%s279 + $0x148] sm:$0xf]
      %v1705 = vld [vmem:[%s279 + $0x14c] sm:$0xf]
      %v1706 = vld [vmem:[%s279 + $0x150] sm:$0xf]
      %v1707 = vld [vmem:[%s279 + $0x154] sm:$0xf]
      %v1708 = vld [vmem:[%s279 + $0x158] sm:$0xf]
      %v1709 = vld [vmem:[%s279 + $0x15c] sm:$0xf]
      %v1710 = vld [vmem:[%s279 + $0x160] sm:$0x1]
      %vm1800 = vcmask 1042432
      %vm1801 = vcmask 1046532
      %vm1802 = vmor %vm1800, %vm1801
      %v1803 = vrot.slane %v1622, 5
      %v1804 = vrot.slane %v1803, 4
      %v1805 = vrot.slane %v1623, 5
      %v1806 = vsel %vm1802, %v1804, %v1805
      %v1807 = vrot.slane %v1805, 4
      %v1808 = vrot.slane %v1624, 5
      %v1809 = vsel %vm1802, %v1807, %v1808
      %v1810 = vrot.slane %v1808, 4
      %v1811 = vrot.slane %v1625, 5
      %v1812 = vsel %vm1802, %v1810, %v1811
      %v1813 = vrot.slane %v1811, 4
      %v1814 = vrot.slane %v1626, 5
      %v1815 = vsel %vm1802, %v1813, %v1814
      %v1816 = vrot.slane %v1814, 4
      %v1817 = vrot.slane %v1627, 5
      %v1818 = vsel %vm1802, %v1816, %v1817
      %v1819 = vrot.slane %v1817, 4
      %v1820 = vrot.slane %v1628, 5
      %v1821 = vsel %vm1802, %v1819, %v1820
      %v1822 = vrot.slane %v1820, 4
      %v1823 = vrot.slane %v1629, 5
      %v1824 = vsel %vm1802, %v1822, %v1823
      %v1825 = vrot.slane %v1823, 4
      %v1826 = vrot.slane %v1630, 5
      %v1827 = vsel %vm1802, %v1825, %v1826
      %v1828 = vrot.slane %v1826, 4
      %v1829 = vrot.slane %v1631, 5
      %v1830 = vsel %vm1802, %v1828, %v1829
      %v1831 = vrot.slane %v1829, 4
      %v1832 = vrot.slane %v1632, 5
      %v1833 = vsel %vm1802, %v1831, %v1832
      %v1834 = vrot.slane %v1832, 4
      %v1835 = vrot.slane %v1633, 5
      %v1836 = vsel %vm1802, %v1834, %v1835
      %v1837 = vrot.slane %v1835, 4
      %v1838 = vrot.slane %v1634, 5
      %v1839 = vsel %vm1802, %v1837, %v1838
      %v1840 = vrot.slane %v1838, 4
      %v1841 = vrot.slane %v1635, 5
      %v1842 = vsel %vm1802, %v1840, %v1841
      %v1843 = vrot.slane %v1841, 4
      %v1844 = vrot.slane %v1636, 5
      %v1845 = vsel %vm1802, %v1843, %v1844
      %v1846 = vrot.slane %v1844, 4
      %v1847 = vrot.slane %v1637, 5
      %v1848 = vsel %vm1802, %v1846, %v1847
      %v1849 = vrot.slane %v1847, 4
      %v1850 = vrot.slane %v1638, 5
      %v1851 = vsel %vm1802, %v1849, %v1850
      %v1852 = vrot.slane %v1850, 4
      %v1853 = vrot.slane %v1639, 5
      %v1854 = vsel %vm1802, %v1852, %v1853
      %v1855 = vrot.slane %v1853, 4
      %v1856 = vrot.slane %v1640, 5
      %v1857 = vsel %vm1802, %v1855, %v1856
      %v1858 = vrot.slane %v1856, 4
      %v1859 = vrot.slane %v1641, 5
      %v1860 = vsel %vm1802, %v1858, %v1859
      %v1861 = vrot.slane %v1859, 4
      %v1862 = vrot.slane %v1642, 5
      %v1863 = vsel %vm1802, %v1861, %v1862
      %v1864 = vrot.slane %v1862, 4
      %v1865 = vrot.slane %v1643, 5
      %v1866 = vsel %vm1802, %v1864, %v1865
      %v1867 = vrot.slane %v1865, 4
      %v1868 = vrot.slane %v1644, 5
      %v1869 = vsel %vm1802, %v1867, %v1868
      %v1870 = vrot.slane %v1868, 4
      %v1871 = vrot.slane %v1645, 5
      %v1872 = vsel %vm1802, %v1870, %v1871
      %v1873 = vrot.slane %v1871, 4
      %v1874 = vrot.slane %v1646, 5
      %v1875 = vsel %vm1802, %v1873, %v1874
      %v1876 = vrot.slane %v1874, 4
      %v1877 = vrot.slane %v1647, 5
      %v1878 = vsel %vm1802, %v1876, %v1877
      %v1879 = vrot.slane %v1877, 4
      %v1880 = vrot.slane %v1648, 5
      %v1881 = vsel %vm1802, %v1879, %v1880
      %v1882 = vrot.slane %v1880, 4
      %v1883 = vrot.slane %v1649, 5
      %v1884 = vsel %vm1802, %v1882, %v1883
      %v1885 = vrot.slane %v1883, 4
      %v1886 = vrot.slane %v1650, 5
      %v1887 = vsel %vm1802, %v1885, %v1886
      %v1888 = vrot.slane %v1886, 4
      %v1889 = vrot.slane %v1651, 5
      %v1890 = vsel %vm1802, %v1888, %v1889
      %v1891 = vrot.slane %v1889, 4
      %v1892 = vrot.slane %v1652, 5
      %v1893 = vsel %vm1802, %v1891, %v1892
      %v1894 = vrot.slane %v1892, 4
      %v1895 = vrot.slane %v1653, 5
      %v1896 = vsel %vm1802, %v1894, %v1895
      %v1897 = vrot.slane %v1895, 4
      %v1898 = vrot.slane %v1654, 5
      %v1899 = vsel %vm1802, %v1897, %v1898
      %v1900 = vrot.slane %v1898, 4
      %v1901 = vrot.slane %v1655, 5
      %v1902 = vsel %vm1802, %v1900, %v1901
      %v1903 = vrot.slane %v1901, 4
      %v1904 = vrot.slane %v1656, 5
      %v1905 = vsel %vm1802, %v1903, %v1904
      %v1906 = vrot.slane %v1904, 4
      %v1907 = vrot.slane %v1657, 5
      %v1908 = vsel %vm1802, %v1906, %v1907
      %v1909 = vrot.slane %v1907, 4
      %v1910 = vrot.slane %v1658, 5
      %v1911 = vsel %vm1802, %v1909, %v1910
      %v1912 = vrot.slane %v1910, 4
      %v1913 = vrot.slane %v1659, 5
      %v1914 = vsel %vm1802, %v1912, %v1913
      %v1915 = vrot.slane %v1913, 4
      %v1916 = vrot.slane %v1660, 5
      %v1917 = vsel %vm1802, %v1915, %v1916
      %v1918 = vrot.slane %v1916, 4
      %v1919 = vrot.slane %v1661, 5
      %v1920 = vsel %vm1802, %v1918, %v1919
      %v1921 = vrot.slane %v1919, 4
      %v1922 = vrot.slane %v1662, 5
      %v1923 = vsel %vm1802, %v1921, %v1922
      %v1924 = vrot.slane %v1922, 4
      %v1925 = vrot.slane %v1663, 5
      %v1926 = vsel %vm1802, %v1924, %v1925
      %v1927 = vrot.slane %v1925, 4
      %v1928 = vrot.slane %v1664, 5
      %v1929 = vsel %vm1802, %v1927, %v1928
      %v1930 = vrot.slane %v1928, 4
      %v1931 = vrot.slane %v1665, 5
      %v1932 = vsel %vm1802, %v1930, %v1931
      %v1933 = vrot.slane %v1931, 4
      %v1934 = vrot.slane %v1666, 5
      %v1935 = vsel %vm1802, %v1933, %v1934
      %v1936 = vrot.slane %v1934, 4
      %v1937 = vrot.slane %v1667, 5
      %v1938 = vsel %vm1802, %v1936, %v1937
      %v1939 = vrot.slane %v1937, 4
      %v1940 = vrot.slane %v1668, 5
      %v1941 = vsel %vm1802, %v1939, %v1940
      %v1942 = vrot.slane %v1940, 4
      %v1943 = vrot.slane %v1669, 5
      %v1944 = vsel %vm1802, %v1942, %v1943
      %v1945 = vrot.slane %v1943, 4
      %v1946 = vrot.slane %v1670, 5
      %v1947 = vsel %vm1802, %v1945, %v1946
      %v1948 = vrot.slane %v1946, 4
      %v1949 = vrot.slane %v1671, 5
      %v1950 = vsel %vm1802, %v1948, %v1949
      %v1951 = vrot.slane %v1949, 4
      %v1952 = vrot.slane %v1672, 5
      %v1953 = vsel %vm1802, %v1951, %v1952
      %v1954 = vrot.slane %v1952, 4
      %v1955 = vrot.slane %v1673, 5
      %v1956 = vsel %vm1802, %v1954, %v1955
      %v1957 = vrot.slane %v1955, 4
      %v1958 = vrot.slane %v1674, 5
      %v1959 = vsel %vm1802, %v1957, %v1958
      %v1960 = vrot.slane %v1958, 4
      %v1961 = vrot.slane %v1675, 5
      %v1962 = vsel %vm1802, %v1960, %v1961
      %v1963 = vrot.slane %v1961, 4
      %v1964 = vrot.slane %v1676, 5
      %v1965 = vsel %vm1802, %v1963, %v1964
      %v1966 = vrot.slane %v1964, 4
      %v1967 = vrot.slane %v1677, 5
      %v1968 = vsel %vm1802, %v1966, %v1967
      %v1969 = vrot.slane %v1967, 4
      %v1970 = vrot.slane %v1678, 5
      %v1971 = vsel %vm1802, %v1969, %v1970
      %v1972 = vrot.slane %v1970, 4
      %v1973 = vrot.slane %v1679, 5
      %v1974 = vsel %vm1802, %v1972, %v1973
      %v1975 = vrot.slane %v1973, 4
      %v1976 = vrot.slane %v1680, 5
      %v1977 = vsel %vm1802, %v1975, %v1976
      %v1978 = vrot.slane %v1976, 4
      %v1979 = vrot.slane %v1681, 5
      %v1980 = vsel %vm1802, %v1978, %v1979
      %v1981 = vrot.slane %v1979, 4
      %v1982 = vrot.slane %v1682, 5
      %v1983 = vsel %vm1802, %v1981, %v1982
      %v1984 = vrot.slane %v1982, 4
      %v1985 = vrot.slane %v1683, 5
      %v1986 = vsel %vm1802, %v1984, %v1985
      %v1987 = vrot.slane %v1985, 4
      %v1988 = vrot.slane %v1684, 5
      %v1989 = vsel %vm1802, %v1987, %v1988
      %v1990 = vrot.slane %v1988, 4
      %v1991 = vrot.slane %v1685, 5
      %v1992 = vsel %vm1802, %v1990, %v1991
      %v1993 = vrot.slane %v1991, 4
      %v1994 = vrot.slane %v1686, 5
      %v1995 = vsel %vm1802, %v1993, %v1994
      %v1996 = vrot.slane %v1994, 4
      %v1997 = vrot.slane %v1687, 5
      %v1998 = vsel %vm1802, %v1996, %v1997
      %v1999 = vrot.slane %v1997, 4
      %v2000 = vrot.slane %v1688, 5
      %v2001 = vsel %vm1802, %v1999, %v2000
      %v2002 = vrot.slane %v2000, 4
      %v2003 = vrot.slane %v1689, 5
      %v2004 = vsel %vm1802, %v2002, %v2003
      %v2005 = vrot.slane %v2003, 4
      %v2006 = vrot.slane %v1690, 5
      %v2007 = vsel %vm1802, %v2005, %v2006
      %v2008 = vrot.slane %v2006, 4
      %v2009 = vrot.slane %v1691, 5
      %v2010 = vsel %vm1802, %v2008, %v2009
      %v2011 = vrot.slane %v2009, 4
      %v2012 = vrot.slane %v1692, 5
      %v2013 = vsel %vm1802, %v2011, %v2012
      %v2014 = vrot.slane %v2012, 4
      %v2015 = vrot.slane %v1693, 5
      %v2016 = vsel %vm1802, %v2014, %v2015
      %v2017 = vrot.slane %v2015, 4
      %v2018 = vrot.slane %v1694, 5
      %v2019 = vsel %vm1802, %v2017, %v2018
      %v2020 = vrot.slane %v2018, 4
      %v2021 = vrot.slane %v1695, 5
      %v2022 = vsel %vm1802, %v2020, %v2021
      %v2023 = vrot.slane %v2021, 4
      %v2024 = vrot.slane %v1696, 5
      %v2025 = vsel %vm1802, %v2023, %v2024
      %v2026 = vrot.slane %v2024, 4
      %v2027 = vrot.slane %v1697, 5
      %v2028 = vsel %vm1802, %v2026, %v2027
      %v2029 = vrot.slane %v2027, 4
      %v2030 = vrot.slane %v1698, 5
      %v2031 = vsel %vm1802, %v2029, %v2030
      %v2032 = vrot.slane %v2030, 4
      %v2033 = vrot.slane %v1699, 5
      %v2034 = vsel %vm1802, %v2032, %v2033
      %v2035 = vrot.slane %v2033, 4
      %v2036 = vrot.slane %v1700, 5
      %v2037 = vsel %vm1802, %v2035, %v2036
      %v2038 = vrot.slane %v2036, 4
      %v2039 = vrot.slane %v1701, 5
      %v2040 = vsel %vm1802, %v2038, %v2039
      %v2041 = vrot.slane %v2039, 4
      %v2042 = vrot.slane %v1702, 5
      %v2043 = vsel %vm1802, %v2041, %v2042
      %v2044 = vrot.slane %v2042, 4
      %v2045 = vrot.slane %v1703, 5
      %v2046 = vsel %vm1802, %v2044, %v2045
      %v2047 = vrot.slane %v2045, 4
      %v2048 = vrot.slane %v1704, 5
      %v2049 = vsel %vm1802, %v2047, %v2048
      %v2050 = vrot.slane %v2048, 4
      %v2051 = vrot.slane %v1705, 5
      %v2052 = vsel %vm1802, %v2050, %v2051
      %v2053 = vrot.slane %v2051, 4
      %v2054 = vrot.slane %v1706, 5
      %v2055 = vsel %vm1802, %v2053, %v2054
      %v2056 = vrot.slane %v2054, 4
      %v2057 = vrot.slane %v1707, 5
      %v2058 = vsel %vm1802, %v2056, %v2057
      %v2059 = vrot.slane %v2057, 4
      %v2060 = vrot.slane %v1708, 5
      %v2061 = vsel %vm1802, %v2059, %v2060
      %v2062 = vrot.slane %v2060, 4
      %v2063 = vrot.slane %v1709, 5
      %v2064 = vsel %vm1802, %v2062, %v2063
      %v2065 = vrot.slane %v2063, 4
      %v2066 = vrot.slane %v1710, 5
      %v2067 = vsel %vm1802, %v2065, %v2066
      %2156 = vst [vmem:[#allocation2 + $0x8] sm:$0xf] %v1806
      %2157 = vst [vmem:[#allocation2 + $0x14] sm:$0xf] %v1809
      %2158 = vst [vmem:[#allocation2 + $0x20] sm:$0xf] %v1812
      %2159 = vst [vmem:[#allocation2 + $0x2c] sm:$0xf] %v1815
      %2160 = vst [vmem:[#allocation2 + $0x38] sm:$0xf] %v1818
      %2161 = vst [vmem:[#allocation2 + $0x44] sm:$0xf] %v1821
      %2162 = vst [vmem:[#allocation2 + $0x50] sm:$0xf] %v1824
      %2163 = vst [vmem:[#allocation2 + $0x5c] sm:$0xf] %v1827
      %2164 = vst [vmem:[#allocation2 + $0x68] sm:$0xf] %v1830
      %2165 = vst [vmem:[#allocation2 + $0x74] sm:$0xf] %v1833
      %2166 = vst [vmem:[#allocation2 + $0x80] sm:$0xf] %v1836
      %2167 = vst [vmem:[#allocation2 + $0x8c] sm:$0xf] %v1839
      %2168 = vst [vmem:[#allocation2 + $0x98] sm:$0xf] %v1842
      %2169 = vst [vmem:[#allocation2 + $0xa4] sm:$0xf] %v1845
      %2170 = vst [vmem:[#allocation2 + $0xb0] sm:$0xf] %v1848
      %2171 = vst [vmem:[#allocation2 + $0xbc] sm:$0xf] %v1851
      %2172 = vst [vmem:[#allocation2 + $0xc8] sm:$0xf] %v1854
      %2173 = vst [vmem:[#allocation2 + $0xd4] sm:$0xf] %v1857
      %2174 = vst [vmem:[#allocation2 + $0xe0] sm:$0xf] %v1860
      %2175 = vst [vmem:[#allocation2 + $0xec] sm:$0xf] %v1863
      %2176 = vst [vmem:[#allocation2 + $0xf8] sm:$0xf] %v1866
      %2177 = vst [vmem:[#allocation2 + $0x104] sm:$0xf] %v1869
      %2178 = vst [vmem:[#allocation2 + $0x110] sm:$0xf] %v1872
      %2179 = vst [vmem:[#allocation2 + $0x11c] sm:$0xf] %v1875
      %2180 = vst [vmem:[#allocation2 + $0x128] sm:$0xf] %v1878
      %2181 = vst [vmem:[#allocation2 + $0x134] sm:$0xf] %v1881
      %2182 = vst [vmem:[#allocation2 + $0x140] sm:$0xf] %v1884
      %2183 = vst [vmem:[#allocation2 + $0x14c] sm:$0xf] %v1887
      %2184 = vst [vmem:[#allocation2 + $0x158] sm:$0xf] %v1890
      %2185 = vst [vmem:[#allocation2 + $0x164] sm:$0xf] %v1893
      %2186 = vst [vmem:[#allocation2 + $0x170] sm:$0xf] %v1896
      %2187 = vst [vmem:[#allocation2 + $0x17c] sm:$0xf] %v1899
      %2188 = vst [vmem:[#allocation2 + $0x188] sm:$0xf] %v1902
      %2189 = vst [vmem:[#allocation2 + $0x194] sm:$0xf] %v1905
      %2190 = vst [vmem:[#allocation2 + $0x1a0] sm:$0xf] %v1908
      %2191 = vst [vmem:[#allocation2 + $0x1ac] sm:$0xf] %v1911
      %2192 = vst [vmem:[#allocation2 + $0x1b8] sm:$0xf] %v1914
      %2193 = vst [vmem:[#allocation2 + $0x1c4] sm:$0xf] %v1917
      %2194 = vst [vmem:[#allocation2 + $0x1d0] sm:$0xf] %v1920
      %2195 = vst [vmem:[#allocation2 + $0x1dc] sm:$0xf] %v1923
      %2196 = vst [vmem:[#allocation2 + $0x1e8] sm:$0xf] %v1926
      %2197 = vst [vmem:[#allocation2 + $0x1f4] sm:$0xf] %v1929
      %2198 = vst [vmem:[#allocation2 + $0x200] sm:$0xf] %v1932
      %2199 = vst [vmem:[#allocation2 + $0x20c] sm:$0xf] %v1935
      %2200 = vst [vmem:[#allocation2 + $0x218] sm:$0xf] %v1938
      %2201 = vst [vmem:[#allocation2 + $0x224] sm:$0xf] %v1941
      %2202 = vst [vmem:[#allocation2 + $0x230] sm:$0xf] %v1944
      %2203 = vst [vmem:[#allocation2 + $0x23c] sm:$0xf] %v1947
      %2204 = vst [vmem:[#allocation2 + $0x248] sm:$0xf] %v1950
      %2205 = vst [vmem:[#allocation2 + $0x254] sm:$0xf] %v1953
      %2206 = vst [vmem:[#allocation2 + $0x260] sm:$0xf] %v1956
      %2207 = vst [vmem:[#allocation2 + $0x26c] sm:$0xf] %v1959
      %2208 = vst [vmem:[#allocation2 + $0x278] sm:$0xf] %v1962
      %2209 = vst [vmem:[#allocation2 + $0x284] sm:$0xf] %v1965
      %2210 = vst [vmem:[#allocation2 + $0x290] sm:$0xf] %v1968
      %2211 = vst [vmem:[#allocation2 + $0x29c] sm:$0xf] %v1971
      %2212 = vst [vmem:[#allocation2 + $0x2a8] sm:$0xf] %v1974
      %2213 = vst [vmem:[#allocation2 + $0x2b4] sm:$0xf] %v1977
      %2214 = vst [vmem:[#allocation2 + $0x2c0] sm:$0xf] %v1980
      %2215 = vst [vmem:[#allocation2 + $0x2cc] sm:$0xf] %v1983
      %2216 = vst [vmem:[#allocation2 + $0x2d8] sm:$0xf] %v1986
      %2217 = vst [vmem:[#allocation2 + $0x2e4] sm:$0xf] %v1989
      %2218 = vst [vmem:[#allocation2 + $0x2f0] sm:$0xf] %v1992
      %2219 = vst [vmem:[#allocation2 + $0x2fc] sm:$0xf] %v1995
      %2220 = vst [vmem:[#allocation2 + $0x308] sm:$0xf] %v1998
      %2221 = vst [vmem:[#allocation2 + $0x314] sm:$0xf] %v2001
      %2222 = vst [vmem:[#allocation2 + $0x320] sm:$0xf] %v2004
      %2223 = vst [vmem:[#allocation2 + $0x32c] sm:$0xf] %v2007
      %2224 = vst [vmem:[#allocation2 + $0x338] sm:$0xf] %v2010
      %2225 = vst [vmem:[#allocation2 + $0x344] sm:$0xf] %v2013
      %2226 = vst [vmem:[#allocation2 + $0x350] sm:$0xf] %v2016
      %2227 = vst [vmem:[#allocation2 + $0x35c] sm:$0xf] %v2019
      %2228 = vst [vmem:[#allocation2 + $0x368] sm:$0xf] %v2022
      %2229 = vst [vmem:[#allocation2 + $0x374] sm:$0xf] %v2025
      %2230 = vst [vmem:[#allocation2 + $0x380] sm:$0xf] %v2028
      %2231 = vst [vmem:[#allocation2 + $0x38c] sm:$0xf] %v2031
      %2232 = vst [vmem:[#allocation2 + $0x398] sm:$0xf] %v2034
      %2233 = vst [vmem:[#allocation2 + $0x3a4] sm:$0xf] %v2037
      %2234 = vst [vmem:[#allocation2 + $0x3b0] sm:$0xf] %v2040
      %2235 = vst [vmem:[#allocation2 + $0x3bc] sm:$0xf] %v2043
      %2236 = vst [vmem:[#allocation2 + $0x3c8] sm:$0xf] %v2046
      %2237 = vst [vmem:[#allocation2 + $0x3d4] sm:$0xf] %v2049
      %2238 = vst [vmem:[#allocation2 + $0x3e0] sm:$0xf] %v2052
      %2239 = vst [vmem:[#allocation2 + $0x3ec] sm:$0xf] %v2055
      %2240 = vst [vmem:[#allocation2 + $0x3f8] sm:$0xf] %v2058
      %2241 = vst [vmem:[#allocation2 + $0x404] sm:$0xf] %v2061
      %2242 = vst [vmem:[#allocation2 + $0x410] sm:$0xf] %v2064
      %2243 = vst [vmem:[#allocation2 + $0x41c] sm:$0xf] %v2067
      loop: start=0, step=1, limit=5
      $region45: #{_successive_conv_impl.1} parent=43 // loop_pre_header
        _
      $region46: #{_successive_conv_impl.1} parent=43 // loop_header
        %s2245 = sphi 0, %s2249
        %p2246 = scmp.ge.s32.totalorder %s2245, 5
      $region47: #{_successive_conv_impl.1} parent=43 // loop_header_branch
        %2248 = sbr.rel (%p2246) target = $region51
      $region48: #{_successive_conv_impl.1} parent=43 // loop_body
        %s2250 = smul.u32 %s2245, 128
        %s2251 = sshra.s32 %s2250, 3
        %s2252 = sand.u32 %s2250, 7
        %s2253 = smul.u32 %s2251, 3
        %s2254 = smul.addr %s2253, 4
        %s2255 = scalar_lea.vmem [#allocation2], %s2254
        %v2256 = vld [vmem:[%s2255] sm:$0xff]
        %v2257 = vld [vmem:[%s2255 + $0x8] sm:$0xf]
        %v2258 = vld [vmem:[%s2255 + $0xc] sm:$0xff]
        %v2259 = vld [vmem:[%s2255 + $0x14] sm:$0xf]
        %v2260 = vld [vmem:[%s2255 + $0x18] sm:$0xff]
        %v2261 = vld [vmem:[%s2255 + $0x20] sm:$0xf]
        %v2262 = vld [vmem:[%s2255 + $0x24] sm:$0xff]
        %v2263 = vld [vmem:[%s2255 + $0x2c] sm:$0xf]
        %v2264 = vld [vmem:[%s2255 + $0x30] sm:$0xff]
        %v2265 = vld [vmem:[%s2255 + $0x38] sm:$0xf]
        %v2266 = vld [vmem:[%s2255 + $0x3c] sm:$0xff]
        %v2267 = vld [vmem:[%s2255 + $0x44] sm:$0xf]
        %v2268 = vld [vmem:[%s2255 + $0x48] sm:$0xff]
        %v2269 = vld [vmem:[%s2255 + $0x50] sm:$0xf]
        %v2270 = vld [vmem:[%s2255 + $0x54] sm:$0xff]
        %v2271 = vld [vmem:[%s2255 + $0x5c] sm:$0xf]
        %v2272 = vld [vmem:[%s2255 + $0x60] sm:$0xff]
        %v2273 = vld [vmem:[%s2255 + $0x68] sm:$0xf]
        %v2274 = vld [vmem:[%s2255 + $0x6c] sm:$0xff]
        %v2275 = vld [vmem:[%s2255 + $0x74] sm:$0xf]
        %v2276 = vld [vmem:[%s2255 + $0x78] sm:$0xff]
        %v2277 = vld [vmem:[%s2255 + $0x80] sm:$0xf]
        %v2278 = vld [vmem:[%s2255 + $0x84] sm:$0xff]
        %v2279 = vld [vmem:[%s2255 + $0x8c] sm:$0xf]
        %v2280 = vld [vmem:[%s2255 + $0x90] sm:$0xff]
        %v2281 = vld [vmem:[%s2255 + $0x98] sm:$0xf]
        %v2282 = vld [vmem:[%s2255 + $0x9c] sm:$0xff]
        %v2283 = vld [vmem:[%s2255 + $0xa4] sm:$0xf]
        %v2284 = vld [vmem:[%s2255 + $0xa8] sm:$0xff]
        %v2285 = vld [vmem:[%s2255 + $0xb0] sm:$0xf]
        %v2286 = vld [vmem:[%s2255 + $0xb4] sm:$0xff]
        %v2287 = vld [vmem:[%s2255 + $0xbc] sm:$0xf]
        %v2288 = vld [vmem:[%s2] sm:$0xf]
        %v2289 = vld [vmem:[%s2 + $0x4] sm:$0xf]
        %v2290 = vld [vmem:[%s2 + $0x8] sm:$0xf]
        %v2291 = vld [vmem:[%s2 + $0xc] sm:$0xf]
        %v2292 = vld [vmem:[%s2 + $0x10] sm:$0xf]
        %v2293 = vld [vmem:[%s2 + $0x14] sm:$0xf]
        %v2294 = vld [vmem:[%s2 + $0x18] sm:$0xf]
        %v2295 = vld [vmem:[%s2 + $0x1c] sm:$0xf]
        %v2296 = vld [vmem:[%s2 + $0x20] sm:$0xf]
        %v2297 = vld [vmem:[%s2 + $0x24] sm:$0xf]
        %v2298 = vld [vmem:[%s2 + $0x28] sm:$0xf]
        %v2299 = vld [vmem:[%s2 + $0x2c] sm:$0xf]
        %v2300 = vld [vmem:[%s2 + $0x30] sm:$0xf]
        %v2301 = vld [vmem:[%s2 + $0x34] sm:$0xf]
        %v2302 = vld [vmem:[%s2 + $0x38] sm:$0xf]
        %v2303 = vld [vmem:[%s2 + $0x3c] sm:$0xf]
        %v2304 = vld [vmem:[%s2 + $0x40] sm:$0xf]
        %v2305 = vld [vmem:[%s2 + $0x44] sm:$0xf]
        %v2306 = vld [vmem:[%s2 + $0x48] sm:$0xf]
        %v2307 = vld [vmem:[%s2 + $0x4c] sm:$0xf]
        %v2308 = vld [vmem:[%s2 + $0x50] sm:$0xf]
        %v2309 = vld [vmem:[%s2 + $0x54] sm:$0xf]
        %v2310 = vld [vmem:[%s2 + $0x58] sm:$0xf]
        %v2311 = vld [vmem:[%s2 + $0x5c] sm:$0xf]
        %v2312 = vld [vmem:[%s2 + $0x60] sm:$0xf]
        %v2313 = vld [vmem:[%s2 + $0x64] sm:$0xf]
        %v2314 = vld [vmem:[%s2 + $0x68] sm:$0xf]
        %v2315 = vld [vmem:[%s2 + $0x6c] sm:$0xf]
        %v2316 = vld [vmem:[%s2 + $0x70] sm:$0xf]
        %v2317 = vld [vmem:[%s2 + $0x74] sm:$0xf]
        %v2318 = vld [vmem:[%s2 + $0x78] sm:$0xf]
        %v2319 = vld [vmem:[%s2 + $0x7c] sm:$0xf]
        %v2320 = vld [vmem:[%s2 + $0x80] sm:$0xf]
        %v2321 = vld [vmem:[%s2 + $0x84] sm:$0xf]
        %v2322 = vld [vmem:[%s2 + $0x88] sm:$0xf]
        %v2323 = vld [vmem:[%s2 + $0x8c] sm:$0xf]
        %v2324 = vld [vmem:[%s2 + $0x90] sm:$0xf]
        %v2325 = vld [vmem:[%s2 + $0x94] sm:$0xf]
        %v2326 = vld [vmem:[%s2 + $0x98] sm:$0xf]
        %v2327 = vld [vmem:[%s2 + $0x9c] sm:$0xf]
        %v2328 = vld [vmem:[%s2 + $0xa0] sm:$0xf]
        %v2329 = vld [vmem:[%s2 + $0xa4] sm:$0xf]
        %v2330 = vld [vmem:[%s2 + $0xa8] sm:$0xf]
        %v2331 = vld [vmem:[%s2 + $0xac] sm:$0xf]
        %v2332 = vld [vmem:[%s2 + $0xb0] sm:$0xf]
        %v2333 = vld [vmem:[%s2 + $0xb4] sm:$0xf]
        %v2334 = vld [vmem:[%s2 + $0xb8] sm:$0xf]
        %v2335 = vld [vmem:[%s2 + $0xbc] sm:$0xf]
        %s2336 = sadd.s32 %s2250, 32
        %s2337 = sshra.s32 %s2336, 3
        %s2338 = sand.u32 %s2336, 7
        %s2339 = smul.u32 %s2337, 3
        %s2340 = smul.addr %s2339, 4
        %s2341 = scalar_lea.vmem [#allocation2], %s2340
        %v2342 = vld [vmem:[%s2341] sm:$0xff]
        %v2343 = vld [vmem:[%s2341 + $0x8] sm:$0xf]
        %v2344 = vld [vmem:[%s2341 + $0xc] sm:$0xff]
        %v2345 = vld [vmem:[%s2341 + $0x14] sm:$0xf]
        %v2346 = vld [vmem:[%s2341 + $0x18] sm:$0xff]
        %v2347 = vld [vmem:[%s2341 + $0x20] sm:$0xf]
        %v2348 = vld [vmem:[%s2341 + $0x24] sm:$0xff]
        %v2349 = vld [vmem:[%s2341 + $0x2c] sm:$0xf]
        %v2350 = vld [vmem:[%s2341 + $0x30] sm:$0xff]
        %v2351 = vld [vmem:[%s2341 + $0x38] sm:$0xf]
        %v2352 = vld [vmem:[%s2341 + $0x3c] sm:$0xff]
        %v2353 = vld [vmem:[%s2341 + $0x44] sm:$0xf]
        %v2354 = vld [vmem:[%s2341 + $0x48] sm:$0xff]
        %v2355 = vld [vmem:[%s2341 + $0x50] sm:$0xf]
        %v2356 = vld [vmem:[%s2341 + $0x54] sm:$0xff]
        %v2357 = vld [vmem:[%s2341 + $0x5c] sm:$0xf]
        %v2358 = vld [vmem:[%s2341 + $0x60] sm:$0xff]
        %v2359 = vld [vmem:[%s2341 + $0x68] sm:$0xf]
        %v2360 = vld [vmem:[%s2341 + $0x6c] sm:$0xff]
        %v2361 = vld [vmem:[%s2341 + $0x74] sm:$0xf]
        %v2362 = vld [vmem:[%s2341 + $0x78] sm:$0xff]
        %v2363 = vld [vmem:[%s2341 + $0x80] sm:$0xf]
        %v2364 = vld [vmem:[%s2341 + $0x84] sm:$0xff]
        %v2365 = vld [vmem:[%s2341 + $0x8c] sm:$0xf]
        %v2366 = vld [vmem:[%s2341 + $0x90] sm:$0xff]
        %v2367 = vld [vmem:[%s2341 + $0x98] sm:$0xf]
        %v2368 = vld [vmem:[%s2341 + $0x9c] sm:$0xff]
        %v2369 = vld [vmem:[%s2341 + $0xa4] sm:$0xf]
        %v2370 = vld [vmem:[%s2341 + $0xa8] sm:$0xff]
        %v2371 = vld [vmem:[%s2341 + $0xb0] sm:$0xf]
        %v2372 = vld [vmem:[%s2341 + $0xb4] sm:$0xff]
        %v2373 = vld [vmem:[%s2341 + $0xbc] sm:$0xf]
        %s2374 = scalar_lea.vmem %s2, 192
        %v2375 = vld [vmem:[%s2374] sm:$0xf]
        %v2376 = vld [vmem:[%s2374 + $0x4] sm:$0xf]
        %v2377 = vld [vmem:[%s2374 + $0x8] sm:$0xf]
        %v2378 = vld [vmem:[%s2374 + $0xc] sm:$0xf]
        %v2379 = vld [vmem:[%s2374 + $0x10] sm:$0xf]
        %v2380 = vld [vmem:[%s2374 + $0x14] sm:$0xf]
        %v2381 = vld [vmem:[%s2374 + $0x18] sm:$0xf]
        %v2382 = vld [vmem:[%s2374 + $0x1c] sm:$0xf]
        %v2383 = vld [vmem:[%s2374 + $0x20] sm:$0xf]
        %v2384 = vld [vmem:[%s2374 + $0x24] sm:$0xf]
        %v2385 = vld [vmem:[%s2374 + $0x28] sm:$0xf]
        %v2386 = vld [vmem:[%s2374 + $0x2c] sm:$0xf]
        %v2387 = vld [vmem:[%s2374 + $0x30] sm:$0xf]
        %v2388 = vld [vmem:[%s2374 + $0x34] sm:$0xf]
        %v2389 = vld [vmem:[%s2374 + $0x38] sm:$0xf]
        %v2390 = vld [vmem:[%s2374 + $0x3c] sm:$0xf]
        %v2391 = vld [vmem:[%s2374 + $0x40] sm:$0xf]
        %v2392 = vld [vmem:[%s2374 + $0x44] sm:$0xf]
        %v2393 = vld [vmem:[%s2374 + $0x48] sm:$0xf]
        %v2394 = vld [vmem:[%s2374 + $0x4c] sm:$0xf]
        %v2395 = vld [vmem:[%s2374 + $0x50] sm:$0xf]
        %v2396 = vld [vmem:[%s2374 + $0x54] sm:$0xf]
        %v2397 = vld [vmem:[%s2374 + $0x58] sm:$0xf]
        %v2398 = vld [vmem:[%s2374 + $0x5c] sm:$0xf]
        %v2399 = vld [vmem:[%s2374 + $0x60] sm:$0xf]
        %v2400 = vld [vmem:[%s2374 + $0x64] sm:$0xf]
        %v2401 = vld [vmem:[%s2374 + $0x68] sm:$0xf]
        %v2402 = vld [vmem:[%s2374 + $0x6c] sm:$0xf]
        %v2403 = vld [vmem:[%s2374 + $0x70] sm:$0xf]
        %v2404 = vld [vmem:[%s2374 + $0x74] sm:$0xf]
        %v2405 = vld [vmem:[%s2374 + $0x78] sm:$0xf]
        %v2406 = vld [vmem:[%s2374 + $0x7c] sm:$0xf]
        %v2407 = vld [vmem:[%s2374 + $0x80] sm:$0xf]
        %v2408 = vld [vmem:[%s2374 + $0x84] sm:$0xf]
        %v2409 = vld [vmem:[%s2374 + $0x88] sm:$0xf]
        %v2410 = vld [vmem:[%s2374 + $0x8c] sm:$0xf]
        %v2411 = vld [vmem:[%s2374 + $0x90] sm:$0xf]
        %v2412 = vld [vmem:[%s2374 + $0x94] sm:$0xf]
        %v2413 = vld [vmem:[%s2374 + $0x98] sm:$0xf]
        %v2414 = vld [vmem:[%s2374 + $0x9c] sm:$0xf]
        %v2415 = vld [vmem:[%s2374 + $0xa0] sm:$0xf]
        %v2416 = vld [vmem:[%s2374 + $0xa4] sm:$0xf]
        %v2417 = vld [vmem:[%s2374 + $0xa8] sm:$0xf]
        %v2418 = vld [vmem:[%s2374 + $0xac] sm:$0xf]
        %v2419 = vld [vmem:[%s2374 + $0xb0] sm:$0xf]
        %v2420 = vld [vmem:[%s2374 + $0xb4] sm:$0xf]
        %v2421 = vld [vmem:[%s2374 + $0xb8] sm:$0xf]
        %v2422 = vld [vmem:[%s2374 + $0xbc] sm:$0xf]
        %v2455 = vunpack.c.l.b16 %v2342
        %v2456 = vunpack.c.h.b16 %v2342
        %v2457 = vunpack.c.l.b16 %v2343
        %v2458 = vunpack.c.l.b16 %v2344
        %v2459 = vunpack.c.h.b16 %v2344
        %v2460 = vunpack.c.l.b16 %v2345
        %v2461 = vunpack.c.l.b16 %v2346
        %v2462 = vunpack.c.h.b16 %v2346
        %v2463 = vunpack.c.l.b16 %v2347
        %v2464 = vunpack.c.l.b16 %v2348
        %v2465 = vunpack.c.h.b16 %v2348
        %v2466 = vunpack.c.l.b16 %v2349
        %v2467 = vunpack.c.l.b16 %v2350
        %v2468 = vunpack.c.h.b16 %v2350
        %v2469 = vunpack.c.l.b16 %v2351
        %v2470 = vunpack.c.l.b16 %v2352
        %v2471 = vunpack.c.h.b16 %v2352
        %v2472 = vunpack.c.l.b16 %v2353
        %v2473 = vunpack.c.l.b16 %v2354
        %v2474 = vunpack.c.h.b16 %v2354
        %v2475 = vunpack.c.l.b16 %v2355
        %v2476 = vunpack.c.l.b16 %v2356
        %v2477 = vunpack.c.h.b16 %v2356
        %v2478 = vunpack.c.l.b16 %v2357
        %v2479 = vunpack.c.l.b16 %v2358
        %v2480 = vunpack.c.h.b16 %v2358
        %v2481 = vunpack.c.l.b16 %v2359
        %v2482 = vunpack.c.l.b16 %v2360
        %v2483 = vunpack.c.h.b16 %v2360
        %v2484 = vunpack.c.l.b16 %v2361
        %v2485 = vunpack.c.l.b16 %v2362
        %v2486 = vunpack.c.h.b16 %v2362
        %v2487 = vunpack.c.l.b16 %v2363
        %v2488 = vunpack.c.l.b16 %v2364
        %v2489 = vunpack.c.h.b16 %v2364
        %v2490 = vunpack.c.l.b16 %v2365
        %v2491 = vunpack.c.l.b16 %v2366
        %v2492 = vunpack.c.h.b16 %v2366
        %v2493 = vunpack.c.l.b16 %v2367
        %v2494 = vunpack.c.l.b16 %v2368
        %v2495 = vunpack.c.h.b16 %v2368
        %v2496 = vunpack.c.l.b16 %v2369
        %v2497 = vunpack.c.l.b16 %v2370
        %v2498 = vunpack.c.h.b16 %v2370
        %v2499 = vunpack.c.l.b16 %v2371
        %v2500 = vunpack.c.l.b16 %v2372
        %v2501 = vunpack.c.h.b16 %v2372
        %v2502 = vunpack.c.l.b16 %v2373
        %v2503 = vpack.c.b16 %v2458, %v2455
        %v2504 = vpack.c.b16 %v2459, %v2456
        %v2505 = vpack.c.b16 %v2460, %v2457
        %v2506 = vpack.c.b16 %v2464, %v2461
        %v2507 = vpack.c.b16 %v2465, %v2462
        %v2508 = vpack.c.b16 %v2466, %v2463
        %v2509 = vpack.c.b16 %v2470, %v2467
        %v2510 = vpack.c.b16 %v2471, %v2468
        %v2511 = vpack.c.b16 %v2472, %v2469
        %v2512 = vpack.c.b16 %v2476, %v2473
        %v2513 = vpack.c.b16 %v2477, %v2474
        %v2514 = vpack.c.b16 %v2478, %v2475
        %v2515 = vpack.c.b16 %v2482, %v2479
        %v2516 = vpack.c.b16 %v2483, %v2480
        %v2517 = vpack.c.b16 %v2484, %v2481
        %v2518 = vpack.c.b16 %v2488, %v2485
        %v2519 = vpack.c.b16 %v2489, %v2486
        %v2520 = vpack.c.b16 %v2490, %v2487
        %v2521 = vpack.c.b16 %v2494, %v2491
        %v2522 = vpack.c.b16 %v2495, %v2492
        %v2523 = vpack.c.b16 %v2496, %v2493
        %v2524 = vpack.c.b16 %v2500, %v2497
        %v2525 = vpack.c.b16 %v2501, %v2498
        %v2526 = vpack.c.b16 %v2502, %v2499
        %v2599 = vunpack.c.l.b16 %v2375
        %v2600 = vunpack.c.l.b16 %v2376
        %v2601 = vunpack.c.l.b16 %v2377
        %v2602 = vunpack.c.l.b16 %v2378
        %v2603 = vunpack.c.l.b16 %v2379
        %v2604 = vunpack.c.l.b16 %v2380
        %v2605 = vunpack.c.l.b16 %v2381
        %v2606 = vunpack.c.l.b16 %v2382
        %v2607 = vunpack.c.l.b16 %v2383
        %v2608 = vunpack.c.l.b16 %v2384
        %v2609 = vunpack.c.l.b16 %v2385
        %v2610 = vunpack.c.l.b16 %v2386
        %v2611 = vunpack.c.l.b16 %v2387
        %v2612 = vunpack.c.l.b16 %v2388
        %v2613 = vunpack.c.l.b16 %v2389
        %v2614 = vunpack.c.l.b16 %v2390
        %v2615 = vunpack.c.l.b16 %v2391
        %v2616 = vunpack.c.l.b16 %v2392
        %v2617 = vunpack.c.l.b16 %v2393
        %v2618 = vunpack.c.l.b16 %v2394
        %v2619 = vunpack.c.l.b16 %v2395
        %v2620 = vunpack.c.l.b16 %v2396
        %v2621 = vunpack.c.l.b16 %v2397
        %v2622 = vunpack.c.l.b16 %v2398
        %v2623 = vunpack.c.l.b16 %v2399
        %v2624 = vunpack.c.l.b16 %v2400
        %v2625 = vunpack.c.l.b16 %v2401
        %v2626 = vunpack.c.l.b16 %v2402
        %v2627 = vunpack.c.l.b16 %v2403
        %v2628 = vunpack.c.l.b16 %v2404
        %v2629 = vunpack.c.l.b16 %v2405
        %v2630 = vunpack.c.l.b16 %v2406
        %v2631 = vunpack.c.l.b16 %v2407
        %v2632 = vunpack.c.l.b16 %v2408
        %v2633 = vunpack.c.l.b16 %v2409
        %v2634 = vunpack.c.l.b16 %v2410
        %v2635 = vunpack.c.l.b16 %v2411
        %v2636 = vunpack.c.l.b16 %v2412
        %v2637 = vunpack.c.l.b16 %v2413
        %v2638 = vunpack.c.l.b16 %v2414
        %v2639 = vunpack.c.l.b16 %v2415
        %v2640 = vunpack.c.l.b16 %v2416
        %v2641 = vunpack.c.l.b16 %v2417
        %v2642 = vunpack.c.l.b16 %v2418
        %v2643 = vunpack.c.l.b16 %v2419
        %v2644 = vunpack.c.l.b16 %v2420
        %v2645 = vunpack.c.l.b16 %v2421
        %v2646 = vunpack.c.l.b16 %v2422
        %v2647 = vpack.c.b16 %v2600, %v2599
        %v2648 = vpack.c.b16 %v2602, %v2601
        %v2649 = vpack.c.b16 %v2604, %v2603
        %v2650 = vpack.c.b16 %v2606, %v2605
        %v2651 = vpack.c.b16 %v2608, %v2607
        %v2652 = vpack.c.b16 %v2610, %v2609
        %v2653 = vpack.c.b16 %v2612, %v2611
        %v2654 = vpack.c.b16 %v2614, %v2613
        %v2655 = vpack.c.b16 %v2616, %v2615
        %v2656 = vpack.c.b16 %v2618, %v2617
        %v2657 = vpack.c.b16 %v2620, %v2619
        %v2658 = vpack.c.b16 %v2622, %v2621
        %v2659 = vpack.c.b16 %v2624, %v2623
        %v2660 = vpack.c.b16 %v2626, %v2625
        %v2661 = vpack.c.b16 %v2628, %v2627
        %v2662 = vpack.c.b16 %v2630, %v2629
        %v2663 = vpack.c.b16 %v2632, %v2631
        %v2664 = vpack.c.b16 %v2634, %v2633
        %v2665 = vpack.c.b16 %v2636, %v2635
        %v2666 = vpack.c.b16 %v2638, %v2637
        %v2667 = vpack.c.b16 %v2640, %v2639
        %v2668 = vpack.c.b16 %v2642, %v2641
        %v2669 = vpack.c.b16 %v2644, %v2643
        %v2670 = vpack.c.b16 %v2646, %v2645
        %2695 = vmatpush.bf16.msra.mxu0 %v2654
        %2696 = vmatpush.bf16.msra.mxu0 %v2653
        %2697 = vmatpush.bf16.msra.mxu0 %v2652
        %2698 = vmatpush.bf16.msra.mxu0 %v2651
        %2699 = vmatpush.bf16.msra.mxu0 %v2650
        %2700 = vmatpush.bf16.msra.mxu0 %v2649
        %2701 = vmatpush.bf16.msra.mxu0 %v2648
        %2702 = vmatpush.bf16.msra.mxu0 %v2647
        %2703 = vmatmul.bf16.gmra.mxu0 %v2503
        %v2704 = vpop.f32.mrf.mxu0
        %v2705 = vadd.f32 0.0, %v2704
        %v2706 = vpop.f32.mrf.mxu0
        %v2707 = vadd.f32 0.0, %v2706
        %2708 = vmatmul.bf16.gmra.mxu0 %v2506
        %v2709 = vpop.f32.mrf.mxu0
        %v2710 = vadd.f32 0.0, %v2709
        %v2711 = vpop.f32.mrf.mxu0
        %v2712 = vadd.f32 0.0, %v2711
        %2713 = vmatmul.bf16.gmra.mxu0 %v2509
        %v2714 = vpop.f32.mrf.mxu0
        %v2715 = vadd.f32 0.0, %v2714
        %v2716 = vpop.f32.mrf.mxu0
        %v2717 = vadd.f32 0.0, %v2716
        %2718 = vmatmul.bf16.gmra.mxu0 %v2512
        %v2719 = vpop.f32.mrf.mxu0
        %v2720 = vadd.f32 0.0, %v2719
        %v2721 = vpop.f32.mrf.mxu0
        %v2722 = vadd.f32 0.0, %v2721
        %2723 = vmatmul.bf16.gmra.mxu0 %v2515
        %v2724 = vpop.f32.mrf.mxu0
        %v2725 = vadd.f32 0.0, %v2724
        %v2726 = vpop.f32.mrf.mxu0
        %v2727 = vadd.f32 0.0, %v2726
        %2728 = vmatmul.bf16.gmra.mxu0 %v2518
        %v2729 = vpop.f32.mrf.mxu0
        %v2730 = vadd.f32 0.0, %v2729
        %v2731 = vpop.f32.mrf.mxu0
        %v2732 = vadd.f32 0.0, %v2731
        %2733 = vmatmul.bf16.gmra.mxu0 %v2521
        %v2734 = vpop.f32.mrf.mxu0
        %v2735 = vadd.f32 0.0, %v2734
        %v2736 = vpop.f32.mrf.mxu0
        %v2737 = vadd.f32 0.0, %v2736
        %2738 = vmatmul.bf16.gmra.mxu0 %v2524
        %v2739 = vpop.f32.mrf.mxu0
        %v2740 = vadd.f32 0.0, %v2739
        %v2741 = vpop.f32.mrf.mxu0
        %v2742 = vadd.f32 0.0, %v2741
        %2743 = vdwg.mxu0
        %2744 = vmatpush.bf16.msra.mxu0 %v2662
        %2745 = vmatpush.bf16.msra.mxu0 %v2661
        %2746 = vmatpush.bf16.msra.mxu0 %v2660
        %2747 = vmatpush.bf16.msra.mxu0 %v2659
        %2748 = vmatpush.bf16.msra.mxu0 %v2658
        %2749 = vmatpush.bf16.msra.mxu0 %v2657
        %2750 = vmatpush.bf16.msra.mxu0 %v2656
        %2751 = vmatpush.bf16.msra.mxu0 %v2655
        %2752 = vmatmul.bf16.gmra.mxu0 %v2504
        %v2753 = vpop.f32.mrf.mxu0
        %v2754 = vadd.f32 %v2705, %v2753
        %v2755 = vpop.f32.mrf.mxu0
        %v2756 = vadd.f32 %v2707, %v2755
        %2757 = vmatmul.bf16.gmra.mxu0 %v2507
        %v2758 = vpop.f32.mrf.mxu0
        %v2759 = vadd.f32 %v2710, %v2758
        %v2760 = vpop.f32.mrf.mxu0
        %v2761 = vadd.f32 %v2712, %v2760
        %2762 = vmatmul.bf16.gmra.mxu0 %v2510
        %v2763 = vpop.f32.mrf.mxu0
        %v2764 = vadd.f32 %v2715, %v2763
        %v2765 = vpop.f32.mrf.mxu0
        %v2766 = vadd.f32 %v2717, %v2765
        %2767 = vmatmul.bf16.gmra.mxu0 %v2513
        %v2768 = vpop.f32.mrf.mxu0
        %v2769 = vadd.f32 %v2720, %v2768
        %v2770 = vpop.f32.mrf.mxu0
        %v2771 = vadd.f32 %v2722, %v2770
        %2772 = vmatmul.bf16.gmra.mxu0 %v2516
        %v2773 = vpop.f32.mrf.mxu0
        %v2774 = vadd.f32 %v2725, %v2773
        %v2775 = vpop.f32.mrf.mxu0
        %v2776 = vadd.f32 %v2727, %v2775
        %2777 = vmatmul.bf16.gmra.mxu0 %v2519
        %v2778 = vpop.f32.mrf.mxu0
        %v2779 = vadd.f32 %v2730, %v2778
        %v2780 = vpop.f32.mrf.mxu0
        %v2781 = vadd.f32 %v2732, %v2780
        %2782 = vmatmul.bf16.gmra.mxu0 %v2522
        %v2783 = vpop.f32.mrf.mxu0
        %v2784 = vadd.f32 %v2735, %v2783
        %v2785 = vpop.f32.mrf.mxu0
        %v2786 = vadd.f32 %v2737, %v2785
        %2787 = vmatmul.bf16.gmra.mxu0 %v2525
        %v2788 = vpop.f32.mrf.mxu0
        %v2789 = vadd.f32 %v2740, %v2788
        %v2790 = vpop.f32.mrf.mxu0
        %v2791 = vadd.f32 %v2742, %v2790
        %2792 = vdwg.mxu0
        %2793 = vmatpush.bf16.msra.mxu0 %v2670
        %2794 = vmatpush.bf16.msra.mxu0 %v2669
        %2795 = vmatpush.bf16.msra.mxu0 %v2668
        %2796 = vmatpush.bf16.msra.mxu0 %v2667
        %2797 = vmatpush.bf16.msra.mxu0 %v2666
        %2798 = vmatpush.bf16.msra.mxu0 %v2665
        %2799 = vmatpush.bf16.msra.mxu0 %v2664
        %2800 = vmatpush.bf16.msra.mxu0 %v2663
        %2801 = vmatmul.bf16.gmra.mxu0 %v2505
        %v2802 = vpop.f32.mrf.mxu0
        %v2803 = vadd.f32 %v2754, %v2802
        %v2804 = vpop.f32.mrf.mxu0
        %v2805 = vadd.f32 %v2756, %v2804
        %2806 = vmatmul.bf16.gmra.mxu0 %v2508
        %v2807 = vpop.f32.mrf.mxu0
        %v2808 = vadd.f32 %v2759, %v2807
        %v2809 = vpop.f32.mrf.mxu0
        %v2810 = vadd.f32 %v2761, %v2809
        %2811 = vmatmul.bf16.gmra.mxu0 %v2511
        %v2812 = vpop.f32.mrf.mxu0
        %v2813 = vadd.f32 %v2764, %v2812
        %v2814 = vpop.f32.mrf.mxu0
        %v2815 = vadd.f32 %v2766, %v2814
        %2816 = vmatmul.bf16.gmra.mxu0 %v2514
        %v2817 = vpop.f32.mrf.mxu0
        %v2818 = vadd.f32 %v2769, %v2817
        %v2819 = vpop.f32.mrf.mxu0
        %v2820 = vadd.f32 %v2771, %v2819
        %2821 = vmatmul.bf16.gmra.mxu0 %v2517
        %v2822 = vpop.f32.mrf.mxu0
        %v2823 = vadd.f32 %v2774, %v2822
        %v2824 = vpop.f32.mrf.mxu0
        %v2825 = vadd.f32 %v2776, %v2824
        %2826 = vmatmul.bf16.gmra.mxu0 %v2520
        %v2827 = vpop.f32.mrf.mxu0
        %v2828 = vadd.f32 %v2779, %v2827
        %v2829 = vpop.f32.mrf.mxu0
        %v2830 = vadd.f32 %v2781, %v2829
        %2831 = vmatmul.bf16.gmra.mxu0 %v2523
        %v2832 = vpop.f32.mrf.mxu0
        %v2833 = vadd.f32 %v2784, %v2832
        %v2834 = vpop.f32.mrf.mxu0
        %v2835 = vadd.f32 %v2786, %v2834
        %2836 = vmatmul.bf16.gmra.mxu0 %v2526
        %v2837 = vpop.f32.mrf.mxu0
        %v2838 = vadd.f32 %v2789, %v2837
        %v2839 = vpop.f32.mrf.mxu0
        %v2840 = vadd.f32 %v2791, %v2839
        %2841 = vdwg.mxu0
        %v2874 = vunpack.c.l.b16 %v2256
        %v2875 = vunpack.c.h.b16 %v2256
        %v2876 = vunpack.c.l.b16 %v2257
        %v2877 = vunpack.c.l.b16 %v2258
        %v2878 = vunpack.c.h.b16 %v2258
        %v2879 = vunpack.c.l.b16 %v2259
        %v2880 = vunpack.c.l.b16 %v2260
        %v2881 = vunpack.c.h.b16 %v2260
        %v2882 = vunpack.c.l.b16 %v2261
        %v2883 = vunpack.c.l.b16 %v2262
        %v2884 = vunpack.c.h.b16 %v2262
        %v2885 = vunpack.c.l.b16 %v2263
        %v2886 = vunpack.c.l.b16 %v2264
        %v2887 = vunpack.c.h.b16 %v2264
        %v2888 = vunpack.c.l.b16 %v2265
        %v2889 = vunpack.c.l.b16 %v2266
        %v2890 = vunpack.c.h.b16 %v2266
        %v2891 = vunpack.c.l.b16 %v2267
        %v2892 = vunpack.c.l.b16 %v2268
        %v2893 = vunpack.c.h.b16 %v2268
        %v2894 = vunpack.c.l.b16 %v2269
        %v2895 = vunpack.c.l.b16 %v2270
        %v2896 = vunpack.c.h.b16 %v2270
        %v2897 = vunpack.c.l.b16 %v2271
        %v2898 = vunpack.c.l.b16 %v2272
        %v2899 = vunpack.c.h.b16 %v2272
        %v2900 = vunpack.c.l.b16 %v2273
        %v2901 = vunpack.c.l.b16 %v2274
        %v2902 = vunpack.c.h.b16 %v2274
        %v2903 = vunpack.c.l.b16 %v2275
        %v2904 = vunpack.c.l.b16 %v2276
        %v2905 = vunpack.c.h.b16 %v2276
        %v2906 = vunpack.c.l.b16 %v2277
        %v2907 = vunpack.c.l.b16 %v2278
        %v2908 = vunpack.c.h.b16 %v2278
        %v2909 = vunpack.c.l.b16 %v2279
        %v2910 = vunpack.c.l.b16 %v2280
        %v2911 = vunpack.c.h.b16 %v2280
        %v2912 = vunpack.c.l.b16 %v2281
        %v2913 = vunpack.c.l.b16 %v2282
        %v2914 = vunpack.c.h.b16 %v2282
        %v2915 = vunpack.c.l.b16 %v2283
        %v2916 = vunpack.c.l.b16 %v2284
        %v2917 = vunpack.c.h.b16 %v2284
        %v2918 = vunpack.c.l.b16 %v2285
        %v2919 = vunpack.c.l.b16 %v2286
        %v2920 = vunpack.c.h.b16 %v2286
        %v2921 = vunpack.c.l.b16 %v2287
        %v2922 = vpack.c.b16 %v2877, %v2874
        %v2923 = vpack.c.b16 %v2878, %v2875
        %v2924 = vpack.c.b16 %v2879, %v2876
        %v2925 = vpack.c.b16 %v2883, %v2880
        %v2926 = vpack.c.b16 %v2884, %v2881
        %v2927 = vpack.c.b16 %v2885, %v2882
        %v2928 = vpack.c.b16 %v2889, %v2886
        %v2929 = vpack.c.b16 %v2890, %v2887
        %v2930 = vpack.c.b16 %v2891, %v2888
        %v2931 = vpack.c.b16 %v2895, %v2892
        %v2932 = vpack.c.b16 %v2896, %v2893
        %v2933 = vpack.c.b16 %v2897, %v2894
        %v2934 = vpack.c.b16 %v2901, %v2898
        %v2935 = vpack.c.b16 %v2902, %v2899
        %v2936 = vpack.c.b16 %v2903, %v2900
        %v2937 = vpack.c.b16 %v2907, %v2904
        %v2938 = vpack.c.b16 %v2908, %v2905
        %v2939 = vpack.c.b16 %v2909, %v2906
        %v2940 = vpack.c.b16 %v2913, %v2910
        %v2941 = vpack.c.b16 %v2914, %v2911
        %v2942 = vpack.c.b16 %v2915, %v2912
        %v2943 = vpack.c.b16 %v2919, %v2916
        %v2944 = vpack.c.b16 %v2920, %v2917
        %v2945 = vpack.c.b16 %v2921, %v2918
        %v3018 = vunpack.c.l.b16 %v2288
        %v3019 = vunpack.c.l.b16 %v2289
        %v3020 = vunpack.c.l.b16 %v2290
        %v3021 = vunpack.c.l.b16 %v2291
        %v3022 = vunpack.c.l.b16 %v2292
        %v3023 = vunpack.c.l.b16 %v2293
        %v3024 = vunpack.c.l.b16 %v2294
        %v3025 = vunpack.c.l.b16 %v2295
        %v3026 = vunpack.c.l.b16 %v2296
        %v3027 = vunpack.c.l.b16 %v2297
        %v3028 = vunpack.c.l.b16 %v2298
        %v3029 = vunpack.c.l.b16 %v2299
        %v3030 = vunpack.c.l.b16 %v2300
        %v3031 = vunpack.c.l.b16 %v2301
        %v3032 = vunpack.c.l.b16 %v2302
        %v3033 = vunpack.c.l.b16 %v2303
        %v3034 = vunpack.c.l.b16 %v2304
        %v3035 = vunpack.c.l.b16 %v2305
        %v3036 = vunpack.c.l.b16 %v2306
        %v3037 = vunpack.c.l.b16 %v2307
        %v3038 = vunpack.c.l.b16 %v2308
        %v3039 = vunpack.c.l.b16 %v2309
        %v3040 = vunpack.c.l.b16 %v2310
        %v3041 = vunpack.c.l.b16 %v2311
        %v3042 = vunpack.c.l.b16 %v2312
        %v3043 = vunpack.c.l.b16 %v2313
        %v3044 = vunpack.c.l.b16 %v2314
        %v3045 = vunpack.c.l.b16 %v2315
        %v3046 = vunpack.c.l.b16 %v2316
        %v3047 = vunpack.c.l.b16 %v2317
        %v3048 = vunpack.c.l.b16 %v2318
        %v3049 = vunpack.c.l.b16 %v2319
        %v3050 = vunpack.c.l.b16 %v2320
        %v3051 = vunpack.c.l.b16 %v2321
        %v3052 = vunpack.c.l.b16 %v2322
        %v3053 = vunpack.c.l.b16 %v2323
        %v3054 = vunpack.c.l.b16 %v2324
        %v3055 = vunpack.c.l.b16 %v2325
        %v3056 = vunpack.c.l.b16 %v2326
        %v3057 = vunpack.c.l.b16 %v2327
        %v3058 = vunpack.c.l.b16 %v2328
        %v3059 = vunpack.c.l.b16 %v2329
        %v3060 = vunpack.c.l.b16 %v2330
        %v3061 = vunpack.c.l.b16 %v2331
        %v3062 = vunpack.c.l.b16 %v2332
        %v3063 = vunpack.c.l.b16 %v2333
        %v3064 = vunpack.c.l.b16 %v2334
        %v3065 = vunpack.c.l.b16 %v2335
        %v3066 = vpack.c.b16 %v3019, %v3018
        %v3067 = vpack.c.b16 %v3021, %v3020
        %v3068 = vpack.c.b16 %v3023, %v3022
        %v3069 = vpack.c.b16 %v3025, %v3024
        %v3070 = vpack.c.b16 %v3027, %v3026
        %v3071 = vpack.c.b16 %v3029, %v3028
        %v3072 = vpack.c.b16 %v3031, %v3030
        %v3073 = vpack.c.b16 %v3033, %v3032
        %v3074 = vpack.c.b16 %v3035, %v3034
        %v3075 = vpack.c.b16 %v3037, %v3036
        %v3076 = vpack.c.b16 %v3039, %v3038
        %v3077 = vpack.c.b16 %v3041, %v3040
        %v3078 = vpack.c.b16 %v3043, %v3042
        %v3079 = vpack.c.b16 %v3045, %v3044
        %v3080 = vpack.c.b16 %v3047, %v3046
        %v3081 = vpack.c.b16 %v3049, %v3048
        %v3082 = vpack.c.b16 %v3051, %v3050
        %v3083 = vpack.c.b16 %v3053, %v3052
        %v3084 = vpack.c.b16 %v3055, %v3054
        %v3085 = vpack.c.b16 %v3057, %v3056
        %v3086 = vpack.c.b16 %v3059, %v3058
        %v3087 = vpack.c.b16 %v3061, %v3060
        %v3088 = vpack.c.b16 %v3063, %v3062
        %v3089 = vpack.c.b16 %v3065, %v3064
        %3114 = vmatpush.bf16.msra.mxu0 %v3073
        %3115 = vmatpush.bf16.msra.mxu0 %v3072
        %3116 = vmatpush.bf16.msra.mxu0 %v3071
        %3117 = vmatpush.bf16.msra.mxu0 %v3070
        %3118 = vmatpush.bf16.msra.mxu0 %v3069
        %3119 = vmatpush.bf16.msra.mxu0 %v3068
        %3120 = vmatpush.bf16.msra.mxu0 %v3067
        %3121 = vmatpush.bf16.msra.mxu0 %v3066
        %3122 = vmatmul.bf16.gmra.mxu0 %v2922
        %v3123 = vpop.f32.mrf.mxu0
        %v3124 = vadd.f32 %v2803, %v3123
        %v3125 = vpop.f32.mrf.mxu0
        %v3126 = vadd.f32 %v2805, %v3125
        %3127 = vmatmul.bf16.gmra.mxu0 %v2925
        %v3128 = vpop.f32.mrf.mxu0
        %v3129 = vadd.f32 %v2808, %v3128
        %v3130 = vpop.f32.mrf.mxu0
        %v3131 = vadd.f32 %v2810, %v3130
        %3132 = vmatmul.bf16.gmra.mxu0 %v2928
        %v3133 = vpop.f32.mrf.mxu0
        %v3134 = vadd.f32 %v2813, %v3133
        %v3135 = vpop.f32.mrf.mxu0
        %v3136 = vadd.f32 %v2815, %v3135
        %3137 = vmatmul.bf16.gmra.mxu0 %v2931
        %v3138 = vpop.f32.mrf.mxu0
        %v3139 = vadd.f32 %v2818, %v3138
        %v3140 = vpop.f32.mrf.mxu0
        %v3141 = vadd.f32 %v2820, %v3140
        %3142 = vmatmul.bf16.gmra.mxu0 %v2934
        %v3143 = vpop.f32.mrf.mxu0
        %v3144 = vadd.f32 %v2823, %v3143
        %v3145 = vpop.f32.mrf.mxu0
        %v3146 = vadd.f32 %v2825, %v3145
        %3147 = vmatmul.bf16.gmra.mxu0 %v2937
        %v3148 = vpop.f32.mrf.mxu0
        %v3149 = vadd.f32 %v2828, %v3148
        %v3150 = vpop.f32.mrf.mxu0
        %v3151 = vadd.f32 %v2830, %v3150
        %3152 = vmatmul.bf16.gmra.mxu0 %v2940
        %v3153 = vpop.f32.mrf.mxu0
        %v3154 = vadd.f32 %v2833, %v3153
        %v3155 = vpop.f32.mrf.mxu0
        %v3156 = vadd.f32 %v2835, %v3155
        %3157 = vmatmul.bf16.gmra.mxu0 %v2943
        %v3158 = vpop.f32.mrf.mxu0
        %v3159 = vadd.f32 %v2838, %v3158
        %v3160 = vpop.f32.mrf.mxu0
        %v3161 = vadd.f32 %v2840, %v3160
        %3162 = vdwg.mxu0
        %3163 = vmatpush.bf16.msra.mxu0 %v3081
        %3164 = vmatpush.bf16.msra.mxu0 %v3080
        %3165 = vmatpush.bf16.msra.mxu0 %v3079
        %3166 = vmatpush.bf16.msra.mxu0 %v3078
        %3167 = vmatpush.bf16.msra.mxu0 %v3077
        %3168 = vmatpush.bf16.msra.mxu0 %v3076
        %3169 = vmatpush.bf16.msra.mxu0 %v3075
        %3170 = vmatpush.bf16.msra.mxu0 %v3074
        %3171 = vmatmul.bf16.gmra.mxu0 %v2923
        %v3172 = vpop.f32.mrf.mxu0
        %v3173 = vadd.f32 %v3124, %v3172
        %v3174 = vpop.f32.mrf.mxu0
        %v3175 = vadd.f32 %v3126, %v3174
        %3176 = vmatmul.bf16.gmra.mxu0 %v2926
        %v3177 = vpop.f32.mrf.mxu0
        %v3178 = vadd.f32 %v3129, %v3177
        %v3179 = vpop.f32.mrf.mxu0
        %v3180 = vadd.f32 %v3131, %v3179
        %3181 = vmatmul.bf16.gmra.mxu0 %v2929
        %v3182 = vpop.f32.mrf.mxu0
        %v3183 = vadd.f32 %v3134, %v3182
        %v3184 = vpop.f32.mrf.mxu0
        %v3185 = vadd.f32 %v3136, %v3184
        %3186 = vmatmul.bf16.gmra.mxu0 %v2932
        %v3187 = vpop.f32.mrf.mxu0
        %v3188 = vadd.f32 %v3139, %v3187
        %v3189 = vpop.f32.mrf.mxu0
        %v3190 = vadd.f32 %v3141, %v3189
        %3191 = vmatmul.bf16.gmra.mxu0 %v2935
        %v3192 = vpop.f32.mrf.mxu0
        %v3193 = vadd.f32 %v3144, %v3192
        %v3194 = vpop.f32.mrf.mxu0
        %v3195 = vadd.f32 %v3146, %v3194
        %3196 = vmatmul.bf16.gmra.mxu0 %v2938
        %v3197 = vpop.f32.mrf.mxu0
        %v3198 = vadd.f32 %v3149, %v3197
        %v3199 = vpop.f32.mrf.mxu0
        %v3200 = vadd.f32 %v3151, %v3199
        %3201 = vmatmul.bf16.gmra.mxu0 %v2941
        %v3202 = vpop.f32.mrf.mxu0
        %v3203 = vadd.f32 %v3154, %v3202
        %v3204 = vpop.f32.mrf.mxu0
        %v3205 = vadd.f32 %v3156, %v3204
        %3206 = vmatmul.bf16.gmra.mxu0 %v2944
        %v3207 = vpop.f32.mrf.mxu0
        %v3208 = vadd.f32 %v3159, %v3207
        %v3209 = vpop.f32.mrf.mxu0
        %v3210 = vadd.f32 %v3161, %v3209
        %3211 = vdwg.mxu0
        %3212 = vmatpush.bf16.msra.mxu0 %v3089
        %3213 = vmatpush.bf16.msra.mxu0 %v3088
        %3214 = vmatpush.bf16.msra.mxu0 %v3087
        %3215 = vmatpush.bf16.msra.mxu0 %v3086
        %3216 = vmatpush.bf16.msra.mxu0 %v3085
        %3217 = vmatpush.bf16.msra.mxu0 %v3084
        %3218 = vmatpush.bf16.msra.mxu0 %v3083
        %3219 = vmatpush.bf16.msra.mxu0 %v3082
        %3220 = vmatmul.bf16.gmra.mxu0 %v2924
        %v3221 = vpop.f32.mrf.mxu0
        %v3222 = vadd.f32 %v3173, %v3221
        %v3223 = vpop.f32.mrf.mxu0
        %v3224 = vadd.f32 %v3175, %v3223
        %3225 = vmatmul.bf16.gmra.mxu0 %v2927
        %v3226 = vpop.f32.mrf.mxu0
        %v3227 = vadd.f32 %v3178, %v3226
        %v3228 = vpop.f32.mrf.mxu0
        %v3229 = vadd.f32 %v3180, %v3228
        %3230 = vmatmul.bf16.gmra.mxu0 %v2930
        %v3231 = vpop.f32.mrf.mxu0
        %v3232 = vadd.f32 %v3183, %v3231
        %v3233 = vpop.f32.mrf.mxu0
        %v3234 = vadd.f32 %v3185, %v3233
        %3235 = vmatmul.bf16.gmra.mxu0 %v2933
        %v3236 = vpop.f32.mrf.mxu0
        %v3237 = vadd.f32 %v3188, %v3236
        %v3238 = vpop.f32.mrf.mxu0
        %v3239 = vadd.f32 %v3190, %v3238
        %3240 = vmatmul.bf16.gmra.mxu0 %v2936
        %v3241 = vpop.f32.mrf.mxu0
        %v3242 = vadd.f32 %v3193, %v3241
        %v3243 = vpop.f32.mrf.mxu0
        %v3244 = vadd.f32 %v3195, %v3243
        %3245 = vmatmul.bf16.gmra.mxu0 %v2939
        %v3246 = vpop.f32.mrf.mxu0
        %v3247 = vadd.f32 %v3198, %v3246
        %v3248 = vpop.f32.mrf.mxu0
        %v3249 = vadd.f32 %v3200, %v3248
        %3250 = vmatmul.bf16.gmra.mxu0 %v2942
        %v3251 = vpop.f32.mrf.mxu0
        %v3252 = vadd.f32 %v3203, %v3251
        %v3253 = vpop.f32.mrf.mxu0
        %v3254 = vadd.f32 %v3205, %v3253
        %3255 = vmatmul.bf16.gmra.mxu0 %v2945
        %v3256 = vpop.f32.mrf.mxu0
        %v3257 = vadd.f32 %v3208, %v3256
        %v3258 = vpop.f32.mrf.mxu0
        %v3259 = vadd.f32 %v3210, %v3258
        %3260 = vdwg.mxu0
        %s3261 = sadd.s32 %s2250, 64
        %s3262 = sshra.s32 %s3261, 3
        %s3263 = sand.u32 %s3261, 7
        %s3264 = smul.u32 %s3262, 3
        %s3265 = smul.addr %s3264, 4
        %s3266 = scalar_lea.vmem [#allocation2], %s3265
        %v3267 = vld [vmem:[%s3266] sm:$0xff]
        %v3268 = vld [vmem:[%s3266 + $0x8] sm:$0xf]
        %v3269 = vld [vmem:[%s3266 + $0xc] sm:$0xff]
        %v3270 = vld [vmem:[%s3266 + $0x14] sm:$0xf]
        %v3271 = vld [vmem:[%s3266 + $0x18] sm:$0xff]
        %v3272 = vld [vmem:[%s3266 + $0x20] sm:$0xf]
        %v3273 = vld [vmem:[%s3266 + $0x24] sm:$0xff]
        %v3274 = vld [vmem:[%s3266 + $0x2c] sm:$0xf]
        %v3275 = vld [vmem:[%s3266 + $0x30] sm:$0xff]
        %v3276 = vld [vmem:[%s3266 + $0x38] sm:$0xf]
        %v3277 = vld [vmem:[%s3266 + $0x3c] sm:$0xff]
        %v3278 = vld [vmem:[%s3266 + $0x44] sm:$0xf]
        %v3279 = vld [vmem:[%s3266 + $0x48] sm:$0xff]
        %v3280 = vld [vmem:[%s3266 + $0x50] sm:$0xf]
        %v3281 = vld [vmem:[%s3266 + $0x54] sm:$0xff]
        %v3282 = vld [vmem:[%s3266 + $0x5c] sm:$0xf]
        %v3283 = vld [vmem:[%s3266 + $0x60] sm:$0xff]
        %v3284 = vld [vmem:[%s3266 + $0x68] sm:$0xf]
        %v3285 = vld [vmem:[%s3266 + $0x6c] sm:$0xff]
        %v3286 = vld [vmem:[%s3266 + $0x74] sm:$0xf]
        %v3287 = vld [vmem:[%s3266 + $0x78] sm:$0xff]
        %v3288 = vld [vmem:[%s3266 + $0x80] sm:$0xf]
        %v3289 = vld [vmem:[%s3266 + $0x84] sm:$0xff]
        %v3290 = vld [vmem:[%s3266 + $0x8c] sm:$0xf]
        %v3291 = vld [vmem:[%s3266 + $0x90] sm:$0xff]
        %v3292 = vld [vmem:[%s3266 + $0x98] sm:$0xf]
        %v3293 = vld [vmem:[%s3266 + $0x9c] sm:$0xff]
        %v3294 = vld [vmem:[%s3266 + $0xa4] sm:$0xf]
        %v3295 = vld [vmem:[%s3266 + $0xa8] sm:$0xff]
        %v3296 = vld [vmem:[%s3266 + $0xb0] sm:$0xf]
        %v3297 = vld [vmem:[%s3266 + $0xb4] sm:$0xff]
        %v3298 = vld [vmem:[%s3266 + $0xbc] sm:$0xf]
        %s3299 = scalar_lea.vmem %s2, 384
        %v3300 = vld [vmem:[%s3299] sm:$0xf]
        %v3301 = vld [vmem:[%s3299 + $0x4] sm:$0xf]
        %v3302 = vld [vmem:[%s3299 + $0x8] sm:$0xf]
        %v3303 = vld [vmem:[%s3299 + $0xc] sm:$0xf]
        %v3304 = vld [vmem:[%s3299 + $0x10] sm:$0xf]
        %v3305 = vld [vmem:[%s3299 + $0x14] sm:$0xf]
        %v3306 = vld [vmem:[%s3299 + $0x18] sm:$0xf]
        %v3307 = vld [vmem:[%s3299 + $0x1c] sm:$0xf]
        %v3308 = vld [vmem:[%s3299 + $0x20] sm:$0xf]
        %v3309 = vld [vmem:[%s3299 + $0x24] sm:$0xf]
        %v3310 = vld [vmem:[%s3299 + $0x28] sm:$0xf]
        %v3311 = vld [vmem:[%s3299 + $0x2c] sm:$0xf]
        %v3312 = vld [vmem:[%s3299 + $0x30] sm:$0xf]
        %v3313 = vld [vmem:[%s3299 + $0x34] sm:$0xf]
        %v3314 = vld [vmem:[%s3299 + $0x38] sm:$0xf]
        %v3315 = vld [vmem:[%s3299 + $0x3c] sm:$0xf]
        %v3316 = vld [vmem:[%s3299 + $0x40] sm:$0xf]
        %v3317 = vld [vmem:[%s3299 + $0x44] sm:$0xf]
        %v3318 = vld [vmem:[%s3299 + $0x48] sm:$0xf]
        %v3319 = vld [vmem:[%s3299 + $0x4c] sm:$0xf]
        %v3320 = vld [vmem:[%s3299 + $0x50] sm:$0xf]
        %v3321 = vld [vmem:[%s3299 + $0x54] sm:$0xf]
        %v3322 = vld [vmem:[%s3299 + $0x58] sm:$0xf]
        %v3323 = vld [vmem:[%s3299 + $0x5c] sm:$0xf]
        %v3324 = vld [vmem:[%s3299 + $0x60] sm:$0xf]
        %v3325 = vld [vmem:[%s3299 + $0x64] sm:$0xf]
        %v3326 = vld [vmem:[%s3299 + $0x68] sm:$0xf]
        %v3327 = vld [vmem:[%s3299 + $0x6c] sm:$0xf]
        %v3328 = vld [vmem:[%s3299 + $0x70] sm:$0xf]
        %v3329 = vld [vmem:[%s3299 + $0x74] sm:$0xf]
        %v3330 = vld [vmem:[%s3299 + $0x78] sm:$0xf]
        %v3331 = vld [vmem:[%s3299 + $0x7c] sm:$0xf]
        %v3332 = vld [vmem:[%s3299 + $0x80] sm:$0xf]
        %v3333 = vld [vmem:[%s3299 + $0x84] sm:$0xf]
        %v3334 = vld [vmem:[%s3299 + $0x88] sm:$0xf]
        %v3335 = vld [vmem:[%s3299 + $0x8c] sm:$0xf]
        %v3336 = vld [vmem:[%s3299 + $0x90] sm:$0xf]
        %v3337 = vld [vmem:[%s3299 + $0x94] sm:$0xf]
        %v3338 = vld [vmem:[%s3299 + $0x98] sm:$0xf]
        %v3339 = vld [vmem:[%s3299 + $0x9c] sm:$0xf]
        %v3340 = vld [vmem:[%s3299 + $0xa0] sm:$0xf]
        %v3341 = vld [vmem:[%s3299 + $0xa4] sm:$0xf]
        %v3342 = vld [vmem:[%s3299 + $0xa8] sm:$0xf]
        %v3343 = vld [vmem:[%s3299 + $0xac] sm:$0xf]
        %v3344 = vld [vmem:[%s3299 + $0xb0] sm:$0xf]
        %v3345 = vld [vmem:[%s3299 + $0xb4] sm:$0xf]
        %v3346 = vld [vmem:[%s3299 + $0xb8] sm:$0xf]
        %v3347 = vld [vmem:[%s3299 + $0xbc] sm:$0xf]
        %v3380 = vunpack.c.l.b16 %v3267
        %v3381 = vunpack.c.h.b16 %v3267
        %v3382 = vunpack.c.l.b16 %v3268
        %v3383 = vunpack.c.l.b16 %v3269
        %v3384 = vunpack.c.h.b16 %v3269
        %v3385 = vunpack.c.l.b16 %v3270
        %v3386 = vunpack.c.l.b16 %v3271
        %v3387 = vunpack.c.h.b16 %v3271
        %v3388 = vunpack.c.l.b16 %v3272
        %v3389 = vunpack.c.l.b16 %v3273
        %v3390 = vunpack.c.h.b16 %v3273
        %v3391 = vunpack.c.l.b16 %v3274
        %v3392 = vunpack.c.l.b16 %v3275
        %v3393 = vunpack.c.h.b16 %v3275
        %v3394 = vunpack.c.l.b16 %v3276
        %v3395 = vunpack.c.l.b16 %v3277
        %v3396 = vunpack.c.h.b16 %v3277
        %v3397 = vunpack.c.l.b16 %v3278
        %v3398 = vunpack.c.l.b16 %v3279
        %v3399 = vunpack.c.h.b16 %v3279
        %v3400 = vunpack.c.l.b16 %v3280
        %v3401 = vunpack.c.l.b16 %v3281
        %v3402 = vunpack.c.h.b16 %v3281
        %v3403 = vunpack.c.l.b16 %v3282
        %v3404 = vunpack.c.l.b16 %v3283
        %v3405 = vunpack.c.h.b16 %v3283
        %v3406 = vunpack.c.l.b16 %v3284
        %v3407 = vunpack.c.l.b16 %v3285
        %v3408 = vunpack.c.h.b16 %v3285
        %v3409 = vunpack.c.l.b16 %v3286
        %v3410 = vunpack.c.l.b16 %v3287
        %v3411 = vunpack.c.h.b16 %v3287
        %v3412 = vunpack.c.l.b16 %v3288
        %v3413 = vunpack.c.l.b16 %v3289
        %v3414 = vunpack.c.h.b16 %v3289
        %v3415 = vunpack.c.l.b16 %v3290
        %v3416 = vunpack.c.l.b16 %v3291
        %v3417 = vunpack.c.h.b16 %v3291
        %v3418 = vunpack.c.l.b16 %v3292
        %v3419 = vunpack.c.l.b16 %v3293
        %v3420 = vunpack.c.h.b16 %v3293
        %v3421 = vunpack.c.l.b16 %v3294
        %v3422 = vunpack.c.l.b16 %v3295
        %v3423 = vunpack.c.h.b16 %v3295
        %v3424 = vunpack.c.l.b16 %v3296
        %v3425 = vunpack.c.l.b16 %v3297
        %v3426 = vunpack.c.h.b16 %v3297
        %v3427 = vunpack.c.l.b16 %v3298
        %v3428 = vpack.c.b16 %v3383, %v3380
        %v3429 = vpack.c.b16 %v3384, %v3381
        %v3430 = vpack.c.b16 %v3385, %v3382
        %v3431 = vpack.c.b16 %v3389, %v3386
        %v3432 = vpack.c.b16 %v3390, %v3387
        %v3433 = vpack.c.b16 %v3391, %v3388
        %v3434 = vpack.c.b16 %v3395, %v3392
        %v3435 = vpack.c.b16 %v3396, %v3393
        %v3436 = vpack.c.b16 %v3397, %v3394
        %v3437 = vpack.c.b16 %v3401, %v3398
        %v3438 = vpack.c.b16 %v3402, %v3399
        %v3439 = vpack.c.b16 %v3403, %v3400
        %v3440 = vpack.c.b16 %v3407, %v3404
        %v3441 = vpack.c.b16 %v3408, %v3405
        %v3442 = vpack.c.b16 %v3409, %v3406
        %v3443 = vpack.c.b16 %v3413, %v3410
        %v3444 = vpack.c.b16 %v3414, %v3411
        %v3445 = vpack.c.b16 %v3415, %v3412
        %v3446 = vpack.c.b16 %v3419, %v3416
        %v3447 = vpack.c.b16 %v3420, %v3417
        %v3448 = vpack.c.b16 %v3421, %v3418
        %v3449 = vpack.c.b16 %v3425, %v3422
        %v3450 = vpack.c.b16 %v3426, %v3423
        %v3451 = vpack.c.b16 %v3427, %v3424
        %v3524 = vunpack.c.l.b16 %v3300
        %v3525 = vunpack.c.l.b16 %v3301
        %v3526 = vunpack.c.l.b16 %v3302
        %v3527 = vunpack.c.l.b16 %v3303
        %v3528 = vunpack.c.l.b16 %v3304
        %v3529 = vunpack.c.l.b16 %v3305
        %v3530 = vunpack.c.l.b16 %v3306
        %v3531 = vunpack.c.l.b16 %v3307
        %v3532 = vunpack.c.l.b16 %v3308
        %v3533 = vunpack.c.l.b16 %v3309
        %v3534 = vunpack.c.l.b16 %v3310
        %v3535 = vunpack.c.l.b16 %v3311
        %v3536 = vunpack.c.l.b16 %v3312
        %v3537 = vunpack.c.l.b16 %v3313
        %v3538 = vunpack.c.l.b16 %v3314
        %v3539 = vunpack.c.l.b16 %v3315
        %v3540 = vunpack.c.l.b16 %v3316
        %v3541 = vunpack.c.l.b16 %v3317
        %v3542 = vunpack.c.l.b16 %v3318
        %v3543 = vunpack.c.l.b16 %v3319
        %v3544 = vunpack.c.l.b16 %v3320
        %v3545 = vunpack.c.l.b16 %v3321
        %v3546 = vunpack.c.l.b16 %v3322
        %v3547 = vunpack.c.l.b16 %v3323
        %v3548 = vunpack.c.l.b16 %v3324
        %v3549 = vunpack.c.l.b16 %v3325
        %v3550 = vunpack.c.l.b16 %v3326
        %v3551 = vunpack.c.l.b16 %v3327
        %v3552 = vunpack.c.l.b16 %v3328
        %v3553 = vunpack.c.l.b16 %v3329
        %v3554 = vunpack.c.l.b16 %v3330
        %v3555 = vunpack.c.l.b16 %v3331
        %v3556 = vunpack.c.l.b16 %v3332
        %v3557 = vunpack.c.l.b16 %v3333
        %v3558 = vunpack.c.l.b16 %v3334
        %v3559 = vunpack.c.l.b16 %v3335
        %v3560 = vunpack.c.l.b16 %v3336
        %v3561 = vunpack.c.l.b16 %v3337
        %v3562 = vunpack.c.l.b16 %v3338
        %v3563 = vunpack.c.l.b16 %v3339
        %v3564 = vunpack.c.l.b16 %v3340
        %v3565 = vunpack.c.l.b16 %v3341
        %v3566 = vunpack.c.l.b16 %v3342
        %v3567 = vunpack.c.l.b16 %v3343
        %v3568 = vunpack.c.l.b16 %v3344
        %v3569 = vunpack.c.l.b16 %v3345
        %v3570 = vunpack.c.l.b16 %v3346
        %v3571 = vunpack.c.l.b16 %v3347
        %v3572 = vpack.c.b16 %v3525, %v3524
        %v3573 = vpack.c.b16 %v3527, %v3526
        %v3574 = vpack.c.b16 %v3529, %v3528
        %v3575 = vpack.c.b16 %v3531, %v3530
        %v3576 = vpack.c.b16 %v3533, %v3532
        %v3577 = vpack.c.b16 %v3535, %v3534
        %v3578 = vpack.c.b16 %v3537, %v3536
        %v3579 = vpack.c.b16 %v3539, %v3538
        %v3580 = vpack.c.b16 %v3541, %v3540
        %v3581 = vpack.c.b16 %v3543, %v3542
        %v3582 = vpack.c.b16 %v3545, %v3544
        %v3583 = vpack.c.b16 %v3547, %v3546
        %v3584 = vpack.c.b16 %v3549, %v3548
        %v3585 = vpack.c.b16 %v3551, %v3550
        %v3586 = vpack.c.b16 %v3553, %v3552
        %v3587 = vpack.c.b16 %v3555, %v3554
        %v3588 = vpack.c.b16 %v3557, %v3556
        %v3589 = vpack.c.b16 %v3559, %v3558
        %v3590 = vpack.c.b16 %v3561, %v3560
        %v3591 = vpack.c.b16 %v3563, %v3562
        %v3592 = vpack.c.b16 %v3565, %v3564
        %v3593 = vpack.c.b16 %v3567, %v3566
        %v3594 = vpack.c.b16 %v3569, %v3568
        %v3595 = vpack.c.b16 %v3571, %v3570
        %3620 = vmatpush.bf16.msra.mxu0 %v3579
        %3621 = vmatpush.bf16.msra.mxu0 %v3578
        %3622 = vmatpush.bf16.msra.mxu0 %v3577
        %3623 = vmatpush.bf16.msra.mxu0 %v3576
        %3624 = vmatpush.bf16.msra.mxu0 %v3575
        %3625 = vmatpush.bf16.msra.mxu0 %v3574
        %3626 = vmatpush.bf16.msra.mxu0 %v3573
        %3627 = vmatpush.bf16.msra.mxu0 %v3572
        %3628 = vmatmul.bf16.gmra.mxu0 %v3428
        %v3629 = vpop.f32.mrf.mxu0
        %v3630 = vadd.f32 0.0, %v3629
        %v3631 = vpop.f32.mrf.mxu0
        %v3632 = vadd.f32 0.0, %v3631
        %3633 = vmatmul.bf16.gmra.mxu0 %v3431
        %v3634 = vpop.f32.mrf.mxu0
        %v3635 = vadd.f32 0.0, %v3634
        %v3636 = vpop.f32.mrf.mxu0
        %v3637 = vadd.f32 0.0, %v3636
        %3638 = vmatmul.bf16.gmra.mxu0 %v3434
        %v3639 = vpop.f32.mrf.mxu0
        %v3640 = vadd.f32 0.0, %v3639
        %v3641 = vpop.f32.mrf.mxu0
        %v3642 = vadd.f32 0.0, %v3641
        %3643 = vmatmul.bf16.gmra.mxu0 %v3437
        %v3644 = vpop.f32.mrf.mxu0
        %v3645 = vadd.f32 0.0, %v3644
        %v3646 = vpop.f32.mrf.mxu0
        %v3647 = vadd.f32 0.0, %v3646
        %3648 = vmatmul.bf16.gmra.mxu0 %v3440
        %v3649 = vpop.f32.mrf.mxu0
        %v3650 = vadd.f32 0.0, %v3649
        %v3651 = vpop.f32.mrf.mxu0
        %v3652 = vadd.f32 0.0, %v3651
        %3653 = vmatmul.bf16.gmra.mxu0 %v3443
        %v3654 = vpop.f32.mrf.mxu0
        %v3655 = vadd.f32 0.0, %v3654
        %v3656 = vpop.f32.mrf.mxu0
        %v3657 = vadd.f32 0.0, %v3656
        %3658 = vmatmul.bf16.gmra.mxu0 %v3446
        %v3659 = vpop.f32.mrf.mxu0
        %v3660 = vadd.f32 0.0, %v3659
        %v3661 = vpop.f32.mrf.mxu0
        %v3662 = vadd.f32 0.0, %v3661
        %3663 = vmatmul.bf16.gmra.mxu0 %v3449
        %v3664 = vpop.f32.mrf.mxu0
        %v3665 = vadd.f32 0.0, %v3664
        %v3666 = vpop.f32.mrf.mxu0
        %v3667 = vadd.f32 0.0, %v3666
        %3668 = vdwg.mxu0
        %3669 = vmatpush.bf16.msra.mxu0 %v3587
        %3670 = vmatpush.bf16.msra.mxu0 %v3586
        %3671 = vmatpush.bf16.msra.mxu0 %v3585
        %3672 = vmatpush.bf16.msra.mxu0 %v3584
        %3673 = vmatpush.bf16.msra.mxu0 %v3583
        %3674 = vmatpush.bf16.msra.mxu0 %v3582
        %3675 = vmatpush.bf16.msra.mxu0 %v3581
        %3676 = vmatpush.bf16.msra.mxu0 %v3580
        %3677 = vmatmul.bf16.gmra.mxu0 %v3429
        %v3678 = vpop.f32.mrf.mxu0
        %v3679 = vadd.f32 %v3630, %v3678
        %v3680 = vpop.f32.mrf.mxu0
        %v3681 = vadd.f32 %v3632, %v3680
        %3682 = vmatmul.bf16.gmra.mxu0 %v3432
        %v3683 = vpop.f32.mrf.mxu0
        %v3684 = vadd.f32 %v3635, %v3683
        %v3685 = vpop.f32.mrf.mxu0
        %v3686 = vadd.f32 %v3637, %v3685
        %3687 = vmatmul.bf16.gmra.mxu0 %v3435
        %v3688 = vpop.f32.mrf.mxu0
        %v3689 = vadd.f32 %v3640, %v3688
        %v3690 = vpop.f32.mrf.mxu0
        %v3691 = vadd.f32 %v3642, %v3690
        %3692 = vmatmul.bf16.gmra.mxu0 %v3438
        %v3693 = vpop.f32.mrf.mxu0
        %v3694 = vadd.f32 %v3645, %v3693
        %v3695 = vpop.f32.mrf.mxu0
        %v3696 = vadd.f32 %v3647, %v3695
        %3697 = vmatmul.bf16.gmra.mxu0 %v3441
        %v3698 = vpop.f32.mrf.mxu0
        %v3699 = vadd.f32 %v3650, %v3698
        %v3700 = vpop.f32.mrf.mxu0
        %v3701 = vadd.f32 %v3652, %v3700
        %3702 = vmatmul.bf16.gmra.mxu0 %v3444
        %v3703 = vpop.f32.mrf.mxu0
        %v3704 = vadd.f32 %v3655, %v3703
        %v3705 = vpop.f32.mrf.mxu0
        %v3706 = vadd.f32 %v3657, %v3705
        %3707 = vmatmul.bf16.gmra.mxu0 %v3447
        %v3708 = vpop.f32.mrf.mxu0
        %v3709 = vadd.f32 %v3660, %v3708
        %v3710 = vpop.f32.mrf.mxu0
        %v3711 = vadd.f32 %v3662, %v3710
        %3712 = vmatmul.bf16.gmra.mxu0 %v3450
        %v3713 = vpop.f32.mrf.mxu0
        %v3714 = vadd.f32 %v3665, %v3713
        %v3715 = vpop.f32.mrf.mxu0
        %v3716 = vadd.f32 %v3667, %v3715
        %3717 = vdwg.mxu0
        %3718 = vmatpush.bf16.msra.mxu0 %v3595
        %3719 = vmatpush.bf16.msra.mxu0 %v3594
        %3720 = vmatpush.bf16.msra.mxu0 %v3593
        %3721 = vmatpush.bf16.msra.mxu0 %v3592
        %3722 = vmatpush.bf16.msra.mxu0 %v3591
        %3723 = vmatpush.bf16.msra.mxu0 %v3590
        %3724 = vmatpush.bf16.msra.mxu0 %v3589
        %3725 = vmatpush.bf16.msra.mxu0 %v3588
        %3726 = vmatmul.bf16.gmra.mxu0 %v3430
        %v3727 = vpop.f32.mrf.mxu0
        %v3728 = vadd.f32 %v3679, %v3727
        %v3729 = vpop.f32.mrf.mxu0
        %v3730 = vadd.f32 %v3681, %v3729
        %3731 = vmatmul.bf16.gmra.mxu0 %v3433
        %v3732 = vpop.f32.mrf.mxu0
        %v3733 = vadd.f32 %v3684, %v3732
        %v3734 = vpop.f32.mrf.mxu0
        %v3735 = vadd.f32 %v3686, %v3734
        %3736 = vmatmul.bf16.gmra.mxu0 %v3436
        %v3737 = vpop.f32.mrf.mxu0
        %v3738 = vadd.f32 %v3689, %v3737
        %v3739 = vpop.f32.mrf.mxu0
        %v3740 = vadd.f32 %v3691, %v3739
        %3741 = vmatmul.bf16.gmra.mxu0 %v3439
        %v3742 = vpop.f32.mrf.mxu0
        %v3743 = vadd.f32 %v3694, %v3742
        %v3744 = vpop.f32.mrf.mxu0
        %v3745 = vadd.f32 %v3696, %v3744
        %3746 = vmatmul.bf16.gmra.mxu0 %v3442
        %v3747 = vpop.f32.mrf.mxu0
        %v3748 = vadd.f32 %v3699, %v3747
        %v3749 = vpop.f32.mrf.mxu0
        %v3750 = vadd.f32 %v3701, %v3749
        %3751 = vmatmul.bf16.gmra.mxu0 %v3445
        %v3752 = vpop.f32.mrf.mxu0
        %v3753 = vadd.f32 %v3704, %v3752
        %v3754 = vpop.f32.mrf.mxu0
        %v3755 = vadd.f32 %v3706, %v3754
        %3756 = vmatmul.bf16.gmra.mxu0 %v3448
        %v3757 = vpop.f32.mrf.mxu0
        %v3758 = vadd.f32 %v3709, %v3757
        %v3759 = vpop.f32.mrf.mxu0
        %v3760 = vadd.f32 %v3711, %v3759
        %3761 = vmatmul.bf16.gmra.mxu0 %v3451
        %v3762 = vpop.f32.mrf.mxu0
        %v3763 = vadd.f32 %v3714, %v3762
        %v3764 = vpop.f32.mrf.mxu0
        %v3765 = vadd.f32 %v3716, %v3764
        %3766 = vdwg.mxu0
        %v3767 = vadd.f32 %v3222, %v3728
        %v3768 = vadd.f32 %v3224, %v3730
        %v3769 = vadd.f32 %v3227, %v3733
        %v3770 = vadd.f32 %v3229, %v3735
        %v3771 = vadd.f32 %v3232, %v3738
        %v3772 = vadd.f32 %v3234, %v3740
        %v3773 = vadd.f32 %v3237, %v3743
        %v3774 = vadd.f32 %v3239, %v3745
        %v3775 = vadd.f32 %v3242, %v3748
        %v3776 = vadd.f32 %v3244, %v3750
        %v3777 = vadd.f32 %v3247, %v3753
        %v3778 = vadd.f32 %v3249, %v3755
        %v3779 = vadd.f32 %v3252, %v3758
        %v3780 = vadd.f32 %v3254, %v3760
        %v3781 = vadd.f32 %v3257, %v3763
        %v3782 = vadd.f32 %v3259, %v3765
        %v3783 = vld [vmem:[%s3] sm:$0x1]
        %v3785 = vperm.slane %v3783, 0
        %v3787 = vadd.f32 %v3767, %v3785
        %v3788 = vadd.f32 %v3768, %v3785
        %v3789 = vadd.f32 %v3769, %v3785
        %v3790 = vadd.f32 %v3770, %v3785
        %v3791 = vadd.f32 %v3771, %v3785
        %v3792 = vadd.f32 %v3772, %v3785
        %v3793 = vadd.f32 %v3773, %v3785
        %v3794 = vadd.f32 %v3774, %v3785
        %v3795 = vadd.f32 %v3775, %v3785
        %v3796 = vadd.f32 %v3776, %v3785
        %v3797 = vadd.f32 %v3777, %v3785
        %v3798 = vadd.f32 %v3778, %v3785
        %v3799 = vadd.f32 %v3779, %v3785
        %v3800 = vadd.f32 %v3780, %v3785
        %v3801 = vadd.f32 %v3781, %v3785
        %v3802 = vadd.f32 %v3782, %v3785
        %v3803 = vmax.f32 %v3787, 0.0
        %v3804 = vmax.f32 %v3788, 0.0
        %v3805 = vmax.f32 %v3789, 0.0
        %v3806 = vmax.f32 %v3790, 0.0
        %v3807 = vmax.f32 %v3791, 0.0
        %v3808 = vmax.f32 %v3792, 0.0
        %v3809 = vmax.f32 %v3793, 0.0
        %v3810 = vmax.f32 %v3794, 0.0
        %v3811 = vmax.f32 %v3795, 0.0
        %v3812 = vmax.f32 %v3796, 0.0
        %v3813 = vmax.f32 %v3797, 0.0
        %v3814 = vmax.f32 %v3798, 0.0
        %v3815 = vmax.f32 %v3799, 0.0
        %v3816 = vmax.f32 %v3800, 0.0
        %v3817 = vmax.f32 %v3801, 0.0
        %v3818 = vmax.f32 %v3802, 0.0
        %s3819 = scalar_lea.vmem %s284, %s2250
        %v3820 = vld [vmem:[%s3819] sm:$0xff]
        %v3821 = vld [vmem:[%s3819 + $0x8] sm:$0xff]
        %v3822 = vld [vmem:[%s3819 + $0x10] sm:$0xff]
        %v3823 = vld [vmem:[%s3819 + $0x18] sm:$0xff]
        %v3824 = vld [vmem:[%s3819 + $0x20] sm:$0xff]
        %v3825 = vld [vmem:[%s3819 + $0x28] sm:$0xff]
        %v3826 = vld [vmem:[%s3819 + $0x30] sm:$0xff]
        %v3827 = vld [vmem:[%s3819 + $0x38] sm:$0xff]
        %v3828 = vld [vmem:[%s3819 + $0x40] sm:$0xff]
        %v3829 = vld [vmem:[%s3819 + $0x48] sm:$0xff]
        %v3830 = vld [vmem:[%s3819 + $0x50] sm:$0xff]
        %v3831 = vld [vmem:[%s3819 + $0x58] sm:$0xff]
        %v3832 = vld [vmem:[%s3819 + $0x60] sm:$0xff]
        %v3833 = vld [vmem:[%s3819 + $0x68] sm:$0xff]
        %v3834 = vld [vmem:[%s3819 + $0x70] sm:$0xff]
        %v3835 = vld [vmem:[%s3819 + $0x78] sm:$0xff]
        %3837 = vset.pattern.permute.xlu0 0
        %3838 = vperm.xlu0 %3837, %v3820
        %v3839 = vpop.permute.xlu0 %3838
        %3842 = vset.pattern.permute.xlu0 0
        %3843 = vperm.xlu0 %3842, %v3821
        %v3844 = vpop.permute.xlu0 %3843
        %3847 = vset.pattern.permute.xlu0 0
        %3848 = vperm.xlu0 %3847, %v3822
        %v3849 = vpop.permute.xlu0 %3848
        %3852 = vset.pattern.permute.xlu0 0
        %3853 = vperm.xlu0 %3852, %v3823
        %v3854 = vpop.permute.xlu0 %3853
        %3857 = vset.pattern.permute.xlu0 0
        %3858 = vperm.xlu0 %3857, %v3824
        %v3859 = vpop.permute.xlu0 %3858
        %3862 = vset.pattern.permute.xlu0 0
        %3863 = vperm.xlu0 %3862, %v3825
        %v3864 = vpop.permute.xlu0 %3863
        %3867 = vset.pattern.permute.xlu0 0
        %3868 = vperm.xlu0 %3867, %v3826
        %v3869 = vpop.permute.xlu0 %3868
        %3872 = vset.pattern.permute.xlu0 0
        %3873 = vperm.xlu0 %3872, %v3827
        %v3874 = vpop.permute.xlu0 %3873
        %3877 = vset.pattern.permute.xlu0 0
        %3878 = vperm.xlu0 %3877, %v3828
        %v3879 = vpop.permute.xlu0 %3878
        %3882 = vset.pattern.permute.xlu0 0
        %3883 = vperm.xlu0 %3882, %v3829
        %v3884 = vpop.permute.xlu0 %3883
        %3887 = vset.pattern.permute.xlu0 0
        %3888 = vperm.xlu0 %3887, %v3830
        %v3889 = vpop.permute.xlu0 %3888
        %3892 = vset.pattern.permute.xlu0 0
        %3893 = vperm.xlu0 %3892, %v3831
        %v3894 = vpop.permute.xlu0 %3893
        %3897 = vset.pattern.permute.xlu0 0
        %3898 = vperm.xlu0 %3897, %v3832
        %v3899 = vpop.permute.xlu0 %3898
        %3902 = vset.pattern.permute.xlu0 0
        %3903 = vperm.xlu0 %3902, %v3833
        %v3904 = vpop.permute.xlu0 %3903
        %3907 = vset.pattern.permute.xlu0 0
        %3908 = vperm.xlu0 %3907, %v3834
        %v3909 = vpop.permute.xlu0 %3908
        %3912 = vset.pattern.permute.xlu0 0
        %3913 = vperm.xlu0 %3912, %v3835
        %v3914 = vpop.permute.xlu0 %3913
        %v3916 = vmul.f32 %v3803, %v3839
        %v3917 = vmul.f32 %v3804, %v3844
        %v3918 = vmul.f32 %v3805, %v3849
        %v3919 = vmul.f32 %v3806, %v3854
        %v3920 = vmul.f32 %v3807, %v3859
        %v3921 = vmul.f32 %v3808, %v3864
        %v3922 = vmul.f32 %v3809, %v3869
        %v3923 = vmul.f32 %v3810, %v3874
        %v3924 = vmul.f32 %v3811, %v3879
        %v3925 = vmul.f32 %v3812, %v3884
        %v3926 = vmul.f32 %v3813, %v3889
        %v3927 = vmul.f32 %v3814, %v3894
        %v3928 = vmul.f32 %v3815, %v3899
        %v3929 = vmul.f32 %v3816, %v3904
        %v3930 = vmul.f32 %v3817, %v3909
        %v3931 = vmul.f32 %v3818, %v3914
        %v3932 = vpack.c.bf16 %v3916, %v3916
        %v3933 = vpack.c.bf16 %v3917, %v3917
        %v3934 = vpack.c.bf16 %v3918, %v3918
        %v3935 = vpack.c.bf16 %v3919, %v3919
        %v3936 = vpack.c.bf16 %v3920, %v3920
        %v3937 = vpack.c.bf16 %v3921, %v3921
        %v3938 = vpack.c.bf16 %v3922, %v3922
        %v3939 = vpack.c.bf16 %v3923, %v3923
        %v3940 = vpack.c.bf16 %v3924, %v3924
        %v3941 = vpack.c.bf16 %v3925, %v3925
        %v3942 = vpack.c.bf16 %v3926, %v3926
        %v3943 = vpack.c.bf16 %v3927, %v3927
        %v3944 = vpack.c.bf16 %v3928, %v3928
        %v3945 = vpack.c.bf16 %v3929, %v3929
        %v3946 = vpack.c.bf16 %v3930, %v3930
        %v3947 = vpack.c.bf16 %v3931, %v3931
        %s3948 = smul.addr %s2253, 4
        %s3949 = scalar_lea.vmem [#allocation3], %s3948
        %3950 = vst [vmem:[%s3949] sm:$0xf] %v3932
        %3951 = vst [vmem:[%s3949 + $0xc] sm:$0xf] %v3933
        %3952 = vst [vmem:[%s3949 + $0x18] sm:$0xf] %v3934
        %3953 = vst [vmem:[%s3949 + $0x24] sm:$0xf] %v3935
        %3954 = vst [vmem:[%s3949 + $0x30] sm:$0xf] %v3936
        %3955 = vst [vmem:[%s3949 + $0x3c] sm:$0xf] %v3937
        %3956 = vst [vmem:[%s3949 + $0x48] sm:$0xf] %v3938
        %3957 = vst [vmem:[%s3949 + $0x54] sm:$0xf] %v3939
        %3958 = vst [vmem:[%s3949 + $0x60] sm:$0xf] %v3940
        %3959 = vst [vmem:[%s3949 + $0x6c] sm:$0xf] %v3941
        %3960 = vst [vmem:[%s3949 + $0x78] sm:$0xf] %v3942
        %3961 = vst [vmem:[%s3949 + $0x84] sm:$0xf] %v3943
        %3962 = vst [vmem:[%s3949 + $0x90] sm:$0xf] %v3944
        %3963 = vst [vmem:[%s3949 + $0x9c] sm:$0xf] %v3945
        %3964 = vst [vmem:[%s3949 + $0xa8] sm:$0xf] %v3946
        %3965 = vst [vmem:[%s3949 + $0xb4] sm:$0xf] %v3947
      $region49: #{_successive_conv_impl.1} parent=43 // loop_footer
        %s2249 = sadd.s32 1, %s2245
      $region50: #{_successive_conv_impl.1} parent=43 // loop_footer_branch
        %2244 = sbr.rel target = $region46
      $region51: #{_successive_conv_impl.1} parent=43 // loop_exit
        _
      %v3966 = vld [vmem:[#allocation3] sm:$0xf]
      %v3967 = vld [vmem:[#allocation3 + $0xc] sm:$0xf]
      %v3968 = vld [vmem:[#allocation3 + $0x18] sm:$0xf]
      %v3969 = vld [vmem:[#allocation3 + $0x24] sm:$0xf]
      %v3970 = vld [vmem:[#allocation3 + $0x30] sm:$0xf]
      %v3971 = vld [vmem:[#allocation3 + $0x3c] sm:$0xf]
      %v3972 = vld [vmem:[#allocation3 + $0x48] sm:$0xf]
      %v3973 = vld [vmem:[#allocation3 + $0x54] sm:$0xf]
      %v3974 = vld [vmem:[#allocation3 + $0x60] sm:$0xf]
      %v3975 = vld [vmem:[#allocation3 + $0x6c] sm:$0xf]
      %v3976 = vld [vmem:[#allocation3 + $0x78] sm:$0xf]
      %v3977 = vld [vmem:[#allocation3 + $0x84] sm:$0xf]
      %v3978 = vld [vmem:[#allocation3 + $0x90] sm:$0xf]
      %v3979 = vld [vmem:[#allocation3 + $0x9c] sm:$0xf]
      %v3980 = vld [vmem:[#allocation3 + $0xa8] sm:$0xf]
      %v3981 = vld [vmem:[#allocation3 + $0xb4] sm:$0xf]
      %v3982 = vld [vmem:[#allocation3 + $0xc0] sm:$0xf]
      %v3983 = vld [vmem:[#allocation3 + $0xcc] sm:$0xf]
      %v3984 = vld [vmem:[#allocation3 + $0xd8] sm:$0xf]
      %v3985 = vld [vmem:[#allocation3 + $0xe4] sm:$0xf]
      %v3986 = vld [vmem:[#allocation3 + $0xf0] sm:$0xf]
      %v3987 = vld [vmem:[#allocation3 + $0xfc] sm:$0xf]
      %v3988 = vld [vmem:[#allocation3 + $0x108] sm:$0xf]
      %v3989 = vld [vmem:[#allocation3 + $0x114] sm:$0xf]
      %v3990 = vld [vmem:[#allocation3 + $0x120] sm:$0xf]
      %v3991 = vld [vmem:[#allocation3 + $0x12c] sm:$0xf]
      %v3992 = vld [vmem:[#allocation3 + $0x138] sm:$0xf]
      %v3993 = vld [vmem:[#allocation3 + $0x144] sm:$0xf]
      %v3994 = vld [vmem:[#allocation3 + $0x150] sm:$0xf]
      %v3995 = vld [vmem:[#allocation3 + $0x15c] sm:$0xf]
      %v3996 = vld [vmem:[#allocation3 + $0x168] sm:$0xf]
      %v3997 = vld [vmem:[#allocation3 + $0x174] sm:$0xf]
      %v3998 = vld [vmem:[#allocation3 + $0x180] sm:$0xf]
      %v3999 = vld [vmem:[#allocation3 + $0x18c] sm:$0xf]
      %v4000 = vld [vmem:[#allocation3 + $0x198] sm:$0xf]
      %v4001 = vld [vmem:[#allocation3 + $0x1a4] sm:$0xf]
      %v4002 = vld [vmem:[#allocation3 + $0x1b0] sm:$0xf]
      %v4003 = vld [vmem:[#allocation3 + $0x1bc] sm:$0xf]
      %v4004 = vld [vmem:[#allocation3 + $0x1c8] sm:$0xf]
      %v4005 = vld [vmem:[#allocation3 + $0x1d4] sm:$0xf]
      %v4006 = vld [vmem:[#allocation3 + $0x1e0] sm:$0xf]
      %v4007 = vld [vmem:[#allocation3 + $0x1ec] sm:$0xf]
      %v4008 = vld [vmem:[#allocation3 + $0x1f8] sm:$0xf]
      %v4009 = vld [vmem:[#allocation3 + $0x204] sm:$0xf]
      %v4010 = vld [vmem:[#allocation3 + $0x210] sm:$0xf]
      %v4011 = vld [vmem:[#allocation3 + $0x21c] sm:$0xf]
      %v4012 = vld [vmem:[#allocation3 + $0x228] sm:$0xf]
      %v4013 = vld [vmem:[#allocation3 + $0x234] sm:$0xf]
      %v4014 = vld [vmem:[#allocation3 + $0x240] sm:$0xf]
      %v4015 = vld [vmem:[#allocation3 + $0x24c] sm:$0xf]
      %v4016 = vld [vmem:[#allocation3 + $0x258] sm:$0xf]
      %v4017 = vld [vmem:[#allocation3 + $0x264] sm:$0xf]
      %v4018 = vld [vmem:[#allocation3 + $0x270] sm:$0xf]
      %v4019 = vld [vmem:[#allocation3 + $0x27c] sm:$0xf]
      %v4020 = vld [vmem:[#allocation3 + $0x288] sm:$0xf]
      %v4021 = vld [vmem:[#allocation3 + $0x294] sm:$0xf]
      %v4022 = vld [vmem:[#allocation3 + $0x2a0] sm:$0xf]
      %v4023 = vld [vmem:[#allocation3 + $0x2ac] sm:$0xf]
      %v4024 = vld [vmem:[#allocation3 + $0x2b8] sm:$0xf]
      %v4025 = vld [vmem:[#allocation3 + $0x2c4] sm:$0xf]
      %v4026 = vld [vmem:[#allocation3 + $0x2d0] sm:$0xf]
      %v4027 = vld [vmem:[#allocation3 + $0x2dc] sm:$0xf]
      %v4028 = vld [vmem:[#allocation3 + $0x2e8] sm:$0xf]
      %v4029 = vld [vmem:[#allocation3 + $0x2f4] sm:$0xf]
      %v4030 = vld [vmem:[#allocation3 + $0x300] sm:$0xf]
      %v4031 = vld [vmem:[#allocation3 + $0x30c] sm:$0xf]
      %v4032 = vld [vmem:[#allocation3 + $0x318] sm:$0xf]
      %v4033 = vld [vmem:[#allocation3 + $0x324] sm:$0xf]
      %v4034 = vld [vmem:[#allocation3 + $0x330] sm:$0xf]
      %v4035 = vld [vmem:[#allocation3 + $0x33c] sm:$0xf]
      %v4036 = vld [vmem:[#allocation3 + $0x348] sm:$0xf]
      %v4037 = vld [vmem:[#allocation3 + $0x354] sm:$0xf]
      %v4038 = vld [vmem:[#allocation3 + $0x360] sm:$0x1]
      %v4040 = vshrl.u32 %v3966, 16
      %v4042 = vrot.slane %v4040, 4
      %v4043 = vshll.u32 %v3966, 16
      %v4045 = vrot.slane %v4043, 5
      %v4046 = vor.u32 %v4042, %v4045
      %v4047 = vrot.slane %v4046, 4
      %v4049 = vshll.u32 %v3967, 16
      %v4051 = vrot.slane %v4049, 5
      %v4052 = vsel %vm561, %v4047, %v4051
      %v4053 = vshrl.u32 %v3967, 16
      %v4055 = vrot.slane %v4053, 4
      %v4056 = vor.u32 %v4055, %v4051
      %v4057 = vrot.slane %v4056, 4
      %v4059 = vshll.u32 %v3968, 16
      %v4061 = vrot.slane %v4059, 5
      %v4062 = vsel %vm561, %v4057, %v4061
      %v4063 = vshrl.u32 %v3968, 16
      %v4065 = vrot.slane %v4063, 4
      %v4066 = vor.u32 %v4065, %v4061
      %v4067 = vrot.slane %v4066, 4
      %v4069 = vshll.u32 %v3969, 16
      %v4071 = vrot.slane %v4069, 5
      %v4072 = vsel %vm561, %v4067, %v4071
      %v4073 = vshrl.u32 %v3969, 16
      %v4075 = vrot.slane %v4073, 4
      %v4076 = vor.u32 %v4075, %v4071
      %v4077 = vrot.slane %v4076, 4
      %v4079 = vshll.u32 %v3970, 16
      %v4081 = vrot.slane %v4079, 5
      %v4082 = vsel %vm561, %v4077, %v4081
      %v4083 = vshrl.u32 %v3970, 16
      %v4085 = vrot.slane %v4083, 4
      %v4086 = vor.u32 %v4085, %v4081
      %v4087 = vrot.slane %v4086, 4
      %v4089 = vshll.u32 %v3971, 16
      %v4091 = vrot.slane %v4089, 5
      %v4092 = vsel %vm561, %v4087, %v4091
      %v4093 = vshrl.u32 %v3971, 16
      %v4095 = vrot.slane %v4093, 4
      %v4096 = vor.u32 %v4095, %v4091
      %v4097 = vrot.slane %v4096, 4
      %v4099 = vshll.u32 %v3972, 16
      %v4101 = vrot.slane %v4099, 5
      %v4102 = vsel %vm561, %v4097, %v4101
      %v4103 = vshrl.u32 %v3972, 16
      %v4105 = vrot.slane %v4103, 4
      %v4106 = vor.u32 %v4105, %v4101
      %v4107 = vrot.slane %v4106, 4
      %v4109 = vshll.u32 %v3973, 16
      %v4111 = vrot.slane %v4109, 5
      %v4112 = vsel %vm561, %v4107, %v4111
      %v4113 = vshrl.u32 %v3973, 16
      %v4115 = vrot.slane %v4113, 4
      %v4116 = vor.u32 %v4115, %v4111
      %v4117 = vrot.slane %v4116, 4
      %v4119 = vshll.u32 %v3974, 16
      %v4121 = vrot.slane %v4119, 5
      %v4122 = vsel %vm561, %v4117, %v4121
      %v4123 = vshrl.u32 %v3974, 16
      %v4125 = vrot.slane %v4123, 4
      %v4126 = vor.u32 %v4125, %v4121
      %v4127 = vrot.slane %v4126, 4
      %v4129 = vshll.u32 %v3975, 16
      %v4131 = vrot.slane %v4129, 5
      %v4132 = vsel %vm561, %v4127, %v4131
      %v4133 = vshrl.u32 %v3975, 16
      %v4135 = vrot.slane %v4133, 4
      %v4136 = vor.u32 %v4135, %v4131
      %v4137 = vrot.slane %v4136, 4
      %v4139 = vshll.u32 %v3976, 16
      %v4141 = vrot.slane %v4139, 5
      %v4142 = vsel %vm561, %v4137, %v4141
      %v4143 = vshrl.u32 %v3976, 16
      %v4145 = vrot.slane %v4143, 4
      %v4146 = vor.u32 %v4145, %v4141
      %v4147 = vrot.slane %v4146, 4
      %v4149 = vshll.u32 %v3977, 16
      %v4151 = vrot.slane %v4149, 5
      %v4152 = vsel %vm561, %v4147, %v4151
      %v4153 = vshrl.u32 %v3977, 16
      %v4155 = vrot.slane %v4153, 4
      %v4156 = vor.u32 %v4155, %v4151
      %v4157 = vrot.slane %v4156, 4
      %v4159 = vshll.u32 %v3978, 16
      %v4161 = vrot.slane %v4159, 5
      %v4162 = vsel %vm561, %v4157, %v4161
      %v4163 = vshrl.u32 %v3978, 16
      %v4165 = vrot.slane %v4163, 4
      %v4166 = vor.u32 %v4165, %v4161
      %v4167 = vrot.slane %v4166, 4
      %v4169 = vshll.u32 %v3979, 16
      %v4171 = vrot.slane %v4169, 5
      %v4172 = vsel %vm561, %v4167, %v4171
      %v4173 = vshrl.u32 %v3979, 16
      %v4175 = vrot.slane %v4173, 4
      %v4176 = vor.u32 %v4175, %v4171
      %v4177 = vrot.slane %v4176, 4
      %v4179 = vshll.u32 %v3980, 16
      %v4181 = vrot.slane %v4179, 5
      %v4182 = vsel %vm561, %v4177, %v4181
      %v4183 = vshrl.u32 %v3980, 16
      %v4185 = vrot.slane %v4183, 4
      %v4186 = vor.u32 %v4185, %v4181
      %v4187 = vrot.slane %v4186, 4
      %v4189 = vshll.u32 %v3981, 16
      %v4191 = vrot.slane %v4189, 5
      %v4192 = vsel %vm561, %v4187, %v4191
      %v4193 = vshrl.u32 %v3981, 16
      %v4195 = vrot.slane %v4193, 4
      %v4196 = vor.u32 %v4195, %v4191
      %v4197 = vrot.slane %v4196, 4
      %v4199 = vshll.u32 %v3982, 16
      %v4201 = vrot.slane %v4199, 5
      %v4202 = vsel %vm561, %v4197, %v4201
      %v4203 = vshrl.u32 %v3982, 16
      %v4205 = vrot.slane %v4203, 4
      %v4206 = vor.u32 %v4205, %v4201
      %v4207 = vrot.slane %v4206, 4
      %v4209 = vshll.u32 %v3983, 16
      %v4211 = vrot.slane %v4209, 5
      %v4212 = vsel %vm561, %v4207, %v4211
      %v4213 = vshrl.u32 %v3983, 16
      %v4215 = vrot.slane %v4213, 4
      %v4216 = vor.u32 %v4215, %v4211
      %v4217 = vrot.slane %v4216, 4
      %v4219 = vshll.u32 %v3984, 16
      %v4221 = vrot.slane %v4219, 5
      %v4222 = vsel %vm561, %v4217, %v4221
      %v4223 = vshrl.u32 %v3984, 16
      %v4225 = vrot.slane %v4223, 4
      %v4226 = vor.u32 %v4225, %v4221
      %v4227 = vrot.slane %v4226, 4
      %v4229 = vshll.u32 %v3985, 16
      %v4231 = vrot.slane %v4229, 5
      %v4232 = vsel %vm561, %v4227, %v4231
      %v4233 = vshrl.u32 %v3985, 16
      %v4235 = vrot.slane %v4233, 4
      %v4236 = vor.u32 %v4235, %v4231
      %v4237 = vrot.slane %v4236, 4
      %v4239 = vshll.u32 %v3986, 16
      %v4241 = vrot.slane %v4239, 5
      %v4242 = vsel %vm561, %v4237, %v4241
      %v4243 = vshrl.u32 %v3986, 16
      %v4245 = vrot.slane %v4243, 4
      %v4246 = vor.u32 %v4245, %v4241
      %v4247 = vrot.slane %v4246, 4
      %v4249 = vshll.u32 %v3987, 16
      %v4251 = vrot.slane %v4249, 5
      %v4252 = vsel %vm561, %v4247, %v4251
      %v4253 = vshrl.u32 %v3987, 16
      %v4255 = vrot.slane %v4253, 4
      %v4256 = vor.u32 %v4255, %v4251
      %v4257 = vrot.slane %v4256, 4
      %v4259 = vshll.u32 %v3988, 16
      %v4261 = vrot.slane %v4259, 5
      %v4262 = vsel %vm561, %v4257, %v4261
      %v4263 = vshrl.u32 %v3988, 16
      %v4265 = vrot.slane %v4263, 4
      %v4266 = vor.u32 %v4265, %v4261
      %v4267 = vrot.slane %v4266, 4
      %v4269 = vshll.u32 %v3989, 16
      %v4271 = vrot.slane %v4269, 5
      %v4272 = vsel %vm561, %v4267, %v4271
      %v4273 = vshrl.u32 %v3989, 16
      %v4275 = vrot.slane %v4273, 4
      %v4276 = vor.u32 %v4275, %v4271
      %v4277 = vrot.slane %v4276, 4
      %v4279 = vshll.u32 %v3990, 16
      %v4281 = vrot.slane %v4279, 5
      %v4282 = vsel %vm561, %v4277, %v4281
      %v4283 = vshrl.u32 %v3990, 16
      %v4285 = vrot.slane %v4283, 4
      %v4286 = vor.u32 %v4285, %v4281
      %v4287 = vrot.slane %v4286, 4
      %v4289 = vshll.u32 %v3991, 16
      %v4291 = vrot.slane %v4289, 5
      %v4292 = vsel %vm561, %v4287, %v4291
      %v4293 = vshrl.u32 %v3991, 16
      %v4295 = vrot.slane %v4293, 4
      %v4296 = vor.u32 %v4295, %v4291
      %v4297 = vrot.slane %v4296, 4
      %v4299 = vshll.u32 %v3992, 16
      %v4301 = vrot.slane %v4299, 5
      %v4302 = vsel %vm561, %v4297, %v4301
      %v4303 = vshrl.u32 %v3992, 16
      %v4305 = vrot.slane %v4303, 4
      %v4306 = vor.u32 %v4305, %v4301
      %v4307 = vrot.slane %v4306, 4
      %v4309 = vshll.u32 %v3993, 16
      %v4311 = vrot.slane %v4309, 5
      %v4312 = vsel %vm561, %v4307, %v4311
      %v4313 = vshrl.u32 %v3993, 16
      %v4315 = vrot.slane %v4313, 4
      %v4316 = vor.u32 %v4315, %v4311
      %v4317 = vrot.slane %v4316, 4
      %v4319 = vshll.u32 %v3994, 16
      %v4321 = vrot.slane %v4319, 5
      %v4322 = vsel %vm561, %v4317, %v4321
      %v4323 = vshrl.u32 %v3994, 16
      %v4325 = vrot.slane %v4323, 4
      %v4326 = vor.u32 %v4325, %v4321
      %v4327 = vrot.slane %v4326, 4
      %v4329 = vshll.u32 %v3995, 16
      %v4331 = vrot.slane %v4329, 5
      %v4332 = vsel %vm561, %v4327, %v4331
      %v4333 = vshrl.u32 %v3995, 16
      %v4335 = vrot.slane %v4333, 4
      %v4336 = vor.u32 %v4335, %v4331
      %v4337 = vrot.slane %v4336, 4
      %v4339 = vshll.u32 %v3996, 16
      %v4341 = vrot.slane %v4339, 5
      %v4342 = vsel %vm561, %v4337, %v4341
      %v4343 = vshrl.u32 %v3996, 16
      %v4345 = vrot.slane %v4343, 4
      %v4346 = vor.u32 %v4345, %v4341
      %v4347 = vrot.slane %v4346, 4
      %v4349 = vshll.u32 %v3997, 16
      %v4351 = vrot.slane %v4349, 5
      %v4352 = vsel %vm561, %v4347, %v4351
      %v4353 = vshrl.u32 %v3997, 16
      %v4355 = vrot.slane %v4353, 4
      %v4356 = vor.u32 %v4355, %v4351
      %v4357 = vrot.slane %v4356, 4
      %v4359 = vshll.u32 %v3998, 16
      %v4361 = vrot.slane %v4359, 5
      %v4362 = vsel %vm561, %v4357, %v4361
      %v4363 = vshrl.u32 %v3998, 16
      %v4365 = vrot.slane %v4363, 4
      %v4366 = vor.u32 %v4365, %v4361
      %v4367 = vrot.slane %v4366, 4
      %v4369 = vshll.u32 %v3999, 16
      %v4371 = vrot.slane %v4369, 5
      %v4372 = vsel %vm561, %v4367, %v4371
      %v4373 = vshrl.u32 %v3999, 16
      %v4375 = vrot.slane %v4373, 4
      %v4376 = vor.u32 %v4375, %v4371
      %v4377 = vrot.slane %v4376, 4
      %v4379 = vshll.u32 %v4000, 16
      %v4381 = vrot.slane %v4379, 5
      %v4382 = vsel %vm561, %v4377, %v4381
      %v4383 = vshrl.u32 %v4000, 16
      %v4385 = vrot.slane %v4383, 4
      %v4386 = vor.u32 %v4385, %v4381
      %v4387 = vrot.slane %v4386, 4
      %v4389 = vshll.u32 %v4001, 16
      %v4391 = vrot.slane %v4389, 5
      %v4392 = vsel %vm561, %v4387, %v4391
      %v4393 = vshrl.u32 %v4001, 16
      %v4395 = vrot.slane %v4393, 4
      %v4396 = vor.u32 %v4395, %v4391
      %v4397 = vrot.slane %v4396, 4
      %v4399 = vshll.u32 %v4002, 16
      %v4401 = vrot.slane %v4399, 5
      %v4402 = vsel %vm561, %v4397, %v4401
      %v4403 = vshrl.u32 %v4002, 16
      %v4405 = vrot.slane %v4403, 4
      %v4406 = vor.u32 %v4405, %v4401
      %v4407 = vrot.slane %v4406, 4
      %v4409 = vshll.u32 %v4003, 16
      %v4411 = vrot.slane %v4409, 5
      %v4412 = vsel %vm561, %v4407, %v4411
      %v4413 = vshrl.u32 %v4003, 16
      %v4415 = vrot.slane %v4413, 4
      %v4416 = vor.u32 %v4415, %v4411
      %v4417 = vrot.slane %v4416, 4
      %v4419 = vshll.u32 %v4004, 16
      %v4421 = vrot.slane %v4419, 5
      %v4422 = vsel %vm561, %v4417, %v4421
      %v4423 = vshrl.u32 %v4004, 16
      %v4425 = vrot.slane %v4423, 4
      %v4426 = vor.u32 %v4425, %v4421
      %v4427 = vrot.slane %v4426, 4
      %v4429 = vshll.u32 %v4005, 16
      %v4431 = vrot.slane %v4429, 5
      %v4432 = vsel %vm561, %v4427, %v4431
      %v4433 = vshrl.u32 %v4005, 16
      %v4435 = vrot.slane %v4433, 4
      %v4436 = vor.u32 %v4435, %v4431
      %v4437 = vrot.slane %v4436, 4
      %v4439 = vshll.u32 %v4006, 16
      %v4441 = vrot.slane %v4439, 5
      %v4442 = vsel %vm561, %v4437, %v4441
      %v4443 = vshrl.u32 %v4006, 16
      %v4445 = vrot.slane %v4443, 4
      %v4446 = vor.u32 %v4445, %v4441
      %v4447 = vrot.slane %v4446, 4
      %v4449 = vshll.u32 %v4007, 16
      %v4451 = vrot.slane %v4449, 5
      %v4452 = vsel %vm561, %v4447, %v4451
      %v4453 = vshrl.u32 %v4007, 16
      %v4455 = vrot.slane %v4453, 4
      %v4456 = vor.u32 %v4455, %v4451
      %v4457 = vrot.slane %v4456, 4
      %v4459 = vshll.u32 %v4008, 16
      %v4461 = vrot.slane %v4459, 5
      %v4462 = vsel %vm561, %v4457, %v4461
      %v4463 = vshrl.u32 %v4008, 16
      %v4465 = vrot.slane %v4463, 4
      %v4466 = vor.u32 %v4465, %v4461
      %v4467 = vrot.slane %v4466, 4
      %v4469 = vshll.u32 %v4009, 16
      %v4471 = vrot.slane %v4469, 5
      %v4472 = vsel %vm561, %v4467, %v4471
      %v4473 = vshrl.u32 %v4009, 16
      %v4475 = vrot.slane %v4473, 4
      %v4476 = vor.u32 %v4475, %v4471
      %v4477 = vrot.slane %v4476, 4
      %v4479 = vshll.u32 %v4010, 16
      %v4481 = vrot.slane %v4479, 5
      %v4482 = vsel %vm561, %v4477, %v4481
      %v4483 = vshrl.u32 %v4010, 16
      %v4485 = vrot.slane %v4483, 4
      %v4486 = vor.u32 %v4485, %v4481
      %v4487 = vrot.slane %v4486, 4
      %v4489 = vshll.u32 %v4011, 16
      %v4491 = vrot.slane %v4489, 5
      %v4492 = vsel %vm561, %v4487, %v4491
      %v4493 = vshrl.u32 %v4011, 16
      %v4495 = vrot.slane %v4493, 4
      %v4496 = vor.u32 %v4495, %v4491
      %v4497 = vrot.slane %v4496, 4
      %v4499 = vshll.u32 %v4012, 16
      %v4501 = vrot.slane %v4499, 5
      %v4502 = vsel %vm561, %v4497, %v4501
      %v4503 = vshrl.u32 %v4012, 16
      %v4505 = vrot.slane %v4503, 4
      %v4506 = vor.u32 %v4505, %v4501
      %v4507 = vrot.slane %v4506, 4
      %v4509 = vshll.u32 %v4013, 16
      %v4511 = vrot.slane %v4509, 5
      %v4512 = vsel %vm561, %v4507, %v4511
      %v4513 = vshrl.u32 %v4013, 16
      %v4515 = vrot.slane %v4513, 4
      %v4516 = vor.u32 %v4515, %v4511
      %v4517 = vrot.slane %v4516, 4
      %v4519 = vshll.u32 %v4014, 16
      %v4521 = vrot.slane %v4519, 5
      %v4522 = vsel %vm561, %v4517, %v4521
      %v4523 = vshrl.u32 %v4014, 16
      %v4525 = vrot.slane %v4523, 4
      %v4526 = vor.u32 %v4525, %v4521
      %v4527 = vrot.slane %v4526, 4
      %v4529 = vshll.u32 %v4015, 16
      %v4531 = vrot.slane %v4529, 5
      %v4532 = vsel %vm561, %v4527, %v4531
      %v4533 = vshrl.u32 %v4015, 16
      %v4535 = vrot.slane %v4533, 4
      %v4536 = vor.u32 %v4535, %v4531
      %v4537 = vrot.slane %v4536, 4
      %v4539 = vshll.u32 %v4016, 16
      %v4541 = vrot.slane %v4539, 5
      %v4542 = vsel %vm561, %v4537, %v4541
      %v4543 = vshrl.u32 %v4016, 16
      %v4545 = vrot.slane %v4543, 4
      %v4546 = vor.u32 %v4545, %v4541
      %v4547 = vrot.slane %v4546, 4
      %v4549 = vshll.u32 %v4017, 16
      %v4551 = vrot.slane %v4549, 5
      %v4552 = vsel %vm561, %v4547, %v4551
      %v4553 = vshrl.u32 %v4017, 16
      %v4555 = vrot.slane %v4553, 4
      %v4556 = vor.u32 %v4555, %v4551
      %v4557 = vrot.slane %v4556, 4
      %v4559 = vshll.u32 %v4018, 16
      %v4561 = vrot.slane %v4559, 5
      %v4562 = vsel %vm561, %v4557, %v4561
      %v4563 = vshrl.u32 %v4018, 16
      %v4565 = vrot.slane %v4563, 4
      %v4566 = vor.u32 %v4565, %v4561
      %v4567 = vrot.slane %v4566, 4
      %v4569 = vshll.u32 %v4019, 16
      %v4571 = vrot.slane %v4569, 5
      %v4572 = vsel %vm561, %v4567, %v4571
      %v4573 = vshrl.u32 %v4019, 16
      %v4575 = vrot.slane %v4573, 4
      %v4576 = vor.u32 %v4575, %v4571
      %v4577 = vrot.slane %v4576, 4
      %v4579 = vshll.u32 %v4020, 16
      %v4581 = vrot.slane %v4579, 5
      %v4582 = vsel %vm561, %v4577, %v4581
      %v4583 = vshrl.u32 %v4020, 16
      %v4585 = vrot.slane %v4583, 4
      %v4586 = vor.u32 %v4585, %v4581
      %v4587 = vrot.slane %v4586, 4
      %v4589 = vshll.u32 %v4021, 16
      %v4591 = vrot.slane %v4589, 5
      %v4592 = vsel %vm561, %v4587, %v4591
      %v4593 = vshrl.u32 %v4021, 16
      %v4595 = vrot.slane %v4593, 4
      %v4596 = vor.u32 %v4595, %v4591
      %v4597 = vrot.slane %v4596, 4
      %v4599 = vshll.u32 %v4022, 16
      %v4601 = vrot.slane %v4599, 5
      %v4602 = vsel %vm561, %v4597, %v4601
      %v4603 = vshrl.u32 %v4022, 16
      %v4605 = vrot.slane %v4603, 4
      %v4606 = vor.u32 %v4605, %v4601
      %v4607 = vrot.slane %v4606, 4
      %v4609 = vshll.u32 %v4023, 16
      %v4611 = vrot.slane %v4609, 5
      %v4612 = vsel %vm561, %v4607, %v4611
      %v4613 = vshrl.u32 %v4023, 16
      %v4615 = vrot.slane %v4613, 4
      %v4616 = vor.u32 %v4615, %v4611
      %v4617 = vrot.slane %v4616, 4
      %v4619 = vshll.u32 %v4024, 16
      %v4621 = vrot.slane %v4619, 5
      %v4622 = vsel %vm561, %v4617, %v4621
      %v4623 = vshrl.u32 %v4024, 16
      %v4625 = vrot.slane %v4623, 4
      %v4626 = vor.u32 %v4625, %v4621
      %v4627 = vrot.slane %v4626, 4
      %v4629 = vshll.u32 %v4025, 16
      %v4631 = vrot.slane %v4629, 5
      %v4632 = vsel %vm561, %v4627, %v4631
      %v4633 = vshrl.u32 %v4025, 16
      %v4635 = vrot.slane %v4633, 4
      %v4636 = vor.u32 %v4635, %v4631
      %v4637 = vrot.slane %v4636, 4
      %v4639 = vshll.u32 %v4026, 16
      %v4641 = vrot.slane %v4639, 5
      %v4642 = vsel %vm561, %v4637, %v4641
      %v4643 = vshrl.u32 %v4026, 16
      %v4645 = vrot.slane %v4643, 4
      %v4646 = vor.u32 %v4645, %v4641
      %v4647 = vrot.slane %v4646, 4
      %v4649 = vshll.u32 %v4027, 16
      %v4651 = vrot.slane %v4649, 5
      %v4652 = vsel %vm561, %v4647, %v4651
      %v4653 = vshrl.u32 %v4027, 16
      %v4655 = vrot.slane %v4653, 4
      %v4656 = vor.u32 %v4655, %v4651
      %v4657 = vrot.slane %v4656, 4
      %v4659 = vshll.u32 %v4028, 16
      %v4661 = vrot.slane %v4659, 5
      %v4662 = vsel %vm561, %v4657, %v4661
      %v4663 = vshrl.u32 %v4028, 16
      %v4665 = vrot.slane %v4663, 4
      %v4666 = vor.u32 %v4665, %v4661
      %v4667 = vrot.slane %v4666, 4
      %v4669 = vshll.u32 %v4029, 16
      %v4671 = vrot.slane %v4669, 5
      %v4672 = vsel %vm561, %v4667, %v4671
      %v4673 = vshrl.u32 %v4029, 16
      %v4675 = vrot.slane %v4673, 4
      %v4676 = vor.u32 %v4675, %v4671
      %v4677 = vrot.slane %v4676, 4
      %v4679 = vshll.u32 %v4030, 16
      %v4681 = vrot.slane %v4679, 5
      %v4682 = vsel %vm561, %v4677, %v4681
      %v4683 = vshrl.u32 %v4030, 16
      %v4685 = vrot.slane %v4683, 4
      %v4686 = vor.u32 %v4685, %v4681
      %v4687 = vrot.slane %v4686, 4
      %v4689 = vshll.u32 %v4031, 16
      %v4691 = vrot.slane %v4689, 5
      %v4692 = vsel %vm561, %v4687, %v4691
      %v4693 = vshrl.u32 %v4031, 16
      %v4695 = vrot.slane %v4693, 4
      %v4696 = vor.u32 %v4695, %v4691
      %v4697 = vrot.slane %v4696, 4
      %v4699 = vshll.u32 %v4032, 16
      %v4701 = vrot.slane %v4699, 5
      %v4702 = vsel %vm561, %v4697, %v4701
      %v4703 = vshrl.u32 %v4032, 16
      %v4705 = vrot.slane %v4703, 4
      %v4706 = vor.u32 %v4705, %v4701
      %v4707 = vrot.slane %v4706, 4
      %v4709 = vshll.u32 %v4033, 16
      %v4711 = vrot.slane %v4709, 5
      %v4712 = vsel %vm561, %v4707, %v4711
      %v4713 = vshrl.u32 %v4033, 16
      %v4715 = vrot.slane %v4713, 4
      %v4716 = vor.u32 %v4715, %v4711
      %v4717 = vrot.slane %v4716, 4
      %v4719 = vshll.u32 %v4034, 16
      %v4721 = vrot.slane %v4719, 5
      %v4722 = vsel %vm561, %v4717, %v4721
      %v4723 = vshrl.u32 %v4034, 16
      %v4725 = vrot.slane %v4723, 4
      %v4726 = vor.u32 %v4725, %v4721
      %v4727 = vrot.slane %v4726, 4
      %v4729 = vshll.u32 %v4035, 16
      %v4731 = vrot.slane %v4729, 5
      %v4732 = vsel %vm561, %v4727, %v4731
      %v4733 = vshrl.u32 %v4035, 16
      %v4735 = vrot.slane %v4733, 4
      %v4736 = vor.u32 %v4735, %v4731
      %v4737 = vrot.slane %v4736, 4
      %v4739 = vshll.u32 %v4036, 16
      %v4741 = vrot.slane %v4739, 5
      %v4742 = vsel %vm561, %v4737, %v4741
      %v4743 = vshrl.u32 %v4036, 16
      %v4745 = vrot.slane %v4743, 4
      %v4746 = vor.u32 %v4745, %v4741
      %v4747 = vrot.slane %v4746, 4
      %v4749 = vshll.u32 %v4037, 16
      %v4751 = vrot.slane %v4749, 5
      %v4752 = vsel %vm561, %v4747, %v4751
      %v4753 = vshrl.u32 %v4037, 16
      %v4755 = vrot.slane %v4753, 4
      %v4756 = vor.u32 %v4755, %v4751
      %v4757 = vrot.slane %v4756, 4
      %v4759 = vshll.u32 %v4038, 16
      %v4761 = vrot.slane %v4759, 5
      %v4762 = vsel %vm561, %v4757, %v4761
      %4835 = vst [vmem:[#allocation3 + $0x4] sm:$0xf] %v4052
      %4836 = vst [vmem:[#allocation3 + $0x10] sm:$0xf] %v4062
      %4837 = vst [vmem:[#allocation3 + $0x1c] sm:$0xf] %v4072
      %4838 = vst [vmem:[#allocation3 + $0x28] sm:$0xf] %v4082
      %4839 = vst [vmem:[#allocation3 + $0x34] sm:$0xf] %v4092
      %4840 = vst [vmem:[#allocation3 + $0x40] sm:$0xf] %v4102
      %4841 = vst [vmem:[#allocation3 + $0x4c] sm:$0xf] %v4112
      %4842 = vst [vmem:[#allocation3 + $0x58] sm:$0xf] %v4122
      %4843 = vst [vmem:[#allocation3 + $0x64] sm:$0xf] %v4132
      %4844 = vst [vmem:[#allocation3 + $0x70] sm:$0xf] %v4142
      %4845 = vst [vmem:[#allocation3 + $0x7c] sm:$0xf] %v4152
      %4846 = vst [vmem:[#allocation3 + $0x88] sm:$0xf] %v4162
      %4847 = vst [vmem:[#allocation3 + $0x94] sm:$0xf] %v4172
      %4848 = vst [vmem:[#allocation3 + $0xa0] sm:$0xf] %v4182
      %4849 = vst [vmem:[#allocation3 + $0xac] sm:$0xf] %v4192
      %4850 = vst [vmem:[#allocation3 + $0xb8] sm:$0xf] %v4202
      %4851 = vst [vmem:[#allocation3 + $0xc4] sm:$0xf] %v4212
      %4852 = vst [vmem:[#allocation3 + $0xd0] sm:$0xf] %v4222
      %4853 = vst [vmem:[#allocation3 + $0xdc] sm:$0xf] %v4232
      %4854 = vst [vmem:[#allocation3 + $0xe8] sm:$0xf] %v4242
      %4855 = vst [vmem:[#allocation3 + $0xf4] sm:$0xf] %v4252
      %4856 = vst [vmem:[#allocation3 + $0x100] sm:$0xf] %v4262
      %4857 = vst [vmem:[#allocation3 + $0x10c] sm:$0xf] %v4272
      %4858 = vst [vmem:[#allocation3 + $0x118] sm:$0xf] %v4282
      %4859 = vst [vmem:[#allocation3 + $0x124] sm:$0xf] %v4292
      %4860 = vst [vmem:[#allocation3 + $0x130] sm:$0xf] %v4302
      %4861 = vst [vmem:[#allocation3 + $0x13c] sm:$0xf] %v4312
      %4862 = vst [vmem:[#allocation3 + $0x148] sm:$0xf] %v4322
      %4863 = vst [vmem:[#allocation3 + $0x154] sm:$0xf] %v4332
      %4864 = vst [vmem:[#allocation3 + $0x160] sm:$0xf] %v4342
      %4865 = vst [vmem:[#allocation3 + $0x16c] sm:$0xf] %v4352
      %4866 = vst [vmem:[#allocation3 + $0x178] sm:$0xf] %v4362
      %4867 = vst [vmem:[#allocation3 + $0x184] sm:$0xf] %v4372
      %4868 = vst [vmem:[#allocation3 + $0x190] sm:$0xf] %v4382
      %4869 = vst [vmem:[#allocation3 + $0x19c] sm:$0xf] %v4392
      %4870 = vst [vmem:[#allocation3 + $0x1a8] sm:$0xf] %v4402
      %4871 = vst [vmem:[#allocation3 + $0x1b4] sm:$0xf] %v4412
      %4872 = vst [vmem:[#allocation3 + $0x1c0] sm:$0xf] %v4422
      %4873 = vst [vmem:[#allocation3 + $0x1cc] sm:$0xf] %v4432
      %4874 = vst [vmem:[#allocation3 + $0x1d8] sm:$0xf] %v4442
      %4875 = vst [vmem:[#allocation3 + $0x1e4] sm:$0xf] %v4452
      %4876 = vst [vmem:[#allocation3 + $0x1f0] sm:$0xf] %v4462
      %4877 = vst [vmem:[#allocation3 + $0x1fc] sm:$0xf] %v4472
      %4878 = vst [vmem:[#allocation3 + $0x208] sm:$0xf] %v4482
      %4879 = vst [vmem:[#allocation3 + $0x214] sm:$0xf] %v4492
      %4880 = vst [vmem:[#allocation3 + $0x220] sm:$0xf] %v4502
      %4881 = vst [vmem:[#allocation3 + $0x22c] sm:$0xf] %v4512
      %4882 = vst [vmem:[#allocation3 + $0x238] sm:$0xf] %v4522
      %4883 = vst [vmem:[#allocation3 + $0x244] sm:$0xf] %v4532
      %4884 = vst [vmem:[#allocation3 + $0x250] sm:$0xf] %v4542
      %4885 = vst [vmem:[#allocation3 + $0x25c] sm:$0xf] %v4552
      %4886 = vst [vmem:[#allocation3 + $0x268] sm:$0xf] %v4562
      %4887 = vst [vmem:[#allocation3 + $0x274] sm:$0xf] %v4572
      %4888 = vst [vmem:[#allocation3 + $0x280] sm:$0xf] %v4582
      %4889 = vst [vmem:[#allocation3 + $0x28c] sm:$0xf] %v4592
      %4890 = vst [vmem:[#allocation3 + $0x298] sm:$0xf] %v4602
      %4891 = vst [vmem:[#allocation3 + $0x2a4] sm:$0xf] %v4612
      %4892 = vst [vmem:[#allocation3 + $0x2b0] sm:$0xf] %v4622
      %4893 = vst [vmem:[#allocation3 + $0x2bc] sm:$0xf] %v4632
      %4894 = vst [vmem:[#allocation3 + $0x2c8] sm:$0xf] %v4642
      %4895 = vst [vmem:[#allocation3 + $0x2d4] sm:$0xf] %v4652
      %4896 = vst [vmem:[#allocation3 + $0x2e0] sm:$0xf] %v4662
      %4897 = vst [vmem:[#allocation3 + $0x2ec] sm:$0xf] %v4672
      %4898 = vst [vmem:[#allocation3 + $0x2f8] sm:$0xf] %v4682
      %4899 = vst [vmem:[#allocation3 + $0x304] sm:$0xf] %v4692
      %4900 = vst [vmem:[#allocation3 + $0x310] sm:$0xf] %v4702
      %4901 = vst [vmem:[#allocation3 + $0x31c] sm:$0xf] %v4712
      %4902 = vst [vmem:[#allocation3 + $0x328] sm:$0xf] %v4722
      %4903 = vst [vmem:[#allocation3 + $0x334] sm:$0xf] %v4732
      %4904 = vst [vmem:[#allocation3 + $0x340] sm:$0xf] %v4742
      %4905 = vst [vmem:[#allocation3 + $0x34c] sm:$0xf] %v4752
      %4906 = vst [vmem:[#allocation3 + $0x358] sm:$0xf] %v4762
      %v4907 = vld [vmem:[#allocation3] sm:$0xe]
      %v4908 = vld [vmem:[#allocation3 + $0xc] sm:$0xf]
      %v4909 = vld [vmem:[#allocation3 + $0x18] sm:$0xf]
      %v4910 = vld [vmem:[#allocation3 + $0x24] sm:$0xf]
      %v4911 = vld [vmem:[#allocation3 + $0x30] sm:$0xf]
      %v4912 = vld [vmem:[#allocation3 + $0x3c] sm:$0xf]
      %v4913 = vld [vmem:[#allocation3 + $0x48] sm:$0xf]
      %v4914 = vld [vmem:[#allocation3 + $0x54] sm:$0xf]
      %v4915 = vld [vmem:[#allocation3 + $0x60] sm:$0xf]
      %v4916 = vld [vmem:[#allocation3 + $0x6c] sm:$0xf]
      %v4917 = vld [vmem:[#allocation3 + $0x78] sm:$0xf]
      %v4918 = vld [vmem:[#allocation3 + $0x84] sm:$0xf]
      %v4919 = vld [vmem:[#allocation3 + $0x90] sm:$0xf]
      %v4920 = vld [vmem:[#allocation3 + $0x9c] sm:$0xf]
      %v4921 = vld [vmem:[#allocation3 + $0xa8] sm:$0xf]
      %v4922 = vld [vmem:[#allocation3 + $0xb4] sm:$0xf]
      %v4923 = vld [vmem:[#allocation3 + $0xc0] sm:$0xf]
      %v4924 = vld [vmem:[#allocation3 + $0xcc] sm:$0xf]
      %v4925 = vld [vmem:[#allocation3 + $0xd8] sm:$0xf]
      %v4926 = vld [vmem:[#allocation3 + $0xe4] sm:$0xf]
      %v4927 = vld [vmem:[#allocation3 + $0xf0] sm:$0xf]
      %v4928 = vld [vmem:[#allocation3 + $0xfc] sm:$0xf]
      %v4929 = vld [vmem:[#allocation3 + $0x108] sm:$0xf]
      %v4930 = vld [vmem:[#allocation3 + $0x114] sm:$0xf]
      %v4931 = vld [vmem:[#allocation3 + $0x120] sm:$0xf]
      %v4932 = vld [vmem:[#allocation3 + $0x12c] sm:$0xf]
      %v4933 = vld [vmem:[#allocation3 + $0x138] sm:$0xf]
      %v4934 = vld [vmem:[#allocation3 + $0x144] sm:$0xf]
      %v4935 = vld [vmem:[#allocation3 + $0x150] sm:$0xf]
      %v4936 = vld [vmem:[#allocation3 + $0x15c] sm:$0xf]
      %v4937 = vld [vmem:[#allocation3 + $0x168] sm:$0xf]
      %v4938 = vld [vmem:[#allocation3 + $0x174] sm:$0xf]
      %v4939 = vld [vmem:[#allocation3 + $0x180] sm:$0xf]
      %v4940 = vld [vmem:[#allocation3 + $0x18c] sm:$0xf]
      %v4941 = vld [vmem:[#allocation3 + $0x198] sm:$0xf]
      %v4942 = vld [vmem:[#allocation3 + $0x1a4] sm:$0xf]
      %v4943 = vld [vmem:[#allocation3 + $0x1b0] sm:$0xf]
      %v4944 = vld [vmem:[#allocation3 + $0x1bc] sm:$0xf]
      %v4945 = vld [vmem:[#allocation3 + $0x1c8] sm:$0xf]
      %v4946 = vld [vmem:[#allocation3 + $0x1d4] sm:$0xf]
      %v4947 = vld [vmem:[#allocation3 + $0x1e0] sm:$0xf]
      %v4948 = vld [vmem:[#allocation3 + $0x1ec] sm:$0xf]
      %v4949 = vld [vmem:[#allocation3 + $0x1f8] sm:$0xf]
      %v4950 = vld [vmem:[#allocation3 + $0x204] sm:$0xf]
      %v4951 = vld [vmem:[#allocation3 + $0x210] sm:$0xf]
      %v4952 = vld [vmem:[#allocation3 + $0x21c] sm:$0xf]
      %v4953 = vld [vmem:[#allocation3 + $0x228] sm:$0xf]
      %v4954 = vld [vmem:[#allocation3 + $0x234] sm:$0xf]
      %v4955 = vld [vmem:[#allocation3 + $0x240] sm:$0xf]
      %v4956 = vld [vmem:[#allocation3 + $0x24c] sm:$0xf]
      %v4957 = vld [vmem:[#allocation3 + $0x258] sm:$0xf]
      %v4958 = vld [vmem:[#allocation3 + $0x264] sm:$0xf]
      %v4959 = vld [vmem:[#allocation3 + $0x270] sm:$0xf]
      %v4960 = vld [vmem:[#allocation3 + $0x27c] sm:$0xf]
      %v4961 = vld [vmem:[#allocation3 + $0x288] sm:$0xf]
      %v4962 = vld [vmem:[#allocation3 + $0x294] sm:$0xf]
      %v4963 = vld [vmem:[#allocation3 + $0x2a0] sm:$0xf]
      %v4964 = vld [vmem:[#allocation3 + $0x2ac] sm:$0xf]
      %v4965 = vld [vmem:[#allocation3 + $0x2b8] sm:$0xf]
      %v4966 = vld [vmem:[#allocation3 + $0x2c4] sm:$0xf]
      %v4967 = vld [vmem:[#allocation3 + $0x2d0] sm:$0xf]
      %v4968 = vld [vmem:[#allocation3 + $0x2dc] sm:$0xf]
      %v4969 = vld [vmem:[#allocation3 + $0x2e8] sm:$0xf]
      %v4970 = vld [vmem:[#allocation3 + $0x2f4] sm:$0xf]
      %v4971 = vld [vmem:[#allocation3 + $0x300] sm:$0xf]
      %v4972 = vld [vmem:[#allocation3 + $0x30c] sm:$0xf]
      %v4973 = vld [vmem:[#allocation3 + $0x318] sm:$0xf]
      %v4974 = vld [vmem:[#allocation3 + $0x324] sm:$0xf]
      %v4975 = vld [vmem:[#allocation3 + $0x330] sm:$0xf]
      %v4976 = vld [vmem:[#allocation3 + $0x33c] sm:$0xf]
      %v4977 = vld [vmem:[#allocation3 + $0x348] sm:$0xf]
      %v4978 = vld [vmem:[#allocation3 + $0x354] sm:$0xf]
      %v4979 = vld [vmem:[#allocation3 + $0x360] sm:$0x1]
      %v5053 = vrot.slane %v4907, 5
      %v5054 = vrot.slane %v5053, 4
      %v5055 = vrot.slane %v4908, 5
      %v5056 = vsel %vm1802, %v5054, %v5055
      %v5057 = vrot.slane %v5055, 4
      %v5058 = vrot.slane %v4909, 5
      %v5059 = vsel %vm1802, %v5057, %v5058
      %v5060 = vrot.slane %v5058, 4
      %v5061 = vrot.slane %v4910, 5
      %v5062 = vsel %vm1802, %v5060, %v5061
      %v5063 = vrot.slane %v5061, 4
      %v5064 = vrot.slane %v4911, 5
      %v5065 = vsel %vm1802, %v5063, %v5064
      %v5066 = vrot.slane %v5064, 4
      %v5067 = vrot.slane %v4912, 5
      %v5068 = vsel %vm1802, %v5066, %v5067
      %v5069 = vrot.slane %v5067, 4
      %v5070 = vrot.slane %v4913, 5
      %v5071 = vsel %vm1802, %v5069, %v5070
      %v5072 = vrot.slane %v5070, 4
      %v5073 = vrot.slane %v4914, 5
      %v5074 = vsel %vm1802, %v5072, %v5073
      %v5075 = vrot.slane %v5073, 4
      %v5076 = vrot.slane %v4915, 5
      %v5077 = vsel %vm1802, %v5075, %v5076
      %v5078 = vrot.slane %v5076, 4
      %v5079 = vrot.slane %v4916, 5
      %v5080 = vsel %vm1802, %v5078, %v5079
      %v5081 = vrot.slane %v5079, 4
      %v5082 = vrot.slane %v4917, 5
      %v5083 = vsel %vm1802, %v5081, %v5082
      %v5084 = vrot.slane %v5082, 4
      %v5085 = vrot.slane %v4918, 5
      %v5086 = vsel %vm1802, %v5084, %v5085
      %v5087 = vrot.slane %v5085, 4
      %v5088 = vrot.slane %v4919, 5
      %v5089 = vsel %vm1802, %v5087, %v5088
      %v5090 = vrot.slane %v5088, 4
      %v5091 = vrot.slane %v4920, 5
      %v5092 = vsel %vm1802, %v5090, %v5091
      %v5093 = vrot.slane %v5091, 4
      %v5094 = vrot.slane %v4921, 5
      %v5095 = vsel %vm1802, %v5093, %v5094
      %v5096 = vrot.slane %v5094, 4
      %v5097 = vrot.slane %v4922, 5
      %v5098 = vsel %vm1802, %v5096, %v5097
      %v5099 = vrot.slane %v5097, 4
      %v5100 = vrot.slane %v4923, 5
      %v5101 = vsel %vm1802, %v5099, %v5100
      %v5102 = vrot.slane %v5100, 4
      %v5103 = vrot.slane %v4924, 5
      %v5104 = vsel %vm1802, %v5102, %v5103
      %v5105 = vrot.slane %v5103, 4
      %v5106 = vrot.slane %v4925, 5
      %v5107 = vsel %vm1802, %v5105, %v5106
      %v5108 = vrot.slane %v5106, 4
      %v5109 = vrot.slane %v4926, 5
      %v5110 = vsel %vm1802, %v5108, %v5109
      %v5111 = vrot.slane %v5109, 4
      %v5112 = vrot.slane %v4927, 5
      %v5113 = vsel %vm1802, %v5111, %v5112
      %v5114 = vrot.slane %v5112, 4
      %v5115 = vrot.slane %v4928, 5
      %v5116 = vsel %vm1802, %v5114, %v5115
      %v5117 = vrot.slane %v5115, 4
      %v5118 = vrot.slane %v4929, 5
      %v5119 = vsel %vm1802, %v5117, %v5118
      %v5120 = vrot.slane %v5118, 4
      %v5121 = vrot.slane %v4930, 5
      %v5122 = vsel %vm1802, %v5120, %v5121
      %v5123 = vrot.slane %v5121, 4
      %v5124 = vrot.slane %v4931, 5
      %v5125 = vsel %vm1802, %v5123, %v5124
      %v5126 = vrot.slane %v5124, 4
      %v5127 = vrot.slane %v4932, 5
      %v5128 = vsel %vm1802, %v5126, %v5127
      %v5129 = vrot.slane %v5127, 4
      %v5130 = vrot.slane %v4933, 5
      %v5131 = vsel %vm1802, %v5129, %v5130
      %v5132 = vrot.slane %v5130, 4
      %v5133 = vrot.slane %v4934, 5
      %v5134 = vsel %vm1802, %v5132, %v5133
      %v5135 = vrot.slane %v5133, 4
      %v5136 = vrot.slane %v4935, 5
      %v5137 = vsel %vm1802, %v5135, %v5136
      %v5138 = vrot.slane %v5136, 4
      %v5139 = vrot.slane %v4936, 5
      %v5140 = vsel %vm1802, %v5138, %v5139
      %v5141 = vrot.slane %v5139, 4
      %v5142 = vrot.slane %v4937, 5
      %v5143 = vsel %vm1802, %v5141, %v5142
      %v5144 = vrot.slane %v5142, 4
      %v5145 = vrot.slane %v4938, 5
      %v5146 = vsel %vm1802, %v5144, %v5145
      %v5147 = vrot.slane %v5145, 4
      %v5148 = vrot.slane %v4939, 5
      %v5149 = vsel %vm1802, %v5147, %v5148
      %v5150 = vrot.slane %v5148, 4
      %v5151 = vrot.slane %v4940, 5
      %v5152 = vsel %vm1802, %v5150, %v5151
      %v5153 = vrot.slane %v5151, 4
      %v5154 = vrot.slane %v4941, 5
      %v5155 = vsel %vm1802, %v5153, %v5154
      %v5156 = vrot.slane %v5154, 4
      %v5157 = vrot.slane %v4942, 5
      %v5158 = vsel %vm1802, %v5156, %v5157
      %v5159 = vrot.slane %v5157, 4
      %v5160 = vrot.slane %v4943, 5
      %v5161 = vsel %vm1802, %v5159, %v5160
      %v5162 = vrot.slane %v5160, 4
      %v5163 = vrot.slane %v4944, 5
      %v5164 = vsel %vm1802, %v5162, %v5163
      %v5165 = vrot.slane %v5163, 4
      %v5166 = vrot.slane %v4945, 5
      %v5167 = vsel %vm1802, %v5165, %v5166
      %v5168 = vrot.slane %v5166, 4
      %v5169 = vrot.slane %v4946, 5
      %v5170 = vsel %vm1802, %v5168, %v5169
      %v5171 = vrot.slane %v5169, 4
      %v5172 = vrot.slane %v4947, 5
      %v5173 = vsel %vm1802, %v5171, %v5172
      %v5174 = vrot.slane %v5172, 4
      %v5175 = vrot.slane %v4948, 5
      %v5176 = vsel %vm1802, %v5174, %v5175
      %v5177 = vrot.slane %v5175, 4
      %v5178 = vrot.slane %v4949, 5
      %v5179 = vsel %vm1802, %v5177, %v5178
      %v5180 = vrot.slane %v5178, 4
      %v5181 = vrot.slane %v4950, 5
      %v5182 = vsel %vm1802, %v5180, %v5181
      %v5183 = vrot.slane %v5181, 4
      %v5184 = vrot.slane %v4951, 5
      %v5185 = vsel %vm1802, %v5183, %v5184
      %v5186 = vrot.slane %v5184, 4
      %v5187 = vrot.slane %v4952, 5
      %v5188 = vsel %vm1802, %v5186, %v5187
      %v5189 = vrot.slane %v5187, 4
      %v5190 = vrot.slane %v4953, 5
      %v5191 = vsel %vm1802, %v5189, %v5190
      %v5192 = vrot.slane %v5190, 4
      %v5193 = vrot.slane %v4954, 5
      %v5194 = vsel %vm1802, %v5192, %v5193
      %v5195 = vrot.slane %v5193, 4
      %v5196 = vrot.slane %v4955, 5
      %v5197 = vsel %vm1802, %v5195, %v5196
      %v5198 = vrot.slane %v5196, 4
      %v5199 = vrot.slane %v4956, 5
      %v5200 = vsel %vm1802, %v5198, %v5199
      %v5201 = vrot.slane %v5199, 4
      %v5202 = vrot.slane %v4957, 5
      %v5203 = vsel %vm1802, %v5201, %v5202
      %v5204 = vrot.slane %v5202, 4
      %v5205 = vrot.slane %v4958, 5
      %v5206 = vsel %vm1802, %v5204, %v5205
      %v5207 = vrot.slane %v5205, 4
      %v5208 = vrot.slane %v4959, 5
      %v5209 = vsel %vm1802, %v5207, %v5208
      %v5210 = vrot.slane %v5208, 4
      %v5211 = vrot.slane %v4960, 5
      %v5212 = vsel %vm1802, %v5210, %v5211
      %v5213 = vrot.slane %v5211, 4
      %v5214 = vrot.slane %v4961, 5
      %v5215 = vsel %vm1802, %v5213, %v5214
      %v5216 = vrot.slane %v5214, 4
      %v5217 = vrot.slane %v4962, 5
      %v5218 = vsel %vm1802, %v5216, %v5217
      %v5219 = vrot.slane %v5217, 4
      %v5220 = vrot.slane %v4963, 5
      %v5221 = vsel %vm1802, %v5219, %v5220
      %v5222 = vrot.slane %v5220, 4
      %v5223 = vrot.slane %v4964, 5
      %v5224 = vsel %vm1802, %v5222, %v5223
      %v5225 = vrot.slane %v5223, 4
      %v5226 = vrot.slane %v4965, 5
      %v5227 = vsel %vm1802, %v5225, %v5226
      %v5228 = vrot.slane %v5226, 4
      %v5229 = vrot.slane %v4966, 5
      %v5230 = vsel %vm1802, %v5228, %v5229
      %v5231 = vrot.slane %v5229, 4
      %v5232 = vrot.slane %v4967, 5
      %v5233 = vsel %vm1802, %v5231, %v5232
      %v5234 = vrot.slane %v5232, 4
      %v5235 = vrot.slane %v4968, 5
      %v5236 = vsel %vm1802, %v5234, %v5235
      %v5237 = vrot.slane %v5235, 4
      %v5238 = vrot.slane %v4969, 5
      %v5239 = vsel %vm1802, %v5237, %v5238
      %v5240 = vrot.slane %v5238, 4
      %v5241 = vrot.slane %v4970, 5
      %v5242 = vsel %vm1802, %v5240, %v5241
      %v5243 = vrot.slane %v5241, 4
      %v5244 = vrot.slane %v4971, 5
      %v5245 = vsel %vm1802, %v5243, %v5244
      %v5246 = vrot.slane %v5244, 4
      %v5247 = vrot.slane %v4972, 5
      %v5248 = vsel %vm1802, %v5246, %v5247
      %v5249 = vrot.slane %v5247, 4
      %v5250 = vrot.slane %v4973, 5
      %v5251 = vsel %vm1802, %v5249, %v5250
      %v5252 = vrot.slane %v5250, 4
      %v5253 = vrot.slane %v4974, 5
      %v5254 = vsel %vm1802, %v5252, %v5253
      %v5255 = vrot.slane %v5253, 4
      %v5256 = vrot.slane %v4975, 5
      %v5257 = vsel %vm1802, %v5255, %v5256
      %v5258 = vrot.slane %v5256, 4
      %v5259 = vrot.slane %v4976, 5
      %v5260 = vsel %vm1802, %v5258, %v5259
      %v5261 = vrot.slane %v5259, 4
      %v5262 = vrot.slane %v4977, 5
      %v5263 = vsel %vm1802, %v5261, %v5262
      %v5264 = vrot.slane %v5262, 4
      %v5265 = vrot.slane %v4978, 5
      %v5266 = vsel %vm1802, %v5264, %v5265
      %v5267 = vrot.slane %v5265, 4
      %v5268 = vrot.slane %v4979, 5
      %v5269 = vsel %vm1802, %v5267, %v5268
      %5342 = vst [vmem:[#allocation3 + $0x8] sm:$0xf] %v5056
      %5343 = vst [vmem:[#allocation3 + $0x14] sm:$0xf] %v5059
      %5344 = vst [vmem:[#allocation3 + $0x20] sm:$0xf] %v5062
      %5345 = vst [vmem:[#allocation3 + $0x2c] sm:$0xf] %v5065
      %5346 = vst [vmem:[#allocation3 + $0x38] sm:$0xf] %v5068
      %5347 = vst [vmem:[#allocation3 + $0x44] sm:$0xf] %v5071
      %5348 = vst [vmem:[#allocation3 + $0x50] sm:$0xf] %v5074
      %5349 = vst [vmem:[#allocation3 + $0x5c] sm:$0xf] %v5077
      %5350 = vst [vmem:[#allocation3 + $0x68] sm:$0xf] %v5080
      %5351 = vst [vmem:[#allocation3 + $0x74] sm:$0xf] %v5083
      %5352 = vst [vmem:[#allocation3 + $0x80] sm:$0xf] %v5086
      %5353 = vst [vmem:[#allocation3 + $0x8c] sm:$0xf] %v5089
      %5354 = vst [vmem:[#allocation3 + $0x98] sm:$0xf] %v5092
      %5355 = vst [vmem:[#allocation3 + $0xa4] sm:$0xf] %v5095
      %5356 = vst [vmem:[#allocation3 + $0xb0] sm:$0xf] %v5098
      %5357 = vst [vmem:[#allocation3 + $0xbc] sm:$0xf] %v5101
      %5358 = vst [vmem:[#allocation3 + $0xc8] sm:$0xf] %v5104
      %5359 = vst [vmem:[#allocation3 + $0xd4] sm:$0xf] %v5107
      %5360 = vst [vmem:[#allocation3 + $0xe0] sm:$0xf] %v5110
      %5361 = vst [vmem:[#allocation3 + $0xec] sm:$0xf] %v5113
      %5362 = vst [vmem:[#allocation3 + $0xf8] sm:$0xf] %v5116
      %5363 = vst [vmem:[#allocation3 + $0x104] sm:$0xf] %v5119
      %5364 = vst [vmem:[#allocation3 + $0x110] sm:$0xf] %v5122
      %5365 = vst [vmem:[#allocation3 + $0x11c] sm:$0xf] %v5125
      %5366 = vst [vmem:[#allocation3 + $0x128] sm:$0xf] %v5128
      %5367 = vst [vmem:[#allocation3 + $0x134] sm:$0xf] %v5131
      %5368 = vst [vmem:[#allocation3 + $0x140] sm:$0xf] %v5134
      %5369 = vst [vmem:[#allocation3 + $0x14c] sm:$0xf] %v5137
      %5370 = vst [vmem:[#allocation3 + $0x158] sm:$0xf] %v5140
      %5371 = vst [vmem:[#allocation3 + $0x164] sm:$0xf] %v5143
      %5372 = vst [vmem:[#allocation3 + $0x170] sm:$0xf] %v5146
      %5373 = vst [vmem:[#allocation3 + $0x17c] sm:$0xf] %v5149
      %5374 = vst [vmem:[#allocation3 + $0x188] sm:$0xf] %v5152
      %5375 = vst [vmem:[#allocation3 + $0x194] sm:$0xf] %v5155
      %5376 = vst [vmem:[#allocation3 + $0x1a0] sm:$0xf] %v5158
      %5377 = vst [vmem:[#allocation3 + $0x1ac] sm:$0xf] %v5161
      %5378 = vst [vmem:[#allocation3 + $0x1b8] sm:$0xf] %v5164
      %5379 = vst [vmem:[#allocation3 + $0x1c4] sm:$0xf] %v5167
      %5380 = vst [vmem:[#allocation3 + $0x1d0] sm:$0xf] %v5170
      %5381 = vst [vmem:[#allocation3 + $0x1dc] sm:$0xf] %v5173
      %5382 = vst [vmem:[#allocation3 + $0x1e8] sm:$0xf] %v5176
      %5383 = vst [vmem:[#allocation3 + $0x1f4] sm:$0xf] %v5179
      %5384 = vst [vmem:[#allocation3 + $0x200] sm:$0xf] %v5182
      %5385 = vst [vmem:[#allocation3 + $0x20c] sm:$0xf] %v5185
      %5386 = vst [vmem:[#allocation3 + $0x218] sm:$0xf] %v5188
      %5387 = vst [vmem:[#allocation3 + $0x224] sm:$0xf] %v5191
      %5388 = vst [vmem:[#allocation3 + $0x230] sm:$0xf] %v5194
      %5389 = vst [vmem:[#allocation3 + $0x23c] sm:$0xf] %v5197
      %5390 = vst [vmem:[#allocation3 + $0x248] sm:$0xf] %v5200
      %5391 = vst [vmem:[#allocation3 + $0x254] sm:$0xf] %v5203
      %5392 = vst [vmem:[#allocation3 + $0x260] sm:$0xf] %v5206
      %5393 = vst [vmem:[#allocation3 + $0x26c] sm:$0xf] %v5209
      %5394 = vst [vmem:[#allocation3 + $0x278] sm:$0xf] %v5212
      %5395 = vst [vmem:[#allocation3 + $0x284] sm:$0xf] %v5215
      %5396 = vst [vmem:[#allocation3 + $0x290] sm:$0xf] %v5218
      %5397 = vst [vmem:[#allocation3 + $0x29c] sm:$0xf] %v5221
      %5398 = vst [vmem:[#allocation3 + $0x2a8] sm:$0xf] %v5224
      %5399 = vst [vmem:[#allocation3 + $0x2b4] sm:$0xf] %v5227
      %5400 = vst [vmem:[#allocation3 + $0x2c0] sm:$0xf] %v5230
      %5401 = vst [vmem:[#allocation3 + $0x2cc] sm:$0xf] %v5233
      %5402 = vst [vmem:[#allocation3 + $0x2d8] sm:$0xf] %v5236
      %5403 = vst [vmem:[#allocation3 + $0x2e4] sm:$0xf] %v5239
      %5404 = vst [vmem:[#allocation3 + $0x2f0] sm:$0xf] %v5242
      %5405 = vst [vmem:[#allocation3 + $0x2fc] sm:$0xf] %v5245
      %5406 = vst [vmem:[#allocation3 + $0x308] sm:$0xf] %v5248
      %5407 = vst [vmem:[#allocation3 + $0x314] sm:$0xf] %v5251
      %5408 = vst [vmem:[#allocation3 + $0x320] sm:$0xf] %v5254
      %5409 = vst [vmem:[#allocation3 + $0x32c] sm:$0xf] %v5257
      %5410 = vst [vmem:[#allocation3 + $0x338] sm:$0xf] %v5260
      %5411 = vst [vmem:[#allocation3 + $0x344] sm:$0xf] %v5263
      %5412 = vst [vmem:[#allocation3 + $0x350] sm:$0xf] %v5266
      %5413 = vst [vmem:[#allocation3 + $0x35c] sm:$0xf] %v5269
      loop: start=0, step=1, limit=4
      $region52: #{_successive_conv_impl.1} parent=43 // loop_pre_header
        _
      $region53: #{_successive_conv_impl.1} parent=43 // loop_header
        %s5415 = sphi 0, %s5419
        %p5416 = scmp.ge.s32.totalorder %s5415, 4
      $region54: #{_successive_conv_impl.1} parent=43 // loop_header_branch
        %5418 = sbr.rel (%p5416) target = $region58
      $region55: #{_successive_conv_impl.1} parent=43 // loop_body
        %s5420 = smul.u32 %s5415, 128
        %s5421 = sshra.s32 %s5420, 3
        %s5422 = sand.u32 %s5420, 7
        %s5423 = smul.u32 %s5421, 3
        %s5424 = smul.addr %s5423, 4
        %s5425 = scalar_lea.vmem [#allocation3], %s5424
        %v5426 = vld [vmem:[%s5425] sm:$0xff]
        %v5427 = vld [vmem:[%s5425 + $0x8] sm:$0xf]
        %v5428 = vld [vmem:[%s5425 + $0xc] sm:$0xff]
        %v5429 = vld [vmem:[%s5425 + $0x14] sm:$0xf]
        %v5430 = vld [vmem:[%s5425 + $0x18] sm:$0xff]
        %v5431 = vld [vmem:[%s5425 + $0x20] sm:$0xf]
        %v5432 = vld [vmem:[%s5425 + $0x24] sm:$0xff]
        %v5433 = vld [vmem:[%s5425 + $0x2c] sm:$0xf]
        %v5434 = vld [vmem:[%s5425 + $0x30] sm:$0xff]
        %v5435 = vld [vmem:[%s5425 + $0x38] sm:$0xf]
        %v5436 = vld [vmem:[%s5425 + $0x3c] sm:$0xff]
        %v5437 = vld [vmem:[%s5425 + $0x44] sm:$0xf]
        %v5438 = vld [vmem:[%s5425 + $0x48] sm:$0xff]
        %v5439 = vld [vmem:[%s5425 + $0x50] sm:$0xf]
        %v5440 = vld [vmem:[%s5425 + $0x54] sm:$0xff]
        %v5441 = vld [vmem:[%s5425 + $0x5c] sm:$0xf]
        %v5442 = vld [vmem:[%s5425 + $0x60] sm:$0xff]
        %v5443 = vld [vmem:[%s5425 + $0x68] sm:$0xf]
        %v5444 = vld [vmem:[%s5425 + $0x6c] sm:$0xff]
        %v5445 = vld [vmem:[%s5425 + $0x74] sm:$0xf]
        %v5446 = vld [vmem:[%s5425 + $0x78] sm:$0xff]
        %v5447 = vld [vmem:[%s5425 + $0x80] sm:$0xf]
        %v5448 = vld [vmem:[%s5425 + $0x84] sm:$0xff]
        %v5449 = vld [vmem:[%s5425 + $0x8c] sm:$0xf]
        %v5450 = vld [vmem:[%s5425 + $0x90] sm:$0xff]
        %v5451 = vld [vmem:[%s5425 + $0x98] sm:$0xf]
        %v5452 = vld [vmem:[%s5425 + $0x9c] sm:$0xff]
        %v5453 = vld [vmem:[%s5425 + $0xa4] sm:$0xf]
        %v5454 = vld [vmem:[%s5425 + $0xa8] sm:$0xff]
        %v5455 = vld [vmem:[%s5425 + $0xb0] sm:$0xf]
        %v5456 = vld [vmem:[%s5425 + $0xb4] sm:$0xff]
        %v5457 = vld [vmem:[%s5425 + $0xbc] sm:$0xf]
        %v5458 = vld [vmem:[%s4] sm:$0xf]
        %v5459 = vld [vmem:[%s4 + $0x4] sm:$0xf]
        %v5460 = vld [vmem:[%s4 + $0x8] sm:$0xf]
        %v5461 = vld [vmem:[%s4 + $0xc] sm:$0xf]
        %v5462 = vld [vmem:[%s4 + $0x10] sm:$0xf]
        %v5463 = vld [vmem:[%s4 + $0x14] sm:$0xf]
        %v5464 = vld [vmem:[%s4 + $0x18] sm:$0xf]
        %v5465 = vld [vmem:[%s4 + $0x1c] sm:$0xf]
        %v5466 = vld [vmem:[%s4 + $0x20] sm:$0xf]
        %v5467 = vld [vmem:[%s4 + $0x24] sm:$0xf]
        %v5468 = vld [vmem:[%s4 + $0x28] sm:$0xf]
        %v5469 = vld [vmem:[%s4 + $0x2c] sm:$0xf]
        %v5470 = vld [vmem:[%s4 + $0x30] sm:$0xf]
        %v5471 = vld [vmem:[%s4 + $0x34] sm:$0xf]
        %v5472 = vld [vmem:[%s4 + $0x38] sm:$0xf]
        %v5473 = vld [vmem:[%s4 + $0x3c] sm:$0xf]
        %v5474 = vld [vmem:[%s4 + $0x40] sm:$0xf]
        %v5475 = vld [vmem:[%s4 + $0x44] sm:$0xf]
        %v5476 = vld [vmem:[%s4 + $0x48] sm:$0xf]
        %v5477 = vld [vmem:[%s4 + $0x4c] sm:$0xf]
        %v5478 = vld [vmem:[%s4 + $0x50] sm:$0xf]
        %v5479 = vld [vmem:[%s4 + $0x54] sm:$0xf]
        %v5480 = vld [vmem:[%s4 + $0x58] sm:$0xf]
        %v5481 = vld [vmem:[%s4 + $0x5c] sm:$0xf]
        %v5482 = vld [vmem:[%s4 + $0x60] sm:$0xf]
        %v5483 = vld [vmem:[%s4 + $0x64] sm:$0xf]
        %v5484 = vld [vmem:[%s4 + $0x68] sm:$0xf]
        %v5485 = vld [vmem:[%s4 + $0x6c] sm:$0xf]
        %v5486 = vld [vmem:[%s4 + $0x70] sm:$0xf]
        %v5487 = vld [vmem:[%s4 + $0x74] sm:$0xf]
        %v5488 = vld [vmem:[%s4 + $0x78] sm:$0xf]
        %v5489 = vld [vmem:[%s4 + $0x7c] sm:$0xf]
        %v5490 = vld [vmem:[%s4 + $0x80] sm:$0xf]
        %v5491 = vld [vmem:[%s4 + $0x84] sm:$0xf]
        %v5492 = vld [vmem:[%s4 + $0x88] sm:$0xf]
        %v5493 = vld [vmem:[%s4 + $0x8c] sm:$0xf]
        %v5494 = vld [vmem:[%s4 + $0x90] sm:$0xf]
        %v5495 = vld [vmem:[%s4 + $0x94] sm:$0xf]
        %v5496 = vld [vmem:[%s4 + $0x98] sm:$0xf]
        %v5497 = vld [vmem:[%s4 + $0x9c] sm:$0xf]
        %v5498 = vld [vmem:[%s4 + $0xa0] sm:$0xf]
        %v5499 = vld [vmem:[%s4 + $0xa4] sm:$0xf]
        %v5500 = vld [vmem:[%s4 + $0xa8] sm:$0xf]
        %v5501 = vld [vmem:[%s4 + $0xac] sm:$0xf]
        %v5502 = vld [vmem:[%s4 + $0xb0] sm:$0xf]
        %v5503 = vld [vmem:[%s4 + $0xb4] sm:$0xf]
        %v5504 = vld [vmem:[%s4 + $0xb8] sm:$0xf]
        %v5505 = vld [vmem:[%s4 + $0xbc] sm:$0xf]
        %s5506 = sadd.s32 %s5420, 32
        %s5507 = sshra.s32 %s5506, 3
        %s5508 = sand.u32 %s5506, 7
        %s5509 = smul.u32 %s5507, 3
        %s5510 = smul.addr %s5509, 4
        %s5511 = scalar_lea.vmem [#allocation3], %s5510
        %v5512 = vld [vmem:[%s5511] sm:$0xff]
        %v5513 = vld [vmem:[%s5511 + $0x8] sm:$0xf]
        %v5514 = vld [vmem:[%s5511 + $0xc] sm:$0xff]
        %v5515 = vld [vmem:[%s5511 + $0x14] sm:$0xf]
        %v5516 = vld [vmem:[%s5511 + $0x18] sm:$0xff]
        %v5517 = vld [vmem:[%s5511 + $0x20] sm:$0xf]
        %v5518 = vld [vmem:[%s5511 + $0x24] sm:$0xff]
        %v5519 = vld [vmem:[%s5511 + $0x2c] sm:$0xf]
        %v5520 = vld [vmem:[%s5511 + $0x30] sm:$0xff]
        %v5521 = vld [vmem:[%s5511 + $0x38] sm:$0xf]
        %v5522 = vld [vmem:[%s5511 + $0x3c] sm:$0xff]
        %v5523 = vld [vmem:[%s5511 + $0x44] sm:$0xf]
        %v5524 = vld [vmem:[%s5511 + $0x48] sm:$0xff]
        %v5525 = vld [vmem:[%s5511 + $0x50] sm:$0xf]
        %v5526 = vld [vmem:[%s5511 + $0x54] sm:$0xff]
        %v5527 = vld [vmem:[%s5511 + $0x5c] sm:$0xf]
        %v5528 = vld [vmem:[%s5511 + $0x60] sm:$0xff]
        %v5529 = vld [vmem:[%s5511 + $0x68] sm:$0xf]
        %v5530 = vld [vmem:[%s5511 + $0x6c] sm:$0xff]
        %v5531 = vld [vmem:[%s5511 + $0x74] sm:$0xf]
        %v5532 = vld [vmem:[%s5511 + $0x78] sm:$0xff]
        %v5533 = vld [vmem:[%s5511 + $0x80] sm:$0xf]
        %v5534 = vld [vmem:[%s5511 + $0x84] sm:$0xff]
        %v5535 = vld [vmem:[%s5511 + $0x8c] sm:$0xf]
        %v5536 = vld [vmem:[%s5511 + $0x90] sm:$0xff]
        %v5537 = vld [vmem:[%s5511 + $0x98] sm:$0xf]
        %v5538 = vld [vmem:[%s5511 + $0x9c] sm:$0xff]
        %v5539 = vld [vmem:[%s5511 + $0xa4] sm:$0xf]
        %v5540 = vld [vmem:[%s5511 + $0xa8] sm:$0xff]
        %v5541 = vld [vmem:[%s5511 + $0xb0] sm:$0xf]
        %v5542 = vld [vmem:[%s5511 + $0xb4] sm:$0xff]
        %v5543 = vld [vmem:[%s5511 + $0xbc] sm:$0xf]
        %s5544 = scalar_lea.vmem %s4, 192
        %v5545 = vld [vmem:[%s5544] sm:$0xf]
        %v5546 = vld [vmem:[%s5544 + $0x4] sm:$0xf]
        %v5547 = vld [vmem:[%s5544 + $0x8] sm:$0xf]
        %v5548 = vld [vmem:[%s5544 + $0xc] sm:$0xf]
        %v5549 = vld [vmem:[%s5544 + $0x10] sm:$0xf]
        %v5550 = vld [vmem:[%s5544 + $0x14] sm:$0xf]
        %v5551 = vld [vmem:[%s5544 + $0x18] sm:$0xf]
        %v5552 = vld [vmem:[%s5544 + $0x1c] sm:$0xf]
        %v5553 = vld [vmem:[%s5544 + $0x20] sm:$0xf]
        %v5554 = vld [vmem:[%s5544 + $0x24] sm:$0xf]
        %v5555 = vld [vmem:[%s5544 + $0x28] sm:$0xf]
        %v5556 = vld [vmem:[%s5544 + $0x2c] sm:$0xf]
        %v5557 = vld [vmem:[%s5544 + $0x30] sm:$0xf]
        %v5558 = vld [vmem:[%s5544 + $0x34] sm:$0xf]
        %v5559 = vld [vmem:[%s5544 + $0x38] sm:$0xf]
        %v5560 = vld [vmem:[%s5544 + $0x3c] sm:$0xf]
        %v5561 = vld [vmem:[%s5544 + $0x40] sm:$0xf]
        %v5562 = vld [vmem:[%s5544 + $0x44] sm:$0xf]
        %v5563 = vld [vmem:[%s5544 + $0x48] sm:$0xf]
        %v5564 = vld [vmem:[%s5544 + $0x4c] sm:$0xf]
        %v5565 = vld [vmem:[%s5544 + $0x50] sm:$0xf]
        %v5566 = vld [vmem:[%s5544 + $0x54] sm:$0xf]
        %v5567 = vld [vmem:[%s5544 + $0x58] sm:$0xf]
        %v5568 = vld [vmem:[%s5544 + $0x5c] sm:$0xf]
        %v5569 = vld [vmem:[%s5544 + $0x60] sm:$0xf]
        %v5570 = vld [vmem:[%s5544 + $0x64] sm:$0xf]
        %v5571 = vld [vmem:[%s5544 + $0x68] sm:$0xf]
        %v5572 = vld [vmem:[%s5544 + $0x6c] sm:$0xf]
        %v5573 = vld [vmem:[%s5544 + $0x70] sm:$0xf]
        %v5574 = vld [vmem:[%s5544 + $0x74] sm:$0xf]
        %v5575 = vld [vmem:[%s5544 + $0x78] sm:$0xf]
        %v5576 = vld [vmem:[%s5544 + $0x7c] sm:$0xf]
        %v5577 = vld [vmem:[%s5544 + $0x80] sm:$0xf]
        %v5578 = vld [vmem:[%s5544 + $0x84] sm:$0xf]
        %v5579 = vld [vmem:[%s5544 + $0x88] sm:$0xf]
        %v5580 = vld [vmem:[%s5544 + $0x8c] sm:$0xf]
        %v5581 = vld [vmem:[%s5544 + $0x90] sm:$0xf]
        %v5582 = vld [vmem:[%s5544 + $0x94] sm:$0xf]
        %v5583 = vld [vmem:[%s5544 + $0x98] sm:$0xf]
        %v5584 = vld [vmem:[%s5544 + $0x9c] sm:$0xf]
        %v5585 = vld [vmem:[%s5544 + $0xa0] sm:$0xf]
        %v5586 = vld [vmem:[%s5544 + $0xa4] sm:$0xf]
        %v5587 = vld [vmem:[%s5544 + $0xa8] sm:$0xf]
        %v5588 = vld [vmem:[%s5544 + $0xac] sm:$0xf]
        %v5589 = vld [vmem:[%s5544 + $0xb0] sm:$0xf]
        %v5590 = vld [vmem:[%s5544 + $0xb4] sm:$0xf]
        %v5591 = vld [vmem:[%s5544 + $0xb8] sm:$0xf]
        %v5592 = vld [vmem:[%s5544 + $0xbc] sm:$0xf]
        %v5625 = vunpack.c.l.b16 %v5512
        %v5626 = vunpack.c.h.b16 %v5512
        %v5627 = vunpack.c.l.b16 %v5513
        %v5628 = vunpack.c.l.b16 %v5514
        %v5629 = vunpack.c.h.b16 %v5514
        %v5630 = vunpack.c.l.b16 %v5515
        %v5631 = vunpack.c.l.b16 %v5516
        %v5632 = vunpack.c.h.b16 %v5516
        %v5633 = vunpack.c.l.b16 %v5517
        %v5634 = vunpack.c.l.b16 %v5518
        %v5635 = vunpack.c.h.b16 %v5518
        %v5636 = vunpack.c.l.b16 %v5519
        %v5637 = vunpack.c.l.b16 %v5520
        %v5638 = vunpack.c.h.b16 %v5520
        %v5639 = vunpack.c.l.b16 %v5521
        %v5640 = vunpack.c.l.b16 %v5522
        %v5641 = vunpack.c.h.b16 %v5522
        %v5642 = vunpack.c.l.b16 %v5523
        %v5643 = vunpack.c.l.b16 %v5524
        %v5644 = vunpack.c.h.b16 %v5524
        %v5645 = vunpack.c.l.b16 %v5525
        %v5646 = vunpack.c.l.b16 %v5526
        %v5647 = vunpack.c.h.b16 %v5526
        %v5648 = vunpack.c.l.b16 %v5527
        %v5649 = vunpack.c.l.b16 %v5528
        %v5650 = vunpack.c.h.b16 %v5528
        %v5651 = vunpack.c.l.b16 %v5529
        %v5652 = vunpack.c.l.b16 %v5530
        %v5653 = vunpack.c.h.b16 %v5530
        %v5654 = vunpack.c.l.b16 %v5531
        %v5655 = vunpack.c.l.b16 %v5532
        %v5656 = vunpack.c.h.b16 %v5532
        %v5657 = vunpack.c.l.b16 %v5533
        %v5658 = vunpack.c.l.b16 %v5534
        %v5659 = vunpack.c.h.b16 %v5534
        %v5660 = vunpack.c.l.b16 %v5535
        %v5661 = vunpack.c.l.b16 %v5536
        %v5662 = vunpack.c.h.b16 %v5536
        %v5663 = vunpack.c.l.b16 %v5537
        %v5664 = vunpack.c.l.b16 %v5538
        %v5665 = vunpack.c.h.b16 %v5538
        %v5666 = vunpack.c.l.b16 %v5539
        %v5667 = vunpack.c.l.b16 %v5540
        %v5668 = vunpack.c.h.b16 %v5540
        %v5669 = vunpack.c.l.b16 %v5541
        %v5670 = vunpack.c.l.b16 %v5542
        %v5671 = vunpack.c.h.b16 %v5542
        %v5672 = vunpack.c.l.b16 %v5543
        %v5673 = vpack.c.b16 %v5628, %v5625
        %v5674 = vpack.c.b16 %v5629, %v5626
        %v5675 = vpack.c.b16 %v5630, %v5627
        %v5676 = vpack.c.b16 %v5634, %v5631
        %v5677 = vpack.c.b16 %v5635, %v5632
        %v5678 = vpack.c.b16 %v5636, %v5633
        %v5679 = vpack.c.b16 %v5640, %v5637
        %v5680 = vpack.c.b16 %v5641, %v5638
        %v5681 = vpack.c.b16 %v5642, %v5639
        %v5682 = vpack.c.b16 %v5646, %v5643
        %v5683 = vpack.c.b16 %v5647, %v5644
        %v5684 = vpack.c.b16 %v5648, %v5645
        %v5685 = vpack.c.b16 %v5652, %v5649
        %v5686 = vpack.c.b16 %v5653, %v5650
        %v5687 = vpack.c.b16 %v5654, %v5651
        %v5688 = vpack.c.b16 %v5658, %v5655
        %v5689 = vpack.c.b16 %v5659, %v5656
        %v5690 = vpack.c.b16 %v5660, %v5657
        %v5691 = vpack.c.b16 %v5664, %v5661
        %v5692 = vpack.c.b16 %v5665, %v5662
        %v5693 = vpack.c.b16 %v5666, %v5663
        %v5694 = vpack.c.b16 %v5670, %v5667
        %v5695 = vpack.c.b16 %v5671, %v5668
        %v5696 = vpack.c.b16 %v5672, %v5669
        %v5769 = vunpack.c.l.b16 %v5545
        %v5770 = vunpack.c.l.b16 %v5546
        %v5771 = vunpack.c.l.b16 %v5547
        %v5772 = vunpack.c.l.b16 %v5548
        %v5773 = vunpack.c.l.b16 %v5549
        %v5774 = vunpack.c.l.b16 %v5550
        %v5775 = vunpack.c.l.b16 %v5551
        %v5776 = vunpack.c.l.b16 %v5552
        %v5777 = vunpack.c.l.b16 %v5553
        %v5778 = vunpack.c.l.b16 %v5554
        %v5779 = vunpack.c.l.b16 %v5555
        %v5780 = vunpack.c.l.b16 %v5556
        %v5781 = vunpack.c.l.b16 %v5557
        %v5782 = vunpack.c.l.b16 %v5558
        %v5783 = vunpack.c.l.b16 %v5559
        %v5784 = vunpack.c.l.b16 %v5560
        %v5785 = vunpack.c.l.b16 %v5561
        %v5786 = vunpack.c.l.b16 %v5562
        %v5787 = vunpack.c.l.b16 %v5563
        %v5788 = vunpack.c.l.b16 %v5564
        %v5789 = vunpack.c.l.b16 %v5565
        %v5790 = vunpack.c.l.b16 %v5566
        %v5791 = vunpack.c.l.b16 %v5567
        %v5792 = vunpack.c.l.b16 %v5568
        %v5793 = vunpack.c.l.b16 %v5569
        %v5794 = vunpack.c.l.b16 %v5570
        %v5795 = vunpack.c.l.b16 %v5571
        %v5796 = vunpack.c.l.b16 %v5572
        %v5797 = vunpack.c.l.b16 %v5573
        %v5798 = vunpack.c.l.b16 %v5574
        %v5799 = vunpack.c.l.b16 %v5575
        %v5800 = vunpack.c.l.b16 %v5576
        %v5801 = vunpack.c.l.b16 %v5577
        %v5802 = vunpack.c.l.b16 %v5578
        %v5803 = vunpack.c.l.b16 %v5579
        %v5804 = vunpack.c.l.b16 %v5580
        %v5805 = vunpack.c.l.b16 %v5581
        %v5806 = vunpack.c.l.b16 %v5582
        %v5807 = vunpack.c.l.b16 %v5583
        %v5808 = vunpack.c.l.b16 %v5584
        %v5809 = vunpack.c.l.b16 %v5585
        %v5810 = vunpack.c.l.b16 %v5586
        %v5811 = vunpack.c.l.b16 %v5587
        %v5812 = vunpack.c.l.b16 %v5588
        %v5813 = vunpack.c.l.b16 %v5589
        %v5814 = vunpack.c.l.b16 %v5590
        %v5815 = vunpack.c.l.b16 %v5591
        %v5816 = vunpack.c.l.b16 %v5592
        %v5817 = vpack.c.b16 %v5770, %v5769
        %v5818 = vpack.c.b16 %v5772, %v5771
        %v5819 = vpack.c.b16 %v5774, %v5773
        %v5820 = vpack.c.b16 %v5776, %v5775
        %v5821 = vpack.c.b16 %v5778, %v5777
        %v5822 = vpack.c.b16 %v5780, %v5779
        %v5823 = vpack.c.b16 %v5782, %v5781
        %v5824 = vpack.c.b16 %v5784, %v5783
        %v5825 = vpack.c.b16 %v5786, %v5785
        %v5826 = vpack.c.b16 %v5788, %v5787
        %v5827 = vpack.c.b16 %v5790, %v5789
        %v5828 = vpack.c.b16 %v5792, %v5791
        %v5829 = vpack.c.b16 %v5794, %v5793
        %v5830 = vpack.c.b16 %v5796, %v5795
        %v5831 = vpack.c.b16 %v5798, %v5797
        %v5832 = vpack.c.b16 %v5800, %v5799
        %v5833 = vpack.c.b16 %v5802, %v5801
        %v5834 = vpack.c.b16 %v5804, %v5803
        %v5835 = vpack.c.b16 %v5806, %v5805
        %v5836 = vpack.c.b16 %v5808, %v5807
        %v5837 = vpack.c.b16 %v5810, %v5809
        %v5838 = vpack.c.b16 %v5812, %v5811
        %v5839 = vpack.c.b16 %v5814, %v5813
        %v5840 = vpack.c.b16 %v5816, %v5815
        %5865 = vmatpush.bf16.msra.mxu0 %v5824
        %5866 = vmatpush.bf16.msra.mxu0 %v5823
        %5867 = vmatpush.bf16.msra.mxu0 %v5822
        %5868 = vmatpush.bf16.msra.mxu0 %v5821
        %5869 = vmatpush.bf16.msra.mxu0 %v5820
        %5870 = vmatpush.bf16.msra.mxu0 %v5819
        %5871 = vmatpush.bf16.msra.mxu0 %v5818
        %5872 = vmatpush.bf16.msra.mxu0 %v5817
        %5873 = vmatmul.bf16.gmra.mxu0 %v5673
        %v5874 = vpop.f32.mrf.mxu0
        %v5875 = vadd.f32 0.0, %v5874
        %v5876 = vpop.f32.mrf.mxu0
        %v5877 = vadd.f32 0.0, %v5876
        %5878 = vmatmul.bf16.gmra.mxu0 %v5676
        %v5879 = vpop.f32.mrf.mxu0
        %v5880 = vadd.f32 0.0, %v5879
        %v5881 = vpop.f32.mrf.mxu0
        %v5882 = vadd.f32 0.0, %v5881
        %5883 = vmatmul.bf16.gmra.mxu0 %v5679
        %v5884 = vpop.f32.mrf.mxu0
        %v5885 = vadd.f32 0.0, %v5884
        %v5886 = vpop.f32.mrf.mxu0
        %v5887 = vadd.f32 0.0, %v5886
        %5888 = vmatmul.bf16.gmra.mxu0 %v5682
        %v5889 = vpop.f32.mrf.mxu0
        %v5890 = vadd.f32 0.0, %v5889
        %v5891 = vpop.f32.mrf.mxu0
        %v5892 = vadd.f32 0.0, %v5891
        %5893 = vmatmul.bf16.gmra.mxu0 %v5685
        %v5894 = vpop.f32.mrf.mxu0
        %v5895 = vadd.f32 0.0, %v5894
        %v5896 = vpop.f32.mrf.mxu0
        %v5897 = vadd.f32 0.0, %v5896
        %5898 = vmatmul.bf16.gmra.mxu0 %v5688
        %v5899 = vpop.f32.mrf.mxu0
        %v5900 = vadd.f32 0.0, %v5899
        %v5901 = vpop.f32.mrf.mxu0
        %v5902 = vadd.f32 0.0, %v5901
        %5903 = vmatmul.bf16.gmra.mxu0 %v5691
        %v5904 = vpop.f32.mrf.mxu0
        %v5905 = vadd.f32 0.0, %v5904
        %v5906 = vpop.f32.mrf.mxu0
        %v5907 = vadd.f32 0.0, %v5906
        %5908 = vmatmul.bf16.gmra.mxu0 %v5694
        %v5909 = vpop.f32.mrf.mxu0
        %v5910 = vadd.f32 0.0, %v5909
        %v5911 = vpop.f32.mrf.mxu0
        %v5912 = vadd.f32 0.0, %v5911
        %5913 = vdwg.mxu0
        %5914 = vmatpush.bf16.msra.mxu0 %v5832
        %5915 = vmatpush.bf16.msra.mxu0 %v5831
        %5916 = vmatpush.bf16.msra.mxu0 %v5830
        %5917 = vmatpush.bf16.msra.mxu0 %v5829
        %5918 = vmatpush.bf16.msra.mxu0 %v5828
        %5919 = vmatpush.bf16.msra.mxu0 %v5827
        %5920 = vmatpush.bf16.msra.mxu0 %v5826
        %5921 = vmatpush.bf16.msra.mxu0 %v5825
        %5922 = vmatmul.bf16.gmra.mxu0 %v5674
        %v5923 = vpop.f32.mrf.mxu0
        %v5924 = vadd.f32 %v5875, %v5923
        %v5925 = vpop.f32.mrf.mxu0
        %v5926 = vadd.f32 %v5877, %v5925
        %5927 = vmatmul.bf16.gmra.mxu0 %v5677
        %v5928 = vpop.f32.mrf.mxu0
        %v5929 = vadd.f32 %v5880, %v5928
        %v5930 = vpop.f32.mrf.mxu0
        %v5931 = vadd.f32 %v5882, %v5930
        %5932 = vmatmul.bf16.gmra.mxu0 %v5680
        %v5933 = vpop.f32.mrf.mxu0
        %v5934 = vadd.f32 %v5885, %v5933
        %v5935 = vpop.f32.mrf.mxu0
        %v5936 = vadd.f32 %v5887, %v5935
        %5937 = vmatmul.bf16.gmra.mxu0 %v5683
        %v5938 = vpop.f32.mrf.mxu0
        %v5939 = vadd.f32 %v5890, %v5938
        %v5940 = vpop.f32.mrf.mxu0
        %v5941 = vadd.f32 %v5892, %v5940
        %5942 = vmatmul.bf16.gmra.mxu0 %v5686
        %v5943 = vpop.f32.mrf.mxu0
        %v5944 = vadd.f32 %v5895, %v5943
        %v5945 = vpop.f32.mrf.mxu0
        %v5946 = vadd.f32 %v5897, %v5945
        %5947 = vmatmul.bf16.gmra.mxu0 %v5689
        %v5948 = vpop.f32.mrf.mxu0
        %v5949 = vadd.f32 %v5900, %v5948
        %v5950 = vpop.f32.mrf.mxu0
        %v5951 = vadd.f32 %v5902, %v5950
        %5952 = vmatmul.bf16.gmra.mxu0 %v5692
        %v5953 = vpop.f32.mrf.mxu0
        %v5954 = vadd.f32 %v5905, %v5953
        %v5955 = vpop.f32.mrf.mxu0
        %v5956 = vadd.f32 %v5907, %v5955
        %5957 = vmatmul.bf16.gmra.mxu0 %v5695
        %v5958 = vpop.f32.mrf.mxu0
        %v5959 = vadd.f32 %v5910, %v5958
        %v5960 = vpop.f32.mrf.mxu0
        %v5961 = vadd.f32 %v5912, %v5960
        %5962 = vdwg.mxu0
        %5963 = vmatpush.bf16.msra.mxu0 %v5840
        %5964 = vmatpush.bf16.msra.mxu0 %v5839
        %5965 = vmatpush.bf16.msra.mxu0 %v5838
        %5966 = vmatpush.bf16.msra.mxu0 %v5837
        %5967 = vmatpush.bf16.msra.mxu0 %v5836
        %5968 = vmatpush.bf16.msra.mxu0 %v5835
        %5969 = vmatpush.bf16.msra.mxu0 %v5834
        %5970 = vmatpush.bf16.msra.mxu0 %v5833
        %5971 = vmatmul.bf16.gmra.mxu0 %v5675
        %v5972 = vpop.f32.mrf.mxu0
        %v5973 = vadd.f32 %v5924, %v5972
        %v5974 = vpop.f32.mrf.mxu0
        %v5975 = vadd.f32 %v5926, %v5974
        %5976 = vmatmul.bf16.gmra.mxu0 %v5678
        %v5977 = vpop.f32.mrf.mxu0
        %v5978 = vadd.f32 %v5929, %v5977
        %v5979 = vpop.f32.mrf.mxu0
        %v5980 = vadd.f32 %v5931, %v5979
        %5981 = vmatmul.bf16.gmra.mxu0 %v5681
        %v5982 = vpop.f32.mrf.mxu0
        %v5983 = vadd.f32 %v5934, %v5982
        %v5984 = vpop.f32.mrf.mxu0
        %v5985 = vadd.f32 %v5936, %v5984
        %5986 = vmatmul.bf16.gmra.mxu0 %v5684
        %v5987 = vpop.f32.mrf.mxu0
        %v5988 = vadd.f32 %v5939, %v5987
        %v5989 = vpop.f32.mrf.mxu0
        %v5990 = vadd.f32 %v5941, %v5989
        %5991 = vmatmul.bf16.gmra.mxu0 %v5687
        %v5992 = vpop.f32.mrf.mxu0
        %v5993 = vadd.f32 %v5944, %v5992
        %v5994 = vpop.f32.mrf.mxu0
        %v5995 = vadd.f32 %v5946, %v5994
        %5996 = vmatmul.bf16.gmra.mxu0 %v5690
        %v5997 = vpop.f32.mrf.mxu0
        %v5998 = vadd.f32 %v5949, %v5997
        %v5999 = vpop.f32.mrf.mxu0
        %v6000 = vadd.f32 %v5951, %v5999
        %6001 = vmatmul.bf16.gmra.mxu0 %v5693
        %v6002 = vpop.f32.mrf.mxu0
        %v6003 = vadd.f32 %v5954, %v6002
        %v6004 = vpop.f32.mrf.mxu0
        %v6005 = vadd.f32 %v5956, %v6004
        %6006 = vmatmul.bf16.gmra.mxu0 %v5696
        %v6007 = vpop.f32.mrf.mxu0
        %v6008 = vadd.f32 %v5959, %v6007
        %v6009 = vpop.f32.mrf.mxu0
        %v6010 = vadd.f32 %v5961, %v6009
        %6011 = vdwg.mxu0
        %v6044 = vunpack.c.l.b16 %v5426
        %v6045 = vunpack.c.h.b16 %v5426
        %v6046 = vunpack.c.l.b16 %v5427
        %v6047 = vunpack.c.l.b16 %v5428
        %v6048 = vunpack.c.h.b16 %v5428
        %v6049 = vunpack.c.l.b16 %v5429
        %v6050 = vunpack.c.l.b16 %v5430
        %v6051 = vunpack.c.h.b16 %v5430
        %v6052 = vunpack.c.l.b16 %v5431
        %v6053 = vunpack.c.l.b16 %v5432
        %v6054 = vunpack.c.h.b16 %v5432
        %v6055 = vunpack.c.l.b16 %v5433
        %v6056 = vunpack.c.l.b16 %v5434
        %v6057 = vunpack.c.h.b16 %v5434
        %v6058 = vunpack.c.l.b16 %v5435
        %v6059 = vunpack.c.l.b16 %v5436
        %v6060 = vunpack.c.h.b16 %v5436
        %v6061 = vunpack.c.l.b16 %v5437
        %v6062 = vunpack.c.l.b16 %v5438
        %v6063 = vunpack.c.h.b16 %v5438
        %v6064 = vunpack.c.l.b16 %v5439
        %v6065 = vunpack.c.l.b16 %v5440
        %v6066 = vunpack.c.h.b16 %v5440
        %v6067 = vunpack.c.l.b16 %v5441
        %v6068 = vunpack.c.l.b16 %v5442
        %v6069 = vunpack.c.h.b16 %v5442
        %v6070 = vunpack.c.l.b16 %v5443
        %v6071 = vunpack.c.l.b16 %v5444
        %v6072 = vunpack.c.h.b16 %v5444
        %v6073 = vunpack.c.l.b16 %v5445
        %v6074 = vunpack.c.l.b16 %v5446
        %v6075 = vunpack.c.h.b16 %v5446
        %v6076 = vunpack.c.l.b16 %v5447
        %v6077 = vunpack.c.l.b16 %v5448
        %v6078 = vunpack.c.h.b16 %v5448
        %v6079 = vunpack.c.l.b16 %v5449
        %v6080 = vunpack.c.l.b16 %v5450
        %v6081 = vunpack.c.h.b16 %v5450
        %v6082 = vunpack.c.l.b16 %v5451
        %v6083 = vunpack.c.l.b16 %v5452
        %v6084 = vunpack.c.h.b16 %v5452
        %v6085 = vunpack.c.l.b16 %v5453
        %v6086 = vunpack.c.l.b16 %v5454
        %v6087 = vunpack.c.h.b16 %v5454
        %v6088 = vunpack.c.l.b16 %v5455
        %v6089 = vunpack.c.l.b16 %v5456
        %v6090 = vunpack.c.h.b16 %v5456
        %v6091 = vunpack.c.l.b16 %v5457
        %v6092 = vpack.c.b16 %v6047, %v6044
        %v6093 = vpack.c.b16 %v6048, %v6045
        %v6094 = vpack.c.b16 %v6049, %v6046
        %v6095 = vpack.c.b16 %v6053, %v6050
        %v6096 = vpack.c.b16 %v6054, %v6051
        %v6097 = vpack.c.b16 %v6055, %v6052
        %v6098 = vpack.c.b16 %v6059, %v6056
        %v6099 = vpack.c.b16 %v6060, %v6057
        %v6100 = vpack.c.b16 %v6061, %v6058
        %v6101 = vpack.c.b16 %v6065, %v6062
        %v6102 = vpack.c.b16 %v6066, %v6063
        %v6103 = vpack.c.b16 %v6067, %v6064
        %v6104 = vpack.c.b16 %v6071, %v6068
        %v6105 = vpack.c.b16 %v6072, %v6069
        %v6106 = vpack.c.b16 %v6073, %v6070
        %v6107 = vpack.c.b16 %v6077, %v6074
        %v6108 = vpack.c.b16 %v6078, %v6075
        %v6109 = vpack.c.b16 %v6079, %v6076
        %v6110 = vpack.c.b16 %v6083, %v6080
        %v6111 = vpack.c.b16 %v6084, %v6081
        %v6112 = vpack.c.b16 %v6085, %v6082
        %v6113 = vpack.c.b16 %v6089, %v6086
        %v6114 = vpack.c.b16 %v6090, %v6087
        %v6115 = vpack.c.b16 %v6091, %v6088
        %v6188 = vunpack.c.l.b16 %v5458
        %v6189 = vunpack.c.l.b16 %v5459
        %v6190 = vunpack.c.l.b16 %v5460
        %v6191 = vunpack.c.l.b16 %v5461
        %v6192 = vunpack.c.l.b16 %v5462
        %v6193 = vunpack.c.l.b16 %v5463
        %v6194 = vunpack.c.l.b16 %v5464
        %v6195 = vunpack.c.l.b16 %v5465
        %v6196 = vunpack.c.l.b16 %v5466
        %v6197 = vunpack.c.l.b16 %v5467
        %v6198 = vunpack.c.l.b16 %v5468
        %v6199 = vunpack.c.l.b16 %v5469
        %v6200 = vunpack.c.l.b16 %v5470
        %v6201 = vunpack.c.l.b16 %v5471
        %v6202 = vunpack.c.l.b16 %v5472
        %v6203 = vunpack.c.l.b16 %v5473
        %v6204 = vunpack.c.l.b16 %v5474
        %v6205 = vunpack.c.l.b16 %v5475
        %v6206 = vunpack.c.l.b16 %v5476
        %v6207 = vunpack.c.l.b16 %v5477
        %v6208 = vunpack.c.l.b16 %v5478
        %v6209 = vunpack.c.l.b16 %v5479
        %v6210 = vunpack.c.l.b16 %v5480
        %v6211 = vunpack.c.l.b16 %v5481
        %v6212 = vunpack.c.l.b16 %v5482
        %v6213 = vunpack.c.l.b16 %v5483
        %v6214 = vunpack.c.l.b16 %v5484
        %v6215 = vunpack.c.l.b16 %v5485
        %v6216 = vunpack.c.l.b16 %v5486
        %v6217 = vunpack.c.l.b16 %v5487
        %v6218 = vunpack.c.l.b16 %v5488
        %v6219 = vunpack.c.l.b16 %v5489
        %v6220 = vunpack.c.l.b16 %v5490
        %v6221 = vunpack.c.l.b16 %v5491
        %v6222 = vunpack.c.l.b16 %v5492
        %v6223 = vunpack.c.l.b16 %v5493
        %v6224 = vunpack.c.l.b16 %v5494
        %v6225 = vunpack.c.l.b16 %v5495
        %v6226 = vunpack.c.l.b16 %v5496
        %v6227 = vunpack.c.l.b16 %v5497
        %v6228 = vunpack.c.l.b16 %v5498
        %v6229 = vunpack.c.l.b16 %v5499
        %v6230 = vunpack.c.l.b16 %v5500
        %v6231 = vunpack.c.l.b16 %v5501
        %v6232 = vunpack.c.l.b16 %v5502
        %v6233 = vunpack.c.l.b16 %v5503
        %v6234 = vunpack.c.l.b16 %v5504
        %v6235 = vunpack.c.l.b16 %v5505
        %v6236 = vpack.c.b16 %v6189, %v6188
        %v6237 = vpack.c.b16 %v6191, %v6190
        %v6238 = vpack.c.b16 %v6193, %v6192
        %v6239 = vpack.c.b16 %v6195, %v6194
        %v6240 = vpack.c.b16 %v6197, %v6196
        %v6241 = vpack.c.b16 %v6199, %v6198
        %v6242 = vpack.c.b16 %v6201, %v6200
        %v6243 = vpack.c.b16 %v6203, %v6202
        %v6244 = vpack.c.b16 %v6205, %v6204
        %v6245 = vpack.c.b16 %v6207, %v6206
        %v6246 = vpack.c.b16 %v6209, %v6208
        %v6247 = vpack.c.b16 %v6211, %v6210
        %v6248 = vpack.c.b16 %v6213, %v6212
        %v6249 = vpack.c.b16 %v6215, %v6214
        %v6250 = vpack.c.b16 %v6217, %v6216
        %v6251 = vpack.c.b16 %v6219, %v6218
        %v6252 = vpack.c.b16 %v6221, %v6220
        %v6253 = vpack.c.b16 %v6223, %v6222
        %v6254 = vpack.c.b16 %v6225, %v6224
        %v6255 = vpack.c.b16 %v6227, %v6226
        %v6256 = vpack.c.b16 %v6229, %v6228
        %v6257 = vpack.c.b16 %v6231, %v6230
        %v6258 = vpack.c.b16 %v6233, %v6232
        %v6259 = vpack.c.b16 %v6235, %v6234
        %6284 = vmatpush.bf16.msra.mxu0 %v6243
        %6285 = vmatpush.bf16.msra.mxu0 %v6242
        %6286 = vmatpush.bf16.msra.mxu0 %v6241
        %6287 = vmatpush.bf16.msra.mxu0 %v6240
        %6288 = vmatpush.bf16.msra.mxu0 %v6239
        %6289 = vmatpush.bf16.msra.mxu0 %v6238
        %6290 = vmatpush.bf16.msra.mxu0 %v6237
        %6291 = vmatpush.bf16.msra.mxu0 %v6236
        %6292 = vmatmul.bf16.gmra.mxu0 %v6092
        %v6293 = vpop.f32.mrf.mxu0
        %v6294 = vadd.f32 %v5973, %v6293
        %v6295 = vpop.f32.mrf.mxu0
        %v6296 = vadd.f32 %v5975, %v6295
        %6297 = vmatmul.bf16.gmra.mxu0 %v6095
        %v6298 = vpop.f32.mrf.mxu0
        %v6299 = vadd.f32 %v5978, %v6298
        %v6300 = vpop.f32.mrf.mxu0
        %v6301 = vadd.f32 %v5980, %v6300
        %6302 = vmatmul.bf16.gmra.mxu0 %v6098
        %v6303 = vpop.f32.mrf.mxu0
        %v6304 = vadd.f32 %v5983, %v6303
        %v6305 = vpop.f32.mrf.mxu0
        %v6306 = vadd.f32 %v5985, %v6305
        %6307 = vmatmul.bf16.gmra.mxu0 %v6101
        %v6308 = vpop.f32.mrf.mxu0
        %v6309 = vadd.f32 %v5988, %v6308
        %v6310 = vpop.f32.mrf.mxu0
        %v6311 = vadd.f32 %v5990, %v6310
        %6312 = vmatmul.bf16.gmra.mxu0 %v6104
        %v6313 = vpop.f32.mrf.mxu0
        %v6314 = vadd.f32 %v5993, %v6313
        %v6315 = vpop.f32.mrf.mxu0
        %v6316 = vadd.f32 %v5995, %v6315
        %6317 = vmatmul.bf16.gmra.mxu0 %v6107
        %v6318 = vpop.f32.mrf.mxu0
        %v6319 = vadd.f32 %v5998, %v6318
        %v6320 = vpop.f32.mrf.mxu0
        %v6321 = vadd.f32 %v6000, %v6320
        %6322 = vmatmul.bf16.gmra.mxu0 %v6110
        %v6323 = vpop.f32.mrf.mxu0
        %v6324 = vadd.f32 %v6003, %v6323
        %v6325 = vpop.f32.mrf.mxu0
        %v6326 = vadd.f32 %v6005, %v6325
        %6327 = vmatmul.bf16.gmra.mxu0 %v6113
        %v6328 = vpop.f32.mrf.mxu0
        %v6329 = vadd.f32 %v6008, %v6328
        %v6330 = vpop.f32.mrf.mxu0
        %v6331 = vadd.f32 %v6010, %v6330
        %6332 = vdwg.mxu0
        %6333 = vmatpush.bf16.msra.mxu0 %v6251
        %6334 = vmatpush.bf16.msra.mxu0 %v6250
        %6335 = vmatpush.bf16.msra.mxu0 %v6249
        %6336 = vmatpush.bf16.msra.mxu0 %v6248
        %6337 = vmatpush.bf16.msra.mxu0 %v6247
        %6338 = vmatpush.bf16.msra.mxu0 %v6246
        %6339 = vmatpush.bf16.msra.mxu0 %v6245
        %6340 = vmatpush.bf16.msra.mxu0 %v6244
        %6341 = vmatmul.bf16.gmra.mxu0 %v6093
        %v6342 = vpop.f32.mrf.mxu0
        %v6343 = vadd.f32 %v6294, %v6342
        %v6344 = vpop.f32.mrf.mxu0
        %v6345 = vadd.f32 %v6296, %v6344
        %6346 = vmatmul.bf16.gmra.mxu0 %v6096
        %v6347 = vpop.f32.mrf.mxu0
        %v6348 = vadd.f32 %v6299, %v6347
        %v6349 = vpop.f32.mrf.mxu0
        %v6350 = vadd.f32 %v6301, %v6349
        %6351 = vmatmul.bf16.gmra.mxu0 %v6099
        %v6352 = vpop.f32.mrf.mxu0
        %v6353 = vadd.f32 %v6304, %v6352
        %v6354 = vpop.f32.mrf.mxu0
        %v6355 = vadd.f32 %v6306, %v6354
        %6356 = vmatmul.bf16.gmra.mxu0 %v6102
        %v6357 = vpop.f32.mrf.mxu0
        %v6358 = vadd.f32 %v6309, %v6357
        %v6359 = vpop.f32.mrf.mxu0
        %v6360 = vadd.f32 %v6311, %v6359
        %6361 = vmatmul.bf16.gmra.mxu0 %v6105
        %v6362 = vpop.f32.mrf.mxu0
        %v6363 = vadd.f32 %v6314, %v6362
        %v6364 = vpop.f32.mrf.mxu0
        %v6365 = vadd.f32 %v6316, %v6364
        %6366 = vmatmul.bf16.gmra.mxu0 %v6108
        %v6367 = vpop.f32.mrf.mxu0
        %v6368 = vadd.f32 %v6319, %v6367
        %v6369 = vpop.f32.mrf.mxu0
        %v6370 = vadd.f32 %v6321, %v6369
        %6371 = vmatmul.bf16.gmra.mxu0 %v6111
        %v6372 = vpop.f32.mrf.mxu0
        %v6373 = vadd.f32 %v6324, %v6372
        %v6374 = vpop.f32.mrf.mxu0
        %v6375 = vadd.f32 %v6326, %v6374
        %6376 = vmatmul.bf16.gmra.mxu0 %v6114
        %v6377 = vpop.f32.mrf.mxu0
        %v6378 = vadd.f32 %v6329, %v6377
        %v6379 = vpop.f32.mrf.mxu0
        %v6380 = vadd.f32 %v6331, %v6379
        %6381 = vdwg.mxu0
        %6382 = vmatpush.bf16.msra.mxu0 %v6259
        %6383 = vmatpush.bf16.msra.mxu0 %v6258
        %6384 = vmatpush.bf16.msra.mxu0 %v6257
        %6385 = vmatpush.bf16.msra.mxu0 %v6256
        %6386 = vmatpush.bf16.msra.mxu0 %v6255
        %6387 = vmatpush.bf16.msra.mxu0 %v6254
        %6388 = vmatpush.bf16.msra.mxu0 %v6253
        %6389 = vmatpush.bf16.msra.mxu0 %v6252
        %6390 = vmatmul.bf16.gmra.mxu0 %v6094
        %v6391 = vpop.f32.mrf.mxu0
        %v6392 = vadd.f32 %v6343, %v6391
        %v6393 = vpop.f32.mrf.mxu0
        %v6394 = vadd.f32 %v6345, %v6393
        %6395 = vmatmul.bf16.gmra.mxu0 %v6097
        %v6396 = vpop.f32.mrf.mxu0
        %v6397 = vadd.f32 %v6348, %v6396
        %v6398 = vpop.f32.mrf.mxu0
        %v6399 = vadd.f32 %v6350, %v6398
        %6400 = vmatmul.bf16.gmra.mxu0 %v6100
        %v6401 = vpop.f32.mrf.mxu0
        %v6402 = vadd.f32 %v6353, %v6401
        %v6403 = vpop.f32.mrf.mxu0
        %v6404 = vadd.f32 %v6355, %v6403
        %6405 = vmatmul.bf16.gmra.mxu0 %v6103
        %v6406 = vpop.f32.mrf.mxu0
        %v6407 = vadd.f32 %v6358, %v6406
        %v6408 = vpop.f32.mrf.mxu0
        %v6409 = vadd.f32 %v6360, %v6408
        %6410 = vmatmul.bf16.gmra.mxu0 %v6106
        %v6411 = vpop.f32.mrf.mxu0
        %v6412 = vadd.f32 %v6363, %v6411
        %v6413 = vpop.f32.mrf.mxu0
        %v6414 = vadd.f32 %v6365, %v6413
        %6415 = vmatmul.bf16.gmra.mxu0 %v6109
        %v6416 = vpop.f32.mrf.mxu0
        %v6417 = vadd.f32 %v6368, %v6416
        %v6418 = vpop.f32.mrf.mxu0
        %v6419 = vadd.f32 %v6370, %v6418
        %6420 = vmatmul.bf16.gmra.mxu0 %v6112
        %v6421 = vpop.f32.mrf.mxu0
        %v6422 = vadd.f32 %v6373, %v6421
        %v6423 = vpop.f32.mrf.mxu0
        %v6424 = vadd.f32 %v6375, %v6423
        %6425 = vmatmul.bf16.gmra.mxu0 %v6115
        %v6426 = vpop.f32.mrf.mxu0
        %v6427 = vadd.f32 %v6378, %v6426
        %v6428 = vpop.f32.mrf.mxu0
        %v6429 = vadd.f32 %v6380, %v6428
        %6430 = vdwg.mxu0
        %s6431 = sadd.s32 %s5420, 64
        %s6432 = sshra.s32 %s6431, 3
        %s6433 = sand.u32 %s6431, 7
        %s6434 = smul.u32 %s6432, 3
        %s6435 = smul.addr %s6434, 4
        %s6436 = scalar_lea.vmem [#allocation3], %s6435
        %v6437 = vld [vmem:[%s6436] sm:$0xff]
        %v6438 = vld [vmem:[%s6436 + $0x8] sm:$0xf]
        %v6439 = vld [vmem:[%s6436 + $0xc] sm:$0xff]
        %v6440 = vld [vmem:[%s6436 + $0x14] sm:$0xf]
        %v6441 = vld [vmem:[%s6436 + $0x18] sm:$0xff]
        %v6442 = vld [vmem:[%s6436 + $0x20] sm:$0xf]
        %v6443 = vld [vmem:[%s6436 + $0x24] sm:$0xff]
        %v6444 = vld [vmem:[%s6436 + $0x2c] sm:$0xf]
        %v6445 = vld [vmem:[%s6436 + $0x30] sm:$0xff]
        %v6446 = vld [vmem:[%s6436 + $0x38] sm:$0xf]
        %v6447 = vld [vmem:[%s6436 + $0x3c] sm:$0xff]
        %v6448 = vld [vmem:[%s6436 + $0x44] sm:$0xf]
        %v6449 = vld [vmem:[%s6436 + $0x48] sm:$0xff]
        %v6450 = vld [vmem:[%s6436 + $0x50] sm:$0xf]
        %v6451 = vld [vmem:[%s6436 + $0x54] sm:$0xff]
        %v6452 = vld [vmem:[%s6436 + $0x5c] sm:$0xf]
        %v6453 = vld [vmem:[%s6436 + $0x60] sm:$0xff]
        %v6454 = vld [vmem:[%s6436 + $0x68] sm:$0xf]
        %v6455 = vld [vmem:[%s6436 + $0x6c] sm:$0xff]
        %v6456 = vld [vmem:[%s6436 + $0x74] sm:$0xf]
        %v6457 = vld [vmem:[%s6436 + $0x78] sm:$0xff]
        %v6458 = vld [vmem:[%s6436 + $0x80] sm:$0xf]
        %v6459 = vld [vmem:[%s6436 + $0x84] sm:$0xff]
        %v6460 = vld [vmem:[%s6436 + $0x8c] sm:$0xf]
        %v6461 = vld [vmem:[%s6436 + $0x90] sm:$0xff]
        %v6462 = vld [vmem:[%s6436 + $0x98] sm:$0xf]
        %v6463 = vld [vmem:[%s6436 + $0x9c] sm:$0xff]
        %v6464 = vld [vmem:[%s6436 + $0xa4] sm:$0xf]
        %v6465 = vld [vmem:[%s6436 + $0xa8] sm:$0xff]
        %v6466 = vld [vmem:[%s6436 + $0xb0] sm:$0xf]
        %v6467 = vld [vmem:[%s6436 + $0xb4] sm:$0xff]
        %v6468 = vld [vmem:[%s6436 + $0xbc] sm:$0xf]
        %s6469 = scalar_lea.vmem %s4, 384
        %v6470 = vld [vmem:[%s6469] sm:$0xf]
        %v6471 = vld [vmem:[%s6469 + $0x4] sm:$0xf]
        %v6472 = vld [vmem:[%s6469 + $0x8] sm:$0xf]
        %v6473 = vld [vmem:[%s6469 + $0xc] sm:$0xf]
        %v6474 = vld [vmem:[%s6469 + $0x10] sm:$0xf]
        %v6475 = vld [vmem:[%s6469 + $0x14] sm:$0xf]
        %v6476 = vld [vmem:[%s6469 + $0x18] sm:$0xf]
        %v6477 = vld [vmem:[%s6469 + $0x1c] sm:$0xf]
        %v6478 = vld [vmem:[%s6469 + $0x20] sm:$0xf]
        %v6479 = vld [vmem:[%s6469 + $0x24] sm:$0xf]
        %v6480 = vld [vmem:[%s6469 + $0x28] sm:$0xf]
        %v6481 = vld [vmem:[%s6469 + $0x2c] sm:$0xf]
        %v6482 = vld [vmem:[%s6469 + $0x30] sm:$0xf]
        %v6483 = vld [vmem:[%s6469 + $0x34] sm:$0xf]
        %v6484 = vld [vmem:[%s6469 + $0x38] sm:$0xf]
        %v6485 = vld [vmem:[%s6469 + $0x3c] sm:$0xf]
        %v6486 = vld [vmem:[%s6469 + $0x40] sm:$0xf]
        %v6487 = vld [vmem:[%s6469 + $0x44] sm:$0xf]
        %v6488 = vld [vmem:[%s6469 + $0x48] sm:$0xf]
        %v6489 = vld [vmem:[%s6469 + $0x4c] sm:$0xf]
        %v6490 = vld [vmem:[%s6469 + $0x50] sm:$0xf]
        %v6491 = vld [vmem:[%s6469 + $0x54] sm:$0xf]
        %v6492 = vld [vmem:[%s6469 + $0x58] sm:$0xf]
        %v6493 = vld [vmem:[%s6469 + $0x5c] sm:$0xf]
        %v6494 = vld [vmem:[%s6469 + $0x60] sm:$0xf]
        %v6495 = vld [vmem:[%s6469 + $0x64] sm:$0xf]
        %v6496 = vld [vmem:[%s6469 + $0x68] sm:$0xf]
        %v6497 = vld [vmem:[%s6469 + $0x6c] sm:$0xf]
        %v6498 = vld [vmem:[%s6469 + $0x70] sm:$0xf]
        %v6499 = vld [vmem:[%s6469 + $0x74] sm:$0xf]
        %v6500 = vld [vmem:[%s6469 + $0x78] sm:$0xf]
        %v6501 = vld [vmem:[%s6469 + $0x7c] sm:$0xf]
        %v6502 = vld [vmem:[%s6469 + $0x80] sm:$0xf]
        %v6503 = vld [vmem:[%s6469 + $0x84] sm:$0xf]
        %v6504 = vld [vmem:[%s6469 + $0x88] sm:$0xf]
        %v6505 = vld [vmem:[%s6469 + $0x8c] sm:$0xf]
        %v6506 = vld [vmem:[%s6469 + $0x90] sm:$0xf]
        %v6507 = vld [vmem:[%s6469 + $0x94] sm:$0xf]
        %v6508 = vld [vmem:[%s6469 + $0x98] sm:$0xf]
        %v6509 = vld [vmem:[%s6469 + $0x9c] sm:$0xf]
        %v6510 = vld [vmem:[%s6469 + $0xa0] sm:$0xf]
        %v6511 = vld [vmem:[%s6469 + $0xa4] sm:$0xf]
        %v6512 = vld [vmem:[%s6469 + $0xa8] sm:$0xf]
        %v6513 = vld [vmem:[%s6469 + $0xac] sm:$0xf]
        %v6514 = vld [vmem:[%s6469 + $0xb0] sm:$0xf]
        %v6515 = vld [vmem:[%s6469 + $0xb4] sm:$0xf]
        %v6516 = vld [vmem:[%s6469 + $0xb8] sm:$0xf]
        %v6517 = vld [vmem:[%s6469 + $0xbc] sm:$0xf]
        %v6550 = vunpack.c.l.b16 %v6437
        %v6551 = vunpack.c.h.b16 %v6437
        %v6552 = vunpack.c.l.b16 %v6438
        %v6553 = vunpack.c.l.b16 %v6439
        %v6554 = vunpack.c.h.b16 %v6439
        %v6555 = vunpack.c.l.b16 %v6440
        %v6556 = vunpack.c.l.b16 %v6441
        %v6557 = vunpack.c.h.b16 %v6441
        %v6558 = vunpack.c.l.b16 %v6442
        %v6559 = vunpack.c.l.b16 %v6443
        %v6560 = vunpack.c.h.b16 %v6443
        %v6561 = vunpack.c.l.b16 %v6444
        %v6562 = vunpack.c.l.b16 %v6445
        %v6563 = vunpack.c.h.b16 %v6445
        %v6564 = vunpack.c.l.b16 %v6446
        %v6565 = vunpack.c.l.b16 %v6447
        %v6566 = vunpack.c.h.b16 %v6447
        %v6567 = vunpack.c.l.b16 %v6448
        %v6568 = vunpack.c.l.b16 %v6449
        %v6569 = vunpack.c.h.b16 %v6449
        %v6570 = vunpack.c.l.b16 %v6450
        %v6571 = vunpack.c.l.b16 %v6451
        %v6572 = vunpack.c.h.b16 %v6451
        %v6573 = vunpack.c.l.b16 %v6452
        %v6574 = vunpack.c.l.b16 %v6453
        %v6575 = vunpack.c.h.b16 %v6453
        %v6576 = vunpack.c.l.b16 %v6454
        %v6577 = vunpack.c.l.b16 %v6455
        %v6578 = vunpack.c.h.b16 %v6455
        %v6579 = vunpack.c.l.b16 %v6456
        %v6580 = vunpack.c.l.b16 %v6457
        %v6581 = vunpack.c.h.b16 %v6457
        %v6582 = vunpack.c.l.b16 %v6458
        %v6583 = vunpack.c.l.b16 %v6459
        %v6584 = vunpack.c.h.b16 %v6459
        %v6585 = vunpack.c.l.b16 %v6460
        %v6586 = vunpack.c.l.b16 %v6461
        %v6587 = vunpack.c.h.b16 %v6461
        %v6588 = vunpack.c.l.b16 %v6462
        %v6589 = vunpack.c.l.b16 %v6463
        %v6590 = vunpack.c.h.b16 %v6463
        %v6591 = vunpack.c.l.b16 %v6464
        %v6592 = vunpack.c.l.b16 %v6465
        %v6593 = vunpack.c.h.b16 %v6465
        %v6594 = vunpack.c.l.b16 %v6466
        %v6595 = vunpack.c.l.b16 %v6467
        %v6596 = vunpack.c.h.b16 %v6467
        %v6597 = vunpack.c.l.b16 %v6468
        %v6598 = vpack.c.b16 %v6553, %v6550
        %v6599 = vpack.c.b16 %v6554, %v6551
        %v6600 = vpack.c.b16 %v6555, %v6552
        %v6601 = vpack.c.b16 %v6559, %v6556
        %v6602 = vpack.c.b16 %v6560, %v6557
        %v6603 = vpack.c.b16 %v6561, %v6558
        %v6604 = vpack.c.b16 %v6565, %v6562
        %v6605 = vpack.c.b16 %v6566, %v6563
        %v6606 = vpack.c.b16 %v6567, %v6564
        %v6607 = vpack.c.b16 %v6571, %v6568
        %v6608 = vpack.c.b16 %v6572, %v6569
        %v6609 = vpack.c.b16 %v6573, %v6570
        %v6610 = vpack.c.b16 %v6577, %v6574
        %v6611 = vpack.c.b16 %v6578, %v6575
        %v6612 = vpack.c.b16 %v6579, %v6576
        %v6613 = vpack.c.b16 %v6583, %v6580
        %v6614 = vpack.c.b16 %v6584, %v6581
        %v6615 = vpack.c.b16 %v6585, %v6582
        %v6616 = vpack.c.b16 %v6589, %v6586
        %v6617 = vpack.c.b16 %v6590, %v6587
        %v6618 = vpack.c.b16 %v6591, %v6588
        %v6619 = vpack.c.b16 %v6595, %v6592
        %v6620 = vpack.c.b16 %v6596, %v6593
        %v6621 = vpack.c.b16 %v6597, %v6594
        %v6694 = vunpack.c.l.b16 %v6470
        %v6695 = vunpack.c.l.b16 %v6471
        %v6696 = vunpack.c.l.b16 %v6472
        %v6697 = vunpack.c.l.b16 %v6473
        %v6698 = vunpack.c.l.b16 %v6474
        %v6699 = vunpack.c.l.b16 %v6475
        %v6700 = vunpack.c.l.b16 %v6476
        %v6701 = vunpack.c.l.b16 %v6477
        %v6702 = vunpack.c.l.b16 %v6478
        %v6703 = vunpack.c.l.b16 %v6479
        %v6704 = vunpack.c.l.b16 %v6480
        %v6705 = vunpack.c.l.b16 %v6481
        %v6706 = vunpack.c.l.b16 %v6482
        %v6707 = vunpack.c.l.b16 %v6483
        %v6708 = vunpack.c.l.b16 %v6484
        %v6709 = vunpack.c.l.b16 %v6485
        %v6710 = vunpack.c.l.b16 %v6486
        %v6711 = vunpack.c.l.b16 %v6487
        %v6712 = vunpack.c.l.b16 %v6488
        %v6713 = vunpack.c.l.b16 %v6489
        %v6714 = vunpack.c.l.b16 %v6490
        %v6715 = vunpack.c.l.b16 %v6491
        %v6716 = vunpack.c.l.b16 %v6492
        %v6717 = vunpack.c.l.b16 %v6493
        %v6718 = vunpack.c.l.b16 %v6494
        %v6719 = vunpack.c.l.b16 %v6495
        %v6720 = vunpack.c.l.b16 %v6496
        %v6721 = vunpack.c.l.b16 %v6497
        %v6722 = vunpack.c.l.b16 %v6498
        %v6723 = vunpack.c.l.b16 %v6499
        %v6724 = vunpack.c.l.b16 %v6500
        %v6725 = vunpack.c.l.b16 %v6501
        %v6726 = vunpack.c.l.b16 %v6502
        %v6727 = vunpack.c.l.b16 %v6503
        %v6728 = vunpack.c.l.b16 %v6504
        %v6729 = vunpack.c.l.b16 %v6505
        %v6730 = vunpack.c.l.b16 %v6506
        %v6731 = vunpack.c.l.b16 %v6507
        %v6732 = vunpack.c.l.b16 %v6508
        %v6733 = vunpack.c.l.b16 %v6509
        %v6734 = vunpack.c.l.b16 %v6510
        %v6735 = vunpack.c.l.b16 %v6511
        %v6736 = vunpack.c.l.b16 %v6512
        %v6737 = vunpack.c.l.b16 %v6513
        %v6738 = vunpack.c.l.b16 %v6514
        %v6739 = vunpack.c.l.b16 %v6515
        %v6740 = vunpack.c.l.b16 %v6516
        %v6741 = vunpack.c.l.b16 %v6517
        %v6742 = vpack.c.b16 %v6695, %v6694
        %v6743 = vpack.c.b16 %v6697, %v6696
        %v6744 = vpack.c.b16 %v6699, %v6698
        %v6745 = vpack.c.b16 %v6701, %v6700
        %v6746 = vpack.c.b16 %v6703, %v6702
        %v6747 = vpack.c.b16 %v6705, %v6704
        %v6748 = vpack.c.b16 %v6707, %v6706
        %v6749 = vpack.c.b16 %v6709, %v6708
        %v6750 = vpack.c.b16 %v6711, %v6710
        %v6751 = vpack.c.b16 %v6713, %v6712
        %v6752 = vpack.c.b16 %v6715, %v6714
        %v6753 = vpack.c.b16 %v6717, %v6716
        %v6754 = vpack.c.b16 %v6719, %v6718
        %v6755 = vpack.c.b16 %v6721, %v6720
        %v6756 = vpack.c.b16 %v6723, %v6722
        %v6757 = vpack.c.b16 %v6725, %v6724
        %v6758 = vpack.c.b16 %v6727, %v6726
        %v6759 = vpack.c.b16 %v6729, %v6728
        %v6760 = vpack.c.b16 %v6731, %v6730
        %v6761 = vpack.c.b16 %v6733, %v6732
        %v6762 = vpack.c.b16 %v6735, %v6734
        %v6763 = vpack.c.b16 %v6737, %v6736
        %v6764 = vpack.c.b16 %v6739, %v6738
        %v6765 = vpack.c.b16 %v6741, %v6740
        %6790 = vmatpush.bf16.msra.mxu0 %v6749
        %6791 = vmatpush.bf16.msra.mxu0 %v6748
        %6792 = vmatpush.bf16.msra.mxu0 %v6747
        %6793 = vmatpush.bf16.msra.mxu0 %v6746
        %6794 = vmatpush.bf16.msra.mxu0 %v6745
        %6795 = vmatpush.bf16.msra.mxu0 %v6744
        %6796 = vmatpush.bf16.msra.mxu0 %v6743
        %6797 = vmatpush.bf16.msra.mxu0 %v6742
        %6798 = vmatmul.bf16.gmra.mxu0 %v6598
        %v6799 = vpop.f32.mrf.mxu0
        %v6800 = vadd.f32 0.0, %v6799
        %v6801 = vpop.f32.mrf.mxu0
        %v6802 = vadd.f32 0.0, %v6801
        %6803 = vmatmul.bf16.gmra.mxu0 %v6601
        %v6804 = vpop.f32.mrf.mxu0
        %v6805 = vadd.f32 0.0, %v6804
        %v6806 = vpop.f32.mrf.mxu0
        %v6807 = vadd.f32 0.0, %v6806
        %6808 = vmatmul.bf16.gmra.mxu0 %v6604
        %v6809 = vpop.f32.mrf.mxu0
        %v6810 = vadd.f32 0.0, %v6809
        %v6811 = vpop.f32.mrf.mxu0
        %v6812 = vadd.f32 0.0, %v6811
        %6813 = vmatmul.bf16.gmra.mxu0 %v6607
        %v6814 = vpop.f32.mrf.mxu0
        %v6815 = vadd.f32 0.0, %v6814
        %v6816 = vpop.f32.mrf.mxu0
        %v6817 = vadd.f32 0.0, %v6816
        %6818 = vmatmul.bf16.gmra.mxu0 %v6610
        %v6819 = vpop.f32.mrf.mxu0
        %v6820 = vadd.f32 0.0, %v6819
        %v6821 = vpop.f32.mrf.mxu0
        %v6822 = vadd.f32 0.0, %v6821
        %6823 = vmatmul.bf16.gmra.mxu0 %v6613
        %v6824 = vpop.f32.mrf.mxu0
        %v6825 = vadd.f32 0.0, %v6824
        %v6826 = vpop.f32.mrf.mxu0
        %v6827 = vadd.f32 0.0, %v6826
        %6828 = vmatmul.bf16.gmra.mxu0 %v6616
        %v6829 = vpop.f32.mrf.mxu0
        %v6830 = vadd.f32 0.0, %v6829
        %v6831 = vpop.f32.mrf.mxu0
        %v6832 = vadd.f32 0.0, %v6831
        %6833 = vmatmul.bf16.gmra.mxu0 %v6619
        %v6834 = vpop.f32.mrf.mxu0
        %v6835 = vadd.f32 0.0, %v6834
        %v6836 = vpop.f32.mrf.mxu0
        %v6837 = vadd.f32 0.0, %v6836
        %6838 = vdwg.mxu0
        %6839 = vmatpush.bf16.msra.mxu0 %v6757
        %6840 = vmatpush.bf16.msra.mxu0 %v6756
        %6841 = vmatpush.bf16.msra.mxu0 %v6755
        %6842 = vmatpush.bf16.msra.mxu0 %v6754
        %6843 = vmatpush.bf16.msra.mxu0 %v6753
        %6844 = vmatpush.bf16.msra.mxu0 %v6752
        %6845 = vmatpush.bf16.msra.mxu0 %v6751
        %6846 = vmatpush.bf16.msra.mxu0 %v6750
        %6847 = vmatmul.bf16.gmra.mxu0 %v6599
        %v6848 = vpop.f32.mrf.mxu0
        %v6849 = vadd.f32 %v6800, %v6848
        %v6850 = vpop.f32.mrf.mxu0
        %v6851 = vadd.f32 %v6802, %v6850
        %6852 = vmatmul.bf16.gmra.mxu0 %v6602
        %v6853 = vpop.f32.mrf.mxu0
        %v6854 = vadd.f32 %v6805, %v6853
        %v6855 = vpop.f32.mrf.mxu0
        %v6856 = vadd.f32 %v6807, %v6855
        %6857 = vmatmul.bf16.gmra.mxu0 %v6605
        %v6858 = vpop.f32.mrf.mxu0
        %v6859 = vadd.f32 %v6810, %v6858
        %v6860 = vpop.f32.mrf.mxu0
        %v6861 = vadd.f32 %v6812, %v6860
        %6862 = vmatmul.bf16.gmra.mxu0 %v6608
        %v6863 = vpop.f32.mrf.mxu0
        %v6864 = vadd.f32 %v6815, %v6863
        %v6865 = vpop.f32.mrf.mxu0
        %v6866 = vadd.f32 %v6817, %v6865
        %6867 = vmatmul.bf16.gmra.mxu0 %v6611
        %v6868 = vpop.f32.mrf.mxu0
        %v6869 = vadd.f32 %v6820, %v6868
        %v6870 = vpop.f32.mrf.mxu0
        %v6871 = vadd.f32 %v6822, %v6870
        %6872 = vmatmul.bf16.gmra.mxu0 %v6614
        %v6873 = vpop.f32.mrf.mxu0
        %v6874 = vadd.f32 %v6825, %v6873
        %v6875 = vpop.f32.mrf.mxu0
        %v6876 = vadd.f32 %v6827, %v6875
        %6877 = vmatmul.bf16.gmra.mxu0 %v6617
        %v6878 = vpop.f32.mrf.mxu0
        %v6879 = vadd.f32 %v6830, %v6878
        %v6880 = vpop.f32.mrf.mxu0
        %v6881 = vadd.f32 %v6832, %v6880
        %6882 = vmatmul.bf16.gmra.mxu0 %v6620
        %v6883 = vpop.f32.mrf.mxu0
        %v6884 = vadd.f32 %v6835, %v6883
        %v6885 = vpop.f32.mrf.mxu0
        %v6886 = vadd.f32 %v6837, %v6885
        %6887 = vdwg.mxu0
        %6888 = vmatpush.bf16.msra.mxu0 %v6765
        %6889 = vmatpush.bf16.msra.mxu0 %v6764
        %6890 = vmatpush.bf16.msra.mxu0 %v6763
        %6891 = vmatpush.bf16.msra.mxu0 %v6762
        %6892 = vmatpush.bf16.msra.mxu0 %v6761
        %6893 = vmatpush.bf16.msra.mxu0 %v6760
        %6894 = vmatpush.bf16.msra.mxu0 %v6759
        %6895 = vmatpush.bf16.msra.mxu0 %v6758
        %6896 = vmatmul.bf16.gmra.mxu0 %v6600
        %v6897 = vpop.f32.mrf.mxu0
        %v6898 = vadd.f32 %v6849, %v6897
        %v6899 = vpop.f32.mrf.mxu0
        %v6900 = vadd.f32 %v6851, %v6899
        %6901 = vmatmul.bf16.gmra.mxu0 %v6603
        %v6902 = vpop.f32.mrf.mxu0
        %v6903 = vadd.f32 %v6854, %v6902
        %v6904 = vpop.f32.mrf.mxu0
        %v6905 = vadd.f32 %v6856, %v6904
        %6906 = vmatmul.bf16.gmra.mxu0 %v6606
        %v6907 = vpop.f32.mrf.mxu0
        %v6908 = vadd.f32 %v6859, %v6907
        %v6909 = vpop.f32.mrf.mxu0
        %v6910 = vadd.f32 %v6861, %v6909
        %6911 = vmatmul.bf16.gmra.mxu0 %v6609
        %v6912 = vpop.f32.mrf.mxu0
        %v6913 = vadd.f32 %v6864, %v6912
        %v6914 = vpop.f32.mrf.mxu0
        %v6915 = vadd.f32 %v6866, %v6914
        %6916 = vmatmul.bf16.gmra.mxu0 %v6612
        %v6917 = vpop.f32.mrf.mxu0
        %v6918 = vadd.f32 %v6869, %v6917
        %v6919 = vpop.f32.mrf.mxu0
        %v6920 = vadd.f32 %v6871, %v6919
        %6921 = vmatmul.bf16.gmra.mxu0 %v6615
        %v6922 = vpop.f32.mrf.mxu0
        %v6923 = vadd.f32 %v6874, %v6922
        %v6924 = vpop.f32.mrf.mxu0
        %v6925 = vadd.f32 %v6876, %v6924
        %6926 = vmatmul.bf16.gmra.mxu0 %v6618
        %v6927 = vpop.f32.mrf.mxu0
        %v6928 = vadd.f32 %v6879, %v6927
        %v6929 = vpop.f32.mrf.mxu0
        %v6930 = vadd.f32 %v6881, %v6929
        %6931 = vmatmul.bf16.gmra.mxu0 %v6621
        %v6932 = vpop.f32.mrf.mxu0
        %v6933 = vadd.f32 %v6884, %v6932
        %v6934 = vpop.f32.mrf.mxu0
        %v6935 = vadd.f32 %v6886, %v6934
        %6936 = vdwg.mxu0
        %v6937 = vadd.f32 %v6392, %v6898
        %v6938 = vadd.f32 %v6394, %v6900
        %v6939 = vadd.f32 %v6397, %v6903
        %v6940 = vadd.f32 %v6399, %v6905
        %v6941 = vadd.f32 %v6402, %v6908
        %v6942 = vadd.f32 %v6404, %v6910
        %v6943 = vadd.f32 %v6407, %v6913
        %v6944 = vadd.f32 %v6409, %v6915
        %v6945 = vadd.f32 %v6412, %v6918
        %v6946 = vadd.f32 %v6414, %v6920
        %v6947 = vadd.f32 %v6417, %v6923
        %v6948 = vadd.f32 %v6419, %v6925
        %v6949 = vadd.f32 %v6422, %v6928
        %v6950 = vadd.f32 %v6424, %v6930
        %v6951 = vadd.f32 %v6427, %v6933
        %v6952 = vadd.f32 %v6429, %v6935
        %v6953 = vld [vmem:[%s5] sm:$0x1]
        %v6955 = vperm.slane %v6953, 0
        %v6957 = vadd.f32 %v6937, %v6955
        %v6958 = vadd.f32 %v6938, %v6955
        %v6959 = vadd.f32 %v6939, %v6955
        %v6960 = vadd.f32 %v6940, %v6955
        %v6961 = vadd.f32 %v6941, %v6955
        %v6962 = vadd.f32 %v6942, %v6955
        %v6963 = vadd.f32 %v6943, %v6955
        %v6964 = vadd.f32 %v6944, %v6955
        %v6965 = vadd.f32 %v6945, %v6955
        %v6966 = vadd.f32 %v6946, %v6955
        %v6967 = vadd.f32 %v6947, %v6955
        %v6968 = vadd.f32 %v6948, %v6955
        %v6969 = vadd.f32 %v6949, %v6955
        %v6970 = vadd.f32 %v6950, %v6955
        %v6971 = vadd.f32 %v6951, %v6955
        %v6972 = vadd.f32 %v6952, %v6955
        %v6973 = vmax.f32 %v6957, 0.0
        %v6974 = vmax.f32 %v6958, 0.0
        %v6975 = vmax.f32 %v6959, 0.0
        %v6976 = vmax.f32 %v6960, 0.0
        %v6977 = vmax.f32 %v6961, 0.0
        %v6978 = vmax.f32 %v6962, 0.0
        %v6979 = vmax.f32 %v6963, 0.0
        %v6980 = vmax.f32 %v6964, 0.0
        %v6981 = vmax.f32 %v6965, 0.0
        %v6982 = vmax.f32 %v6966, 0.0
        %v6983 = vmax.f32 %v6967, 0.0
        %v6984 = vmax.f32 %v6968, 0.0
        %v6985 = vmax.f32 %v6969, 0.0
        %v6986 = vmax.f32 %v6970, 0.0
        %v6987 = vmax.f32 %v6971, 0.0
        %v6988 = vmax.f32 %v6972, 0.0
        %v6989 = vpack.c.bf16 %v6973, %v6973
        %v6990 = vpack.c.bf16 %v6974, %v6974
        %v6991 = vpack.c.bf16 %v6975, %v6975
        %v6992 = vpack.c.bf16 %v6976, %v6976
        %v6993 = vpack.c.bf16 %v6977, %v6977
        %v6994 = vpack.c.bf16 %v6978, %v6978
        %v6995 = vpack.c.bf16 %v6979, %v6979
        %v6996 = vpack.c.bf16 %v6980, %v6980
        %v6997 = vpack.c.bf16 %v6981, %v6981
        %v6998 = vpack.c.bf16 %v6982, %v6982
        %v6999 = vpack.c.bf16 %v6983, %v6983
        %v7000 = vpack.c.bf16 %v6984, %v6984
        %v7001 = vpack.c.bf16 %v6985, %v6985
        %v7002 = vpack.c.bf16 %v6986, %v6986
        %v7003 = vpack.c.bf16 %v6987, %v6987
        %v7004 = vpack.c.bf16 %v6988, %v6988
        %s7005 = smul.addr %s5421, 4
        %s7006 = scalar_lea.vmem %s293, %s7005
        %7007 = vst [vmem:[%s7006] sm:$0xf] %v6989
        %7008 = vst [vmem:[%s7006 + $0x4] sm:$0xf] %v6990
        %7009 = vst [vmem:[%s7006 + $0x8] sm:$0xf] %v6991
        %7010 = vst [vmem:[%s7006 + $0xc] sm:$0xf] %v6992
        %7011 = vst [vmem:[%s7006 + $0x10] sm:$0xf] %v6993
        %7012 = vst [vmem:[%s7006 + $0x14] sm:$0xf] %v6994
        %7013 = vst [vmem:[%s7006 + $0x18] sm:$0xf] %v6995
        %7014 = vst [vmem:[%s7006 + $0x1c] sm:$0xf] %v6996
        %7015 = vst [vmem:[%s7006 + $0x20] sm:$0xf] %v6997
        %7016 = vst [vmem:[%s7006 + $0x24] sm:$0xf] %v6998
        %7017 = vst [vmem:[%s7006 + $0x28] sm:$0xf] %v6999
        %7018 = vst [vmem:[%s7006 + $0x2c] sm:$0xf] %v7000
        %7019 = vst [vmem:[%s7006 + $0x30] sm:$0xf] %v7001
        %7020 = vst [vmem:[%s7006 + $0x34] sm:$0xf] %v7002
        %7021 = vst [vmem:[%s7006 + $0x38] sm:$0xf] %v7003
        %7022 = vst [vmem:[%s7006 + $0x3c] sm:$0xf] %v7004
      $region56: #{_successive_conv_impl.1} parent=43 // loop_footer
        %s5419 = sadd.s32 1, %s5415
      $region57: #{_successive_conv_impl.1} parent=43 // loop_footer_branch
        %5414 = sbr.rel target = $region53
      $region58: #{_successive_conv_impl.1} parent=43 // loop_exit
        _
      %p7023 = scmp.lt.s32.totalorder %s21, 1
      %s7024 = scalar_select %p7023, %s21, 1
      %p7025 = scmp.lt.s32.totalorder %s22, 0
      %s7026 = scalar_select %p7025, %s22, 0
      %s7027 = smul.addr %s7026, 64
      %s7028 = smul.addr %s7024, 64
      %s7029 = sadd.s32 %s7027, %s7028
      %s7030 = smul.addr %s7029, 4
      %s7031 = scalar_lea.vmem %s6, %s7030
      // Predicated region
      $region59: #{_successive_conv_impl.1} parent=43 // pred_check
        %p7032 = pneg %p185
      $region60: #{_successive_conv_impl.1} parent=43 // pred_check_branch
        %7034 = sbr.rel (%p7032) target = $region62
      $region61: #{_successive_conv_impl.1} parent=43 // pred_region
        _
      $region62: #{_successive_conv_impl.1} parent=43 // pred_fallthru
        _
    $region44: #{_successive_conv_impl.1} parent=5 // pred_fallthru
      _
    %p7035 = scmp.le.s32.totalorder 2, %s12
    // Predicated region
    $region63: #{_successive_conv_impl.1} parent=5 // pred_check
      %p7036 = pneg %p7035
    $region64: #{_successive_conv_impl.1} parent=5 // pred_check_branch
      %7038 = sbr.rel (%p7036) target = $region66
    $region65: #{_successive_conv_impl.1} parent=5 // pred_region
      %s7039 = ssub.s32 %s12, 2
      // Predicated region
      $region67: #{_successive_conv_impl.1} parent=65 // pred_check
        %p7040 = pneg %p191
      $region68: #{_successive_conv_impl.1} parent=65 // pred_check_branch
        %7042 = sbr.rel (%p7040) target = $region70
      $region69: #{_successive_conv_impl.1} parent=65 // pred_region
        %p7043 = scmp.lt.s32.totalorder %s23, 1
        %s7044 = scalar_select %p7043, %s23, 1
        %p7045 = scmp.lt.s32.totalorder %s24, 0
        %s7046 = scalar_select %p7045, %s24, 0
        %s7047 = smul.addr %s7046, 64
        %s7048 = smul.addr %s7044, 64
        %s7049 = sadd.s32 %s7047, %s7048
        %s7050 = smul.addr %s7049, 4
        %s7051 = scalar_lea.vmem %s6, %s7050
      $region70: #{_successive_conv_impl.1} parent=65 // pred_fallthru
        _
    $region66: #{_successive_conv_impl.1} parent=5 // pred_fallthru
      _
  $region6: #{_successive_conv_impl.1} parent=0 // loop_footer
    %s16 = sadd.s32 1, %s12
  $region7: #{_successive_conv_impl.1} parent=0 // loop_footer_branch
    %11 = sbr.rel target = $region3
  $region8: #{_successive_conv_impl.1} parent=0 // loop_exit
    _

</llo_original>
